<compile_context>
chip_gen: v6e
topology: v6e:2x2x1
jax: 0.10.0
libtpu: 0.0.40
codegen_flags: <defaults>
</compile_context>

<pallas_src>
import math

import numpy as np
import jax
import jax.numpy as jnp
from jax.experimental import pallas as pl
from jax.experimental.pallas import tpu as pltpu


# -----------------------------------------------------------------------------
# Tile-size helper
# -----------------------------------------------------------------------------
def _pick_row_tile(h1, w1, cap=1024):
    """Largest divisor th of h1 with th*w1 <= cap; prefer lane-dense tiles
    (th*w1 % 128 == 0) and keep >= 2 spatial grid steps for the second core."""
    divs = [d for d in range(1, h1 + 1) if h1 % d == 0 and d * w1 <= cap]
    if not divs:
        divs = [1]
    lane_ok = [d for d in divs if (d * w1) % 128 == 0]
    pool = lane_ok if lane_ok else divs
    th = max(pool)
    smaller = [d for d in pool if d < th]
    if h1 // th == 1 and smaller:
        th = max(smaller)
    return th


# -----------------------------------------------------------------------------
# Bilinear interpolation (PyTorch F.interpolate, bilinear, align_corners=False)
# -----------------------------------------------------------------------------
def _bilinear_matrix(out_size, in_size, dtype=jnp.float32):
    if in_size == 1:
        return jnp.ones((out_size, 1), dtype)
    scale = in_size / out_size
    i = jnp.arange(out_size, dtype=jnp.float32)
    src = (i + 0.5) * scale - 0.5
    src = jnp.maximum(src, 0.0)                       # PyTorch clamps src >= 0
    x0 = jnp.clip(jnp.floor(src), 0.0, in_size - 1)
    lam = src - x0
    x0i = x0.astype(jnp.int32)
    x1i = jnp.minimum(x0i + 1, in_size - 1)
    return (
        jax.nn.one_hot(x0i, in_size, dtype=dtype) * (1.0 - lam)[:, None]
        + jax.nn.one_hot(x1i, in_size, dtype=dtype) * lam[:, None]
    )


def _bilinear_taps(out_size, in_size):
    """Per-output-row (low tap index, fractional weight) matching _bilinear_matrix."""
    if in_size == 1:
        return np.zeros((out_size,), np.int32), np.zeros((out_size,), np.float32)
    scale = np.float32(in_size / out_size)
    i = np.arange(out_size, dtype=np.float32)
    src = (i + np.float32(0.5)) * scale - np.float32(0.5)
    src = np.maximum(src, np.float32(0.0))
    x0 = np.clip(np.floor(src), 0.0, in_size - 1)
    lam = (src - x0).astype(np.float32)
    return x0.astype(np.int32), lam


# -----------------------------------------------------------------------------
# The fused Pallas kernel
# -----------------------------------------------------------------------------
def _make_fused_kernel(*, th, w1, hw_list):
    """hw_list: static (Hi, Wi) per resized scale, in argument order (c4, c3, c2)."""

    def kernel(idx_ref, lam_ref,                      # scalar-prefetch (SMEM)
               x1_ref, xa_ref, xb_ref, xc_ref,        # c1 tile + raw c4/c3/c2
               rwa_ref, rwb_ref, rwc_ref,             # width-resize matrices (Wi, W1)
               v1_ref, va_ref, vb_ref, vc_ref,        # folded (E, Ci) weights
               shift_ref, wp_ref, bp_ref,             # (E,1), (P,E), (P,1)
               o_ref,                                 # (1, P, mt)
               sa_ref, sb_ref, sc_ref, acc_ref):      # VMEM scratch
        j = pl.program_id(1)
        scales = (
            (xa_ref, rwa_ref, va_ref, sa_ref, hw_list[0]),
            (xb_ref, rwb_ref, vb_ref, sb_ref, hw_list[1]),
            (xc_ref, rwc_ref, vc_ref, sc_ref, hw_list[2]),
        )

        # Per-image precompute: channel-fold + width resize of c4/c3/c2 into VMEM
        # slabs S[h] = V_i @ raw[:, h, :] @ rwT  (shape (E, W1) per input row h).
        @pl.when(j == 0)
        def _precompute():
            for x_ref, rw_ref, v_ref, s_ref, (hi, wi) in scales:
                g = jnp.dot(v_ref[...], x_ref[0],
                            preferred_element_type=jnp.float32)      # (E, Hi*Wi)
                rwt = rw_ref[...]                                     # (Wi, W1)
                for hrow in range(hi):
                    s_ref[hrow] = jnp.dot(
                        g[:, hrow * wi:(hrow + 1) * wi], rwt,
                        preferred_element_type=jnp.float32)

        # c1 needs no resize: fold its channels directly for this spatial tile.
        c1p = jnp.dot(v1_ref[...], x1_ref[0],
                      preferred_element_type=jnp.float32)             # (E, mt)

        # Height resize = 2-tap blend of precomputed slabs, per output row.
        for t in range(th):
            grow = j * th + t                                         # global out row
            col = c1p[:, t * w1:(t + 1) * w1]
            for s_idx, (_, _, _, s_ref, (hi, _)) in enumerate(scales):
                h0 = idx_ref[s_idx, grow]
                lam = lam_ref[s_idx, grow]
                h1 = jnp.minimum(h0 + 1, hi - 1)
                col = col + (1.0 - lam) * s_ref[h0] + lam * s_ref[h1]
            acc_ref[:, t * w1:(t + 1) * w1] = col

        # Epilogue: BN shift (+ folded fuse bias) + ReLU, then 1x1 prediction conv.
        fused = jnp.maximum(acc_ref[...] + shift_ref[...], 0.0)
        o_ref[0] = (jnp.dot(wp_ref[...], fused,
                            preferred_element_type=jnp.float32)
                    + bp_ref[...]).astype(o_ref.dtype)

    return kernel


# -----------------------------------------------------------------------------
# SegformerHead forward (Pallas)
# -----------------------------------------------------------------------------
def segformer_head_forward(xs, params, *, spatial_tile_cap=1024):
    """xs = (c1, c2, c3, c4), each NCHW.  Returns NCHW prediction."""
    c1, c2, c3, c4 = xs
    n, c1_ch, h1, w1 = c1.shape
    e = params["embed_dim"]
    m = h1 * w1
    p_out = params["pred_w"].shape[1]

    th = _pick_row_tile(h1, w1, spatial_tile_cap)
    mt = th * w1
    n_tiles = h1 // th

    # Fold proj + fuse-conv slice + BN scale into one (E, Ci) matrix per scale,
    # and all per-channel shifts into a single (E, 1) vector.
    wf = params["fuse_w"]                       # (4E, E), concat order [c4,c3,c2,c1]
    bn_scale, bn_shift = params["bn_scale"], params["bn_shift"]
    raw = {"c4": c4, "c3": c3, "c2": c2, "c1": c1}
    folded = {}
    b_fused = jnp.zeros((e,), jnp.float32)
    for idx, name in enumerate(("c4", "c3", "c2", "c1")):
        pw, pb = params[name]                   # proj: (Ci, E), (E,)
        wf_i = wf[idx * e:(idx + 1) * e, :]
        folded[name] = bn_scale[:, None] * (pw @ wf_i).T           # (E, Ci)
        b_fused = b_fused + pb @ wf_i
    shift_total = (bn_shift + bn_scale * b_fused).reshape(e, 1)
    wp_t = params["pred_w"].T                                      # (P, E)
    bp = params["pred_b"].reshape(p_out, 1)

    # Per-scale resize data: width resize as a small matrix, height as 2-tap rows.
    res_x, res_rwt, res_v, hw_list, idx_rows, lam_rows = [], [], [], [], [], []
    for name in ("c4", "c3", "c2"):
        c = raw[name]
        ci, hi, wi = c.shape[1], c.shape[2], c.shape[3]
        res_x.append(c.reshape(n, ci, hi * wi))                    # lane-dense raw
        res_rwt.append(_bilinear_matrix(w1, wi).T)                 # (Wi, W1)
        res_v.append(folded[name])
        hw_list.append((hi, wi))
        h0, lam = _bilinear_taps(h1, hi)
        idx_rows.append(h0)
        lam_rows.append(lam)
    idx_arr = jnp.asarray(np.stack(idx_rows), dtype=jnp.int32)     # (3, H1)
    lam_arr = jnp.asarray(np.stack(lam_rows), dtype=jnp.float32)   # (3, H1)
    x1_flat = c1.reshape(n, c1_ch, m)

    kernel = _make_fused_kernel(th=th, w1=w1, hw_list=tuple(hw_list))

    in_specs = [pl.BlockSpec((1, c1_ch, mt), lambda i, j, *_: (i, 0, j))]
    for xr in res_x:                                               # per-image, invariant
        in_specs.append(pl.BlockSpec((1,) + xr.shape[1:], lambda i, j, *_: (i, 0, 0)))
    for rwt in res_rwt:
        in_specs.append(pl.BlockSpec(rwt.shape, lambda i, j, *_: (0, 0)))
    in_specs.append(pl.BlockSpec(folded["c1"].shape, lambda i, j, *_: (0, 0)))
    for vv in res_v:
        in_specs.append(pl.BlockSpec(vv.shape, lambda i, j, *_: (0, 0)))
    in_specs += [
        pl.BlockSpec((e, 1), lambda i, j, *_: (0, 0)),
        pl.BlockSpec((p_out, e), lambda i, j, *_: (0, 0)),
        pl.BlockSpec((p_out, 1), lambda i, j, *_: (0, 0)),
    ]

    out = pl.pallas_call(
        kernel,
        out_shape=jax.ShapeDtypeStruct((n, p_out, m), jnp.float32),
        grid_spec=pltpu.PrefetchScalarGridSpec(
            num_scalar_prefetch=2,
            grid=(n, n_tiles),
            in_specs=in_specs,
            out_specs=pl.BlockSpec((1, p_out, mt), lambda i, j, *_: (i, 0, j)),
            scratch_shapes=(
                [pltpu.VMEM((hi, e, w1), jnp.float32) for hi, _ in hw_list]
                + [pltpu.VMEM((e, mt), jnp.float32)]
            ),
        ),
        compiler_params=pltpu.CompilerParams(
            dimension_semantics=("parallel", "arbitrary")),
    )(idx_arr, lam_arr, x1_flat, *res_x, *res_rwt,
      folded["c1"], *res_v, shift_total, wp_t, bp)

    # TODO(synk): the PyTorch module also stashes the post-fuse feature map
    # (self.decoder_feat); not exposed here.
    return out.reshape(n, p_out, h1, w1)


# -----------------------------------------------------------------------------
# Pure-jnp reference in the ORIGINAL op order (proj -> resize -> concat -> fuse)
# -----------------------------------------------------------------------------
def segformer_head_reference(xs, params):
    c1, c2, c3, c4 = xs
    n = c1.shape[0]
    h1, w1 = c1.shape[2], c1.shape[3]
    e = params["embed_dim"]
    feats = []
    for c, (pw, pb) in zip(
        (c4, c3, c2, c1), (params["c4"], params["c3"], params["c2"], params["c1"])
    ):
        ci, hi, wi = c.shape[1], c.shape[2], c.shape[3]
        x = jnp.transpose(c, (0, 2, 3, 1)).reshape(n, hi * wi, ci)
        p = (x @ pw + pb).reshape(n, hi, wi, e)
        if (hi, wi) != (h1, w1):
            rh = _bilinear_matrix(h1, hi, p.dtype)
            rw = _bilinear_matrix(w1, wi, p.dtype)
            p = jnp.einsum("oh,nhwe->nowe", rh, p)
            p = jnp.einsum("pw,nowe->nope", rw, p)
        feats.append(p)
    cat = jnp.concatenate(feats, axis=-1)                       # (N, H1, W1, 4E)
    h = cat @ params["fuse_w"]
    h = h * params["bn_scale"] + params["bn_shift"]
    h = jnp.maximum(h, 0.0)
    out = h @ params["pred_w"] + params["pred_b"]
    return jnp.transpose(out, (0, 3, 1, 2))


# -----------------------------------------------------------------------------
# Deterministic parameter initialization
# -----------------------------------------------------------------------------
def init_params(key, in_channels, embed_dim, out_chan=1):
    def linear_init(k, fan_in, fan_out):
        k1, k2 = jax.random.split(k)
        bound = 1.0 / math.sqrt(fan_in)
        w = jax.random.uniform(k1, (fan_in, fan_out), jnp.float32, -bound, bound)
        b = jax.random.uniform(k2, (fan_out,), jnp.float32, -bound, bound)
        return w, b

    keys = jax.random.split(key, 8)
    c1w, c2w, c3w, c4w = in_channels
    p = {"embed_dim": embed_dim}
    p["c1"] = linear_init(keys[0], c1w, embed_dim)
    p["c2"] = linear_init(keys[1], c2w, embed_dim)
    p["c3"] = linear_init(keys[2], c3w, embed_dim)
    p["c4"] = linear_init(keys[3], c4w, embed_dim)

    # linear_fuse: 1x1 conv (4E -> E, no bias) + BN (eval mode, folded) + ReLU
    fuse_w, _ = linear_init(keys[4], 4 * embed_dim, embed_dim)
    gamma = 1.0 + 0.1 * jax.random.normal(keys[5], (embed_dim,), jnp.float32)
    beta = 0.1 * jax.random.normal(keys[6], (embed_dim,), jnp.float32)
    rmean = 0.05 * jax.random.normal(keys[7], (embed_dim,), jnp.float32)
    rvar = jnp.ones((embed_dim,), jnp.float32)
    eps = 1e-5
    scale = gamma / jnp.sqrt(rvar + eps)
    shift = beta - rmean * scale
    p["fuse_w"] = fuse_w
    p["bn_scale"] = scale
    p["bn_shift"] = shift

    # linear_pred: 1x1 conv (E -> out_chan, with bias)
    p["pred_w"], p["pred_b"] = linear_init(
        jax.random.fold_in(key, 99), embed_dim, out_chan
    )
    return p


# -----------------------------------------------------------------------------
if __name__ == "__main__":
    key = jax.random.PRNGKey(0)
    in_channels = (4, 8, 16, 32)
    embed_dim = 32
    out_chan = 1
    n = 2

    # SegFormer pyramid: c1 at 16x16, c2 at 8x8, c3 at 4x4, c4 at 2x2 (NCHW)
    k1, k2, k3, k4, kp = jax.random.split(key, 5)
    c1 = jax.random.normal(k1, (n, in_channels[0], 16, 16), jnp.float32)
    c2 = jax.random.normal(k2, (n, in_channels[1], 8, 8), jnp.float32)
    c3 = jax.random.normal(k3, (n, in_channels[2], 4, 4), jnp.float32)
    c4 = jax.random.normal(k4, (n, in_channels[3], 2, 2), jnp.float32)

    params = init_params(kp, in_channels, embed_dim, out_chan)

    out = segformer_head_forward((c1, c2, c3, c4), params)
    out = jax.block_until_ready(out)
    assert out.shape == (n, out_chan, 16, 16), out.shape

    # Numerical check vs. the original-op-order reference.  Tolerance covers the
    # float re-association from weight folding / resize-proj commuting.
    ref = jax.block_until_ready(segformer_head_reference((c1, c2, c3, c4), params))
    max_err = float(jnp.abs(out - ref).max())
    assert jnp.allclose(out, ref, atol=1e-3, rtol=1e-3), max_err

    print("KERNEL_OK")
</pallas_src>

<mosaic_0001>
module attributes {stable_mosaic.version = 11 : i64} {
  func.func @kernel(%arg0: i32, %arg1: i32, %arg2: memref<3x16xi32, #tpu.memory_space<smem>>, %arg3: memref<3x16xf32, #tpu.memory_space<smem>>, %arg4: memref<1x4x128xf32, #tpu.memory_space<vmem>>, %arg5: memref<1x32x4xf32, #tpu.memory_space<vmem>>, %arg6: memref<1x16x16xf32, #tpu.memory_space<vmem>>, %arg7: memref<1x8x64xf32, #tpu.memory_space<vmem>>, %arg8: memref<2x16xf32, #tpu.memory_space<vmem>>, %arg9: memref<4x16xf32, #tpu.memory_space<vmem>>, %arg10: memref<8x16xf32, #tpu.memory_space<vmem>>, %arg11: memref<32x4xf32, #tpu.memory_space<vmem>>, %arg12: memref<32x32xf32, #tpu.memory_space<vmem>>, %arg13: memref<32x16xf32, #tpu.memory_space<vmem>>, %arg14: memref<32x8xf32, #tpu.memory_space<vmem>>, %arg15: memref<32x1xf32, #tpu.memory_space<vmem>>, %arg16: memref<1x32xf32, #tpu.memory_space<vmem>>, %arg17: memref<1x1xf32, #tpu.memory_space<vmem>>, %arg18: memref<1x1x128xf32, #tpu.memory_space<vmem>>, %arg19: memref<2x32x16xf32, #tpu.memory_space<vmem>>, %arg20: memref<4x32x16xf32, #tpu.memory_space<vmem>>, %arg21: memref<8x32x16xf32, #tpu.memory_space<vmem>>, %arg22: memref<32x128xf32, #tpu.memory_space<vmem>>) attributes {dimension_semantics = [#tpu.dimension_semantics<parallel>, #tpu.dimension_semantics<arbitrary>], iteration_bounds = array<i64: 2, 2>, scalar_prefetch = 2 : i64, scratch_operands = 4 : i64, tpu.core_type = #tpu.core_type<tc>, window_params = [{transform_indices = @transform_0, window_bounds = array<i64: 1, 4, 128>}, {transform_indices = @transform_1, window_bounds = array<i64: 1, 32, 4>}, {transform_indices = @transform_2, window_bounds = array<i64: 1, 16, 16>}, {transform_indices = @transform_3, window_bounds = array<i64: 1, 8, 64>}, {pipeline_mode = #tpu.pipeline_mode<synchronous>, transform_indices = @transform_4, window_bounds = array<i64: 2, 16>}, {pipeline_mode = #tpu.pipeline_mode<synchronous>, transform_indices = @transform_5, window_bounds = array<i64: 4, 16>}, {pipeline_mode = #tpu.pipeline_mode<synchronous>, transform_indices = @transform_6, window_bounds = array<i64: 8, 16>}, {pipeline_mode = #tpu.pipeline_mode<synchronous>, transform_indices = @transform_7, window_bounds = array<i64: 32, 4>}, {pipeline_mode = #tpu.pipeline_mode<synchronous>, transform_indices = @transform_8, window_bounds = array<i64: 32, 32>}, {pipeline_mode = #tpu.pipeline_mode<synchronous>, transform_indices = @transform_9, window_bounds = array<i64: 32, 16>}, {pipeline_mode = #tpu.pipeline_mode<synchronous>, transform_indices = @transform_10, window_bounds = array<i64: 32, 8>}, {pipeline_mode = #tpu.pipeline_mode<synchronous>, transform_indices = @transform_11, window_bounds = array<i64: 32, 1>}, {pipeline_mode = #tpu.pipeline_mode<synchronous>, transform_indices = @transform_12, window_bounds = array<i64: 1, 32>}, {pipeline_mode = #tpu.pipeline_mode<synchronous>, transform_indices = @transform_13, window_bounds = array<i64: 1, 1>}, {transform_indices = @transform_14, window_bounds = array<i64: 1, 1, 128>}]} {
    %c0_i32 = arith.constant 0 : i32
    %0 = arith.cmpi eq, %arg1, %c0_i32 : i32
    %1 = arith.extui %0 : i1 to i32
    %c0_i32_0 = arith.constant 0 : i32
    %2 = arith.cmpi ne, %1, %c0_i32_0 : i32
    scf.if %2 {
      %c0_249 = arith.constant 0 : index
      %c0_250 = arith.constant 0 : index
      %509 = vector.load %arg12[%c0_249, %c0_250] : memref<32x32xf32, #tpu.memory_space<vmem>>, vector<32x32xf32>
      %c0_251 = arith.constant 0 : index
      %c0_252 = arith.constant 0 : index
      %c0_253 = arith.constant 0 : index
      %510 = vector.load %arg5[%c0_251, %c0_252, %c0_253] : memref<1x32x4xf32, #tpu.memory_space<vmem>>, vector<1x32x4xf32>
      %511 = vector.shape_cast %510 : vector<1x32x4xf32> to vector<32x4xf32>
      %cst_254 = arith.constant dense<0.000000e+00> : vector<32x4xf32>
      %512 = tpu.matmul %509, %511, %cst_254 {dimension_numbers = #tpu.dot_dimension_numbers<[1], [0], [0], [1], [0, 0, 1, 1], [], []>} : vector<32x32xf32>, vector<32x4xf32>, vector<32x4xf32> -> vector<32x4xf32>
      %c0_255 = arith.constant 0 : index
      %c0_256 = arith.constant 0 : index
      %513 = vector.load %arg8[%c0_255, %c0_256] : memref<2x16xf32, #tpu.memory_space<vmem>>, vector<2x16xf32>
      %514 = vector.extract_strided_slice %512 {offsets = [0, 0], sizes = [32, 2], strides = [1, 1]} : vector<32x4xf32> to vector<32x2xf32>
      %cst_257 = arith.constant dense<0.000000e+00> : vector<32x16xf32>
      %515 = tpu.matmul %514, %513, %cst_257 {dimension_numbers = #tpu.dot_dimension_numbers<[1], [0], [0], [1], [0, 0, 1, 1], [], []>} : vector<32x2xf32>, vector<2x16xf32>, vector<32x16xf32> -> vector<32x16xf32>
      %c0_258 = arith.constant 0 : index
      %c0_259 = arith.constant 0 : index
      %c0_260 = arith.constant 0 : index
      %516 = vector.load %arg19[%c0_258, %c0_259, %c0_260] : memref<2x32x16xf32, #tpu.memory_space<vmem>>, vector<1x32x16xf32>
      %517 = vector.shape_cast %516 : vector<1x32x16xf32> to vector<32x16xf32>
      %518 = vector.shape_cast %515 : vector<32x16xf32> to vector<1x32x16xf32>
      tpu.vector_store %arg19[%c0_258, %c0_259, %c0_260], %518 {strides = array<i32>} : memref<2x32x16xf32, #tpu.memory_space<vmem>>, vector<1x32x16xf32>,
      %519 = vector.extract_strided_slice %512 {offsets = [0, 2], sizes = [32, 2], strides = [1, 1]} : vector<32x4xf32> to vector<32x2xf32>
      %cst_261 = arith.constant dense<0.000000e+00> : vector<32x16xf32>
      %520 = tpu.matmul %519, %513, %cst_261 {dimension_numbers = #tpu.dot_dimension_numbers<[1], [0], [0], [1], [0, 0, 1, 1], [], []>} : vector<32x2xf32>, vector<2x16xf32>, vector<32x16xf32> -> vector<32x16xf32>
      %c1_262 = arith.constant 1 : index
      %c0_263 = arith.constant 0 : index
      %c0_264 = arith.constant 0 : index
      %521 = vector.load %arg19[%c1_262, %c0_263, %c0_264] : memref<2x32x16xf32, #tpu.memory_space<vmem>>, vector<1x32x16xf32>
      %522 = vector.shape_cast %521 : vector<1x32x16xf32> to vector<32x16xf32>
      %523 = vector.shape_cast %520 : vector<32x16xf32> to vector<1x32x16xf32>
      tpu.vector_store %arg19[%c1_262, %c0_263, %c0_264], %523 {strides = array<i32>} : memref<2x32x16xf32, #tpu.memory_space<vmem>>, vector<1x32x16xf32>,
      %c0_265 = arith.constant 0 : index
      %c0_266 = arith.constant 0 : index
      %524 = vector.load %arg13[%c0_265, %c0_266] : memref<32x16xf32, #tpu.memory_space<vmem>>, vector<32x16xf32>
      %c0_267 = arith.constant 0 : index
      %c0_268 = arith.constant 0 : index
      %c0_269 = arith.constant 0 : index
      %525 = vector.load %arg6[%c0_267, %c0_268, %c0_269] : memref<1x16x16xf32, #tpu.memory_space<vmem>>, vector<1x16x16xf32>
      %526 = vector.shape_cast %525 : vector<1x16x16xf32> to vector<16x16xf32>
      %cst_270 = arith.constant dense<0.000000e+00> : vector<32x16xf32>
      %527 = tpu.matmul %524, %526, %cst_270 {dimension_numbers = #tpu.dot_dimension_numbers<[1], [0], [0], [1], [0, 0, 1, 1], [], []>} : vector<32x16xf32>, vector<16x16xf32>, vector<32x16xf32> -> vector<32x16xf32>
      %c0_271 = arith.constant 0 : index
      %c0_272 = arith.constant 0 : index
      %528 = vector.load %arg9[%c0_271, %c0_272] : memref<4x16xf32, #tpu.memory_space<vmem>>, vector<4x16xf32>
      %529 = vector.extract_strided_slice %527 {offsets = [0, 0], sizes = [32, 4], strides = [1, 1]} : vector<32x16xf32> to vector<32x4xf32>
      %cst_273 = arith.constant dense<0.000000e+00> : vector<32x16xf32>
      %530 = tpu.matmul %529, %528, %cst_273 {dimension_numbers = #tpu.dot_dimension_numbers<[1], [0], [0], [1], [0, 0, 1, 1], [], []>} : vector<32x4xf32>, vector<4x16xf32>, vector<32x16xf32> -> vector<32x16xf32>
      %c0_274 = arith.constant 0 : index
      %c0_275 = arith.constant 0 : index
      %c0_276 = arith.constant 0 : index
      %531 = vector.load %arg20[%c0_274, %c0_275, %c0_276] : memref<4x32x16xf32, #tpu.memory_space<vmem>>, vector<1x32x16xf32>
      %532 = vector.shape_cast %531 : vector<1x32x16xf32> to vector<32x16xf32>
      %533 = vector.shape_cast %530 : vector<32x16xf32> to vector<1x32x16xf32>
      tpu.vector_store %arg20[%c0_274, %c0_275, %c0_276], %533 {strides = array<i32>} : memref<4x32x16xf32, #tpu.memory_space<vmem>>, vector<1x32x16xf32>,
      %534 = vector.extract_strided_slice %527 {offsets = [0, 4], sizes = [32, 4], strides = [1, 1]} : vector<32x16xf32> to vector<32x4xf32>
      %cst_277 = arith.constant dense<0.000000e+00> : vector<32x16xf32>
      %535 = tpu.matmul %534, %528, %cst_277 {dimension_numbers = #tpu.dot_dimension_numbers<[1], [0], [0], [1], [0, 0, 1, 1], [], []>} : vector<32x4xf32>, vector<4x16xf32>, vector<32x16xf32> -> vector<32x16xf32>
      %c1_278 = arith.constant 1 : index
      %c0_279 = arith.constant 0 : index
      %c0_280 = arith.constant 0 : index
      %536 = vector.load %arg20[%c1_278, %c0_279, %c0_280] : memref<4x32x16xf32, #tpu.memory_space<vmem>>, vector<1x32x16xf32>
      %537 = vector.shape_cast %536 : vector<1x32x16xf32> to vector<32x16xf32>
      %538 = vector.shape_cast %535 : vector<32x16xf32> to vector<1x32x16xf32>
      tpu.vector_store %arg20[%c1_278, %c0_279, %c0_280], %538 {strides = array<i32>} : memref<4x32x16xf32, #tpu.memory_space<vmem>>, vector<1x32x16xf32>,
      %539 = vector.extract_strided_slice %527 {offsets = [0, 8], sizes = [32, 4], strides = [1, 1]} : vector<32x16xf32> to vector<32x4xf32>
      %cst_281 = arith.constant dense<0.000000e+00> : vector<32x16xf32>
      %540 = tpu.matmul %539, %528, %cst_281 {dimension_numbers = #tpu.dot_dimension_numbers<[1], [0], [0], [1], [0, 0, 1, 1], [], []>} : vector<32x4xf32>, vector<4x16xf32>, vector<32x16xf32> -> vector<32x16xf32>
      %c2_282 = arith.constant 2 : index
      %c0_283 = arith.constant 0 : index
      %c0_284 = arith.constant 0 : index
      %541 = vector.load %arg20[%c2_282, %c0_283, %c0_284] : memref<4x32x16xf32, #tpu.memory_space<vmem>>, vector<1x32x16xf32>
      %542 = vector.shape_cast %541 : vector<1x32x16xf32> to vector<32x16xf32>
      %543 = vector.shape_cast %540 : vector<32x16xf32> to vector<1x32x16xf32>
      tpu.vector_store %arg20[%c2_282, %c0_283, %c0_284], %543 {strides = array<i32>} : memref<4x32x16xf32, #tpu.memory_space<vmem>>, vector<1x32x16xf32>,
      %544 = vector.extract_strided_slice %527 {offsets = [0, 12], sizes = [32, 4], strides = [1, 1]} : vector<32x16xf32> to vector<32x4xf32>
      %cst_285 = arith.constant dense<0.000000e+00> : vector<32x16xf32>
      %545 = tpu.matmul %544, %528, %cst_285 {dimension_numbers = #tpu.dot_dimension_numbers<[1], [0], [0], [1], [0, 0, 1, 1], [], []>} : vector<32x4xf32>, vector<4x16xf32>, vector<32x16xf32> -> vector<32x16xf32>
      %c3 = arith.constant 3 : index
      %c0_286 = arith.constant 0 : index
      %c0_287 = arith.constant 0 : index
      %546 = vector.load %arg20[%c3, %c0_286, %c0_287] : memref<4x32x16xf32, #tpu.memory_space<vmem>>, vector<1x32x16xf32>
      %547 = vector.shape_cast %546 : vector<1x32x16xf32> to vector<32x16xf32>
      %548 = vector.shape_cast %545 : vector<32x16xf32> to vector<1x32x16xf32>
      tpu.vector_store %arg20[%c3, %c0_286, %c0_287], %548 {strides = array<i32>} : memref<4x32x16xf32, #tpu.memory_space<vmem>>, vector<1x32x16xf32>,
      %c0_288 = arith.constant 0 : index
      %c0_289 = arith.constant 0 : index
      %549 = vector.load %arg14[%c0_288, %c0_289] : memref<32x8xf32, #tpu.memory_space<vmem>>, vector<32x8xf32>
      %c0_290 = arith.constant 0 : index
      %c0_291 = arith.constant 0 : index
      %c0_292 = arith.constant 0 : index
      %550 = vector.load %arg7[%c0_290, %c0_291, %c0_292] : memref<1x8x64xf32, #tpu.memory_space<vmem>>, vector<1x8x64xf32>
      %551 = vector.shape_cast %550 : vector<1x8x64xf32> to vector<8x64xf32>
      %cst_293 = arith.constant dense<0.000000e+00> : vector<32x64xf32>
      %552 = tpu.matmul %549, %551, %cst_293 {dimension_numbers = #tpu.dot_dimension_numbers<[1], [0], [0], [1], [0, 0, 1, 1], [], []>} : vector<32x8xf32>, vector<8x64xf32>, vector<32x64xf32> -> vector<32x64xf32>
      %c0_294 = arith.constant 0 : index
      %c0_295 = arith.constant 0 : index
      %553 = vector.load %arg10[%c0_294, %c0_295] : memref<8x16xf32, #tpu.memory_space<vmem>>, vector<8x16xf32>
      %554 = vector.extract_strided_slice %552 {offsets = [0, 0], sizes = [32, 8], strides = [1, 1]} : vector<32x64xf32> to vector<32x8xf32>
      %cst_296 = arith.constant dense<0.000000e+00> : vector<32x16xf32>
      %555 = tpu.matmul %554, %553, %cst_296 {dimension_numbers = #tpu.dot_dimension_numbers<[1], [0], [0], [1], [0, 0, 1, 1], [], []>} : vector<32x8xf32>, vector<8x16xf32>, vector<32x16xf32> -> vector<32x16xf32>
      %c0_297 = arith.constant 0 : index
      %c0_298 = arith.constant 0 : index
      %c0_299 = arith.constant 0 : index
      %556 = vector.load %arg21[%c0_297, %c0_298, %c0_299] : memref<8x32x16xf32, #tpu.memory_space<vmem>>, vector<1x32x16xf32>
      %557 = vector.shape_cast %556 : vector<1x32x16xf32> to vector<32x16xf32>
      %558 = vector.shape_cast %555 : vector<32x16xf32> to vector<1x32x16xf32>
      tpu.vector_store %arg21[%c0_297, %c0_298, %c0_299], %558 {strides = array<i32>} : memref<8x32x16xf32, #tpu.memory_space<vmem>>, vector<1x32x16xf32>,
      %559 = vector.extract_strided_slice %552 {offsets = [0, 8], sizes = [32, 8], strides = [1, 1]} : vector<32x64xf32> to vector<32x8xf32>
      %cst_300 = arith.constant dense<0.000000e+00> : vector<32x16xf32>
      %560 = tpu.matmul %559, %553, %cst_300 {dimension_numbers = #tpu.dot_dimension_numbers<[1], [0], [0], [1], [0, 0, 1, 1], [], []>} : vector<32x8xf32>, vector<8x16xf32>, vector<32x16xf32> -> vector<32x16xf32>
      %c1_301 = arith.constant 1 : index
      %c0_302 = arith.constant 0 : index
      %c0_303 = arith.constant 0 : index
      %561 = vector.load %arg21[%c1_301, %c0_302, %c0_303] : memref<8x32x16xf32, #tpu.memory_space<vmem>>, vector<1x32x16xf32>
      %562 = vector.shape_cast %561 : vector<1x32x16xf32> to vector<32x16xf32>
      %563 = vector.shape_cast %560 : vector<32x16xf32> to vector<1x32x16xf32>
      tpu.vector_store %arg21[%c1_301, %c0_302, %c0_303], %563 {strides = array<i32>} : memref<8x32x16xf32, #tpu.memory_space<vmem>>, vector<1x32x16xf32>,
      %564 = vector.extract_strided_slice %552 {offsets = [0, 16], sizes = [32, 8], strides = [1, 1]} : vector<32x64xf32> to vector<32x8xf32>
      %cst_304 = arith.constant dense<0.000000e+00> : vector<32x16xf32>
      %565 = tpu.matmul %564, %553, %cst_304 {dimension_numbers = #tpu.dot_dimension_numbers<[1], [0], [0], [1], [0, 0, 1, 1], [], []>} : vector<32x8xf32>, vector<8x16xf32>, vector<32x16xf32> -> vector<32x16xf32>
      %c2_305 = arith.constant 2 : index
      %c0_306 = arith.constant 0 : index
      %c0_307 = arith.constant 0 : index
      %566 = vector.load %arg21[%c2_305, %c0_306, %c0_307] : memref<8x32x16xf32, #tpu.memory_space<vmem>>, vector<1x32x16xf32>
      %567 = vector.shape_cast %566 : vector<1x32x16xf32> to vector<32x16xf32>
      %568 = vector.shape_cast %565 : vector<32x16xf32> to vector<1x32x16xf32>
      tpu.vector_store %arg21[%c2_305, %c0_306, %c0_307], %568 {strides = array<i32>} : memref<8x32x16xf32, #tpu.memory_space<vmem>>, vector<1x32x16xf32>,
      %569 = vector.extract_strided_slice %552 {offsets = [0, 24], sizes = [32, 8], strides = [1, 1]} : vector<32x64xf32> to vector<32x8xf32>
      %cst_308 = arith.constant dense<0.000000e+00> : vector<32x16xf32>
      %570 = tpu.matmul %569, %553, %cst_308 {dimension_numbers = #tpu.dot_dimension_numbers<[1], [0], [0], [1], [0, 0, 1, 1], [], []>} : vector<32x8xf32>, vector<8x16xf32>, vector<32x16xf32> -> vector<32x16xf32>
      %c3_309 = arith.constant 3 : index
      %c0_310 = arith.constant 0 : index
      %c0_311 = arith.constant 0 : index
      %571 = vector.load %arg21[%c3_309, %c0_310, %c0_311] : memref<8x32x16xf32, #tpu.memory_space<vmem>>, vector<1x32x16xf32>
      %572 = vector.shape_cast %571 : vector<1x32x16xf32> to vector<32x16xf32>
      %573 = vector.shape_cast %570 : vector<32x16xf32> to vector<1x32x16xf32>
      tpu.vector_store %arg21[%c3_309, %c0_310, %c0_311], %573 {strides = array<i32>} : memref<8x32x16xf32, #tpu.memory_space<vmem>>, vector<1x32x16xf32>,
      %574 = vector.extract_strided_slice %552 {offsets = [0, 32], sizes = [32, 8], strides = [1, 1]} : vector<32x64xf32> to vector<32x8xf32>
      %cst_312 = arith.constant dense<0.000000e+00> : vector<32x16xf32>
      %575 = tpu.matmul %574, %553, %cst_312 {dimension_numbers = #tpu.dot_dimension_numbers<[1], [0], [0], [1], [0, 0, 1, 1], [], []>} : vector<32x8xf32>, vector<8x16xf32>, vector<32x16xf32> -> vector<32x16xf32>
      %c4 = arith.constant 4 : index
      %c0_313 = arith.constant 0 : index
      %c0_314 = arith.constant 0 : index
      %576 = vector.load %arg21[%c4, %c0_313, %c0_314] : memref<8x32x16xf32, #tpu.memory_space<vmem>>, vector<1x32x16xf32>
      %577 = vector.shape_cast %576 : vector<1x32x16xf32> to vector<32x16xf32>
      %578 = vector.shape_cast %575 : vector<32x16xf32> to vector<1x32x16xf32>
      tpu.vector_store %arg21[%c4, %c0_313, %c0_314], %578 {strides = array<i32>} : memref<8x32x16xf32, #tpu.memory_space<vmem>>, vector<1x32x16xf32>,
      %579 = vector.extract_strided_slice %552 {offsets = [0, 40], sizes = [32, 8], strides = [1, 1]} : vector<32x64xf32> to vector<32x8xf32>
      %cst_315 = arith.constant dense<0.000000e+00> : vector<32x16xf32>
      %580 = tpu.matmul %579, %553, %cst_315 {dimension_numbers = #tpu.dot_dimension_numbers<[1], [0], [0], [1], [0, 0, 1, 1], [], []>} : vector<32x8xf32>, vector<8x16xf32>, vector<32x16xf32> -> vector<32x16xf32>
      %c5 = arith.constant 5 : index
      %c0_316 = arith.constant 0 : index
      %c0_317 = arith.constant 0 : index
      %581 = vector.load %arg21[%c5, %c0_316, %c0_317] : memref<8x32x16xf32, #tpu.memory_space<vmem>>, vector<1x32x16xf32>
      %582 = vector.shape_cast %581 : vector<1x32x16xf32> to vector<32x16xf32>
      %583 = vector.shape_cast %580 : vector<32x16xf32> to vector<1x32x16xf32>
      tpu.vector_store %arg21[%c5, %c0_316, %c0_317], %583 {strides = array<i32>} : memref<8x32x16xf32, #tpu.memory_space<vmem>>, vector<1x32x16xf32>,
      %584 = vector.extract_strided_slice %552 {offsets = [0, 48], sizes = [32, 8], strides = [1, 1]} : vector<32x64xf32> to vector<32x8xf32>
      %cst_318 = arith.constant dense<0.000000e+00> : vector<32x16xf32>
      %585 = tpu.matmul %584, %553, %cst_318 {dimension_numbers = #tpu.dot_dimension_numbers<[1], [0], [0], [1], [0, 0, 1, 1], [], []>} : vector<32x8xf32>, vector<8x16xf32>, vector<32x16xf32> -> vector<32x16xf32>
      %c6 = arith.constant 6 : index
      %c0_319 = arith.constant 0 : index
      %c0_320 = arith.constant 0 : index
      %586 = vector.load %arg21[%c6, %c0_319, %c0_320] : memref<8x32x16xf32, #tpu.memory_space<vmem>>, vector<1x32x16xf32>
      %587 = vector.shape_cast %586 : vector<1x32x16xf32> to vector<32x16xf32>
      %588 = vector.shape_cast %585 : vector<32x16xf32> to vector<1x32x16xf32>
      tpu.vector_store %arg21[%c6, %c0_319, %c0_320], %588 {strides = array<i32>} : memref<8x32x16xf32, #tpu.memory_space<vmem>>, vector<1x32x16xf32>,
      %589 = vector.extract_strided_slice %552 {offsets = [0, 56], sizes = [32, 8], strides = [1, 1]} : vector<32x64xf32> to vector<32x8xf32>
      %cst_321 = arith.constant dense<0.000000e+00> : vector<32x16xf32>
      %590 = tpu.matmul %589, %553, %cst_321 {dimension_numbers = #tpu.dot_dimension_numbers<[1], [0], [0], [1], [0, 0, 1, 1], [], []>} : vector<32x8xf32>, vector<8x16xf32>, vector<32x16xf32> -> vector<32x16xf32>
      %c7 = arith.constant 7 : index
      %c0_322 = arith.constant 0 : index
      %c0_323 = arith.constant 0 : index
      %591 = vector.load %arg21[%c7, %c0_322, %c0_323] : memref<8x32x16xf32, #tpu.memory_space<vmem>>, vector<1x32x16xf32>
      %592 = vector.shape_cast %591 : vector<1x32x16xf32> to vector<32x16xf32>
      %593 = vector.shape_cast %590 : vector<32x16xf32> to vector<1x32x16xf32>
      tpu.vector_store %arg21[%c7, %c0_322, %c0_323], %593 {strides = array<i32>} : memref<8x32x16xf32, #tpu.memory_space<vmem>>, vector<1x32x16xf32>,
    } else {
    }
    %c0 = arith.constant 0 : index
    %c0_1 = arith.constant 0 : index
    %3 = vector.load %arg11[%c0, %c0_1] : memref<32x4xf32, #tpu.memory_space<vmem>>, vector<32x4xf32>
    %c0_2 = arith.constant 0 : index
    %c0_3 = arith.constant 0 : index
    %c0_4 = arith.constant 0 : index
    %4 = vector.load %arg4[%c0_2, %c0_3, %c0_4] : memref<1x4x128xf32, #tpu.memory_space<vmem>>, vector<1x4x128xf32>
    %5 = vector.shape_cast %4 : vector<1x4x128xf32> to vector<4x128xf32>
    %cst = arith.constant dense<0.000000e+00> : vector<32x128xf32>
    %6 = tpu.matmul %3, %5, %cst {dimension_numbers = #tpu.dot_dimension_numbers<[1], [0], [0], [1], [0, 0, 1, 1], [], []>} : vector<32x4xf32>, vector<4x128xf32>, vector<32x128xf32> -> vector<32x128xf32>
    %c8_i32 = arith.constant 8 : i32
    %7 = arith.muli %arg1, %c8_i32 : i32
    %c0_i32_5 = arith.constant 0 : i32
    %8 = arith.addi %7, %c0_i32_5 : i32
    %9 = vector.extract_strided_slice %6 {offsets = [0, 0], sizes = [32, 16], strides = [1, 1]} : vector<32x128xf32> to vector<32x16xf32>
    %c0_6 = arith.constant 0 : index
    %10 = arith.index_cast %8 : i32 to index
    %11 = memref.load %arg2[%c0_6, %10] : memref<3x16xi32, #tpu.memory_space<smem>>
    %c0_7 = arith.constant 0 : index
    %12 = arith.index_cast %8 : i32 to index
    %13 = memref.load %arg3[%c0_7, %12] : memref<3x16xf32, #tpu.memory_space<smem>>
    %c1_i32 = arith.constant 1 : i32
    %14 = arith.addi %11, %c1_i32 : i32
    %c1_i32_8 = arith.constant 1 : i32
    %15 = arith.minsi %14, %c1_i32_8 : i32
    %cst_9 = arith.constant 1.000000e+00 : f32
    %16 = arith.subf %cst_9, %13 : f32
    %17 = arith.index_cast %11 : i32 to index
    %c0_10 = arith.constant 0 : index
    %c0_11 = arith.constant 0 : index
    %18 = vector.load %arg19[%17, %c0_10, %c0_11] : memref<2x32x16xf32, #tpu.memory_space<vmem>>, vector<1x32x16xf32>
    %19 = vector.shape_cast %18 : vector<1x32x16xf32> to vector<32x16xf32>
    %20 = vector.broadcast %16 : f32 to vector<32x16xf32>
    %21 = arith.mulf %20, %19 : vector<32x16xf32>
    %22 = arith.addf %9, %21 : vector<32x16xf32>
    %23 = arith.index_cast %15 : i32 to index
    %c0_12 = arith.constant 0 : index
    %c0_13 = arith.constant 0 : index
    %24 = vector.load %arg19[%23, %c0_12, %c0_13] : memref<2x32x16xf32, #tpu.memory_space<vmem>>, vector<1x32x16xf32>
    %25 = vector.shape_cast %24 : vector<1x32x16xf32> to vector<32x16xf32>
    %26 = vector.broadcast %13 : f32 to vector<32x16xf32>
    %27 = arith.mulf %26, %25 : vector<32x16xf32>
    %28 = arith.addf %22, %27 : vector<32x16xf32>
    %c1 = arith.constant 1 : index
    %29 = arith.index_cast %8 : i32 to index
    %30 = memref.load %arg2[%c1, %29] : memref<3x16xi32, #tpu.memory_space<smem>>
    %c1_14 = arith.constant 1 : index
    %31 = arith.index_cast %8 : i32 to index
    %32 = memref.load %arg3[%c1_14, %31] : memref<3x16xf32, #tpu.memory_space<smem>>
    %c1_i32_15 = arith.constant 1 : i32
    %33 = arith.addi %30, %c1_i32_15 : i32
    %c3_i32 = arith.constant 3 : i32
    %34 = arith.minsi %33, %c3_i32 : i32
    %cst_16 = arith.constant 1.000000e+00 : f32
    %35 = arith.subf %cst_16, %32 : f32
    %36 = arith.index_cast %30 : i32 to index
    %c0_17 = arith.constant 0 : index
    %c0_18 = arith.constant 0 : index
    %37 = vector.load %arg20[%36, %c0_17, %c0_18] : memref<4x32x16xf32, #tpu.memory_space<vmem>>, vector<1x32x16xf32>
    %38 = vector.shape_cast %37 : vector<1x32x16xf32> to vector<32x16xf32>
    %39 = vector.broadcast %35 : f32 to vector<32x16xf32>
    %40 = arith.mulf %39, %38 : vector<32x16xf32>
    %41 = arith.addf %28, %40 : vector<32x16xf32>
    %42 = arith.index_cast %34 : i32 to index
    %c0_19 = arith.constant 0 : index
    %c0_20 = arith.constant 0 : index
    %43 = vector.load %arg20[%42, %c0_19, %c0_20] : memref<4x32x16xf32, #tpu.memory_space<vmem>>, vector<1x32x16xf32>
    %44 = vector.shape_cast %43 : vector<1x32x16xf32> to vector<32x16xf32>
    %45 = vector.broadcast %32 : f32 to vector<32x16xf32>
    %46 = arith.mulf %45, %44 : vector<32x16xf32>
    %47 = arith.addf %41, %46 : vector<32x16xf32>
    %c2 = arith.constant 2 : index
    %48 = arith.index_cast %8 : i32 to index
    %49 = memref.load %arg2[%c2, %48] : memref<3x16xi32, #tpu.memory_space<smem>>
    %c2_21 = arith.constant 2 : index
    %50 = arith.index_cast %8 : i32 to index
    %51 = memref.load %arg3[%c2_21, %50] : memref<3x16xf32, #tpu.memory_space<smem>>
    %c1_i32_22 = arith.constant 1 : i32
    %52 = arith.addi %49, %c1_i32_22 : i32
    %c7_i32 = arith.constant 7 : i32
    %53 = arith.minsi %52, %c7_i32 : i32
    %cst_23 = arith.constant 1.000000e+00 : f32
    %54 = arith.subf %cst_23, %51 : f32
    %55 = arith.index_cast %49 : i32 to index
    %c0_24 = arith.constant 0 : index
    %c0_25 = arith.constant 0 : index
    %56 = vector.load %arg21[%55, %c0_24, %c0_25] : memref<8x32x16xf32, #tpu.memory_space<vmem>>, vector<1x32x16xf32>
    %57 = vector.shape_cast %56 : vector<1x32x16xf32> to vector<32x16xf32>
    %58 = vector.broadcast %54 : f32 to vector<32x16xf32>
    %59 = arith.mulf %58, %57 : vector<32x16xf32>
    %60 = arith.addf %47, %59 : vector<32x16xf32>
    %61 = arith.index_cast %53 : i32 to index
    %c0_26 = arith.constant 0 : index
    %c0_27 = arith.constant 0 : index
    %62 = vector.load %arg21[%61, %c0_26, %c0_27] : memref<8x32x16xf32, #tpu.memory_space<vmem>>, vector<1x32x16xf32>
    %63 = vector.shape_cast %62 : vector<1x32x16xf32> to vector<32x16xf32>
    %64 = vector.broadcast %51 : f32 to vector<32x16xf32>
    %65 = arith.mulf %64, %63 : vector<32x16xf32>
    %66 = arith.addf %60, %65 : vector<32x16xf32>
    %c0_28 = arith.constant 0 : index
    %c0_29 = arith.constant 0 : index
    %67 = vector.load %arg22[%c0_28, %c0_29] : memref<32x128xf32, #tpu.memory_space<vmem>>, vector<32x16xf32>
    tpu.vector_store %arg22[%c0_28, %c0_29], %66 {strides = array<i32>} : memref<32x128xf32, #tpu.memory_space<vmem>>, vector<32x16xf32>,
    %c8_i32_30 = arith.constant 8 : i32
    %68 = arith.muli %arg1, %c8_i32_30 : i32
    %c1_i32_31 = arith.constant 1 : i32
    %69 = arith.addi %68, %c1_i32_31 : i32
    %70 = vector.extract_strided_slice %6 {offsets = [0, 16], sizes = [32, 16], strides = [1, 1]} : vector<32x128xf32> to vector<32x16xf32>
    %c0_32 = arith.constant 0 : index
    %71 = arith.index_cast %69 : i32 to index
    %72 = memref.load %arg2[%c0_32, %71] : memref<3x16xi32, #tpu.memory_space<smem>>
    %c0_33 = arith.constant 0 : index
    %73 = arith.index_cast %69 : i32 to index
    %74 = memref.load %arg3[%c0_33, %73] : memref<3x16xf32, #tpu.memory_space<smem>>
    %c1_i32_34 = arith.constant 1 : i32
    %75 = arith.addi %72, %c1_i32_34 : i32
    %c1_i32_35 = arith.constant 1 : i32
    %76 = arith.minsi %75, %c1_i32_35 : i32
    %cst_36 = arith.constant 1.000000e+00 : f32
    %77 = arith.subf %cst_36, %74 : f32
    %78 = arith.index_cast %72 : i32 to index
    %c0_37 = arith.constant 0 : index
    %c0_38 = arith.constant 0 : index
    %79 = vector.load %arg19[%78, %c0_37, %c0_38] : memref<2x32x16xf32, #tpu.memory_space<vmem>>, vector<1x32x16xf32>
    %80 = vector.shape_cast %79 : vector<1x32x16xf32> to vector<32x16xf32>
    %81 = vector.broadcast %77 : f32 to vector<32x16xf32>
    %82 = arith.mulf %81, %80 : vector<32x16xf32>
    %83 = arith.addf %70, %82 : vector<32x16xf32>
    %84 = arith.index_cast %76 : i32 to index
    %c0_39 = arith.constant 0 : index
    %c0_40 = arith.constant 0 : index
    %85 = vector.load %arg19[%84, %c0_39, %c0_40] : memref<2x32x16xf32, #tpu.memory_space<vmem>>, vector<1x32x16xf32>
    %86 = vector.shape_cast %85 : vector<1x32x16xf32> to vector<32x16xf32>
    %87 = vector.broadcast %74 : f32 to vector<32x16xf32>
    %88 = arith.mulf %87, %86 : vector<32x16xf32>
    %89 = arith.addf %83, %88 : vector<32x16xf32>
    %c1_41 = arith.constant 1 : index
    %90 = arith.index_cast %69 : i32 to index
    %91 = memref.load %arg2[%c1_41, %90] : memref<3x16xi32, #tpu.memory_space<smem>>
    %c1_42 = arith.constant 1 : index
    %92 = arith.index_cast %69 : i32 to index
    %93 = memref.load %arg3[%c1_42, %92] : memref<3x16xf32, #tpu.memory_space<smem>>
    %c1_i32_43 = arith.constant 1 : i32
    %94 = arith.addi %91, %c1_i32_43 : i32
    %c3_i32_44 = arith.constant 3 : i32
    %95 = arith.minsi %94, %c3_i32_44 : i32
    %cst_45 = arith.constant 1.000000e+00 : f32
    %96 = arith.subf %cst_45, %93 : f32
    %97 = arith.index_cast %91 : i32 to index
    %c0_46 = arith.constant 0 : index
    %c0_47 = arith.constant 0 : index
    %98 = vector.load %arg20[%97, %c0_46, %c0_47] : memref<4x32x16xf32, #tpu.memory_space<vmem>>, vector<1x32x16xf32>
    %99 = vector.shape_cast %98 : vector<1x32x16xf32> to vector<32x16xf32>
    %100 = vector.broadcast %96 : f32 to vector<32x16xf32>
    %101 = arith.mulf %100, %99 : vector<32x16xf32>
    %102 = arith.addf %89, %101 : vector<32x16xf32>
    %103 = arith.index_cast %95 : i32 to index
    %c0_48 = arith.constant 0 : index
    %c0_49 = arith.constant 0 : index
    %104 = vector.load %arg20[%103, %c0_48, %c0_49] : memref<4x32x16xf32, #tpu.memory_space<vmem>>, vector<1x32x16xf32>
    %105 = vector.shape_cast %104 : vector<1x32x16xf32> to vector<32x16xf32>
    %106 = vector.broadcast %93 : f32 to vector<32x16xf32>
    %107 = arith.mulf %106, %105 : vector<32x16xf32>
    %108 = arith.addf %102, %107 : vector<32x16xf32>
    %c2_50 = arith.constant 2 : index
    %109 = arith.index_cast %69 : i32 to index
    %110 = memref.load %arg2[%c2_50, %109] : memref<3x16xi32, #tpu.memory_space<smem>>
    %c2_51 = arith.constant 2 : index
    %111 = arith.index_cast %69 : i32 to index
    %112 = memref.load %arg3[%c2_51, %111] : memref<3x16xf32, #tpu.memory_space<smem>>
    %c1_i32_52 = arith.constant 1 : i32
    %113 = arith.addi %110, %c1_i32_52 : i32
    %c7_i32_53 = arith.constant 7 : i32
    %114 = arith.minsi %113, %c7_i32_53 : i32
    %cst_54 = arith.constant 1.000000e+00 : f32
    %115 = arith.subf %cst_54, %112 : f32
    %116 = arith.index_cast %110 : i32 to index
    %c0_55 = arith.constant 0 : index
    %c0_56 = arith.constant 0 : index
    %117 = vector.load %arg21[%116, %c0_55, %c0_56] : memref<8x32x16xf32, #tpu.memory_space<vmem>>, vector<1x32x16xf32>
    %118 = vector.shape_cast %117 : vector<1x32x16xf32> to vector<32x16xf32>
    %119 = vector.broadcast %115 : f32 to vector<32x16xf32>
    %120 = arith.mulf %119, %118 : vector<32x16xf32>
    %121 = arith.addf %108, %120 : vector<32x16xf32>
    %122 = arith.index_cast %114 : i32 to index
    %c0_57 = arith.constant 0 : index
    %c0_58 = arith.constant 0 : index
    %123 = vector.load %arg21[%122, %c0_57, %c0_58] : memref<8x32x16xf32, #tpu.memory_space<vmem>>, vector<1x32x16xf32>
    %124 = vector.shape_cast %123 : vector<1x32x16xf32> to vector<32x16xf32>
    %125 = vector.broadcast %112 : f32 to vector<32x16xf32>
    %126 = arith.mulf %125, %124 : vector<32x16xf32>
    %127 = arith.addf %121, %126 : vector<32x16xf32>
    %c0_59 = arith.constant 0 : index
    %c16 = arith.constant 16 : index
    %128 = vector.load %arg22[%c0_59, %c16] : memref<32x128xf32, #tpu.memory_space<vmem>>, vector<32x16xf32>
    tpu.vector_store %arg22[%c0_59, %c16], %127 {strides = array<i32>} : memref<32x128xf32, #tpu.memory_space<vmem>>, vector<32x16xf32>,
    %c8_i32_60 = arith.constant 8 : i32
    %129 = arith.muli %arg1, %c8_i32_60 : i32
    %c2_i32 = arith.constant 2 : i32
    %130 = arith.addi %129, %c2_i32 : i32
    %131 = vector.extract_strided_slice %6 {offsets = [0, 32], sizes = [32, 16], strides = [1, 1]} : vector<32x128xf32> to vector<32x16xf32>
    %c0_61 = arith.constant 0 : index
    %132 = arith.index_cast %130 : i32 to index
    %133 = memref.load %arg2[%c0_61, %132] : memref<3x16xi32, #tpu.memory_space<smem>>
    %c0_62 = arith.constant 0 : index
    %134 = arith.index_cast %130 : i32 to index
    %135 = memref.load %arg3[%c0_62, %134] : memref<3x16xf32, #tpu.memory_space<smem>>
    %c1_i32_63 = arith.constant 1 : i32
    %136 = arith.addi %133, %c1_i32_63 : i32
    %c1_i32_64 = arith.constant 1 : i32
    %137 = arith.minsi %136, %c1_i32_64 : i32
    %cst_65 = arith.constant 1.000000e+00 : f32
    %138 = arith.subf %cst_65, %135 : f32
    %139 = arith.index_cast %133 : i32 to index
    %c0_66 = arith.constant 0 : index
    %c0_67 = arith.constant 0 : index
    %140 = vector.load %arg19[%139, %c0_66, %c0_67] : memref<2x32x16xf32, #tpu.memory_space<vmem>>, vector<1x32x16xf32>
    %141 = vector.shape_cast %140 : vector<1x32x16xf32> to vector<32x16xf32>
    %142 = vector.broadcast %138 : f32 to vector<32x16xf32>
    %143 = arith.mulf %142, %141 : vector<32x16xf32>
    %144 = arith.addf %131, %143 : vector<32x16xf32>
    %145 = arith.index_cast %137 : i32 to index
    %c0_68 = arith.constant 0 : index
    %c0_69 = arith.constant 0 : index
    %146 = vector.load %arg19[%145, %c0_68, %c0_69] : memref<2x32x16xf32, #tpu.memory_space<vmem>>, vector<1x32x16xf32>
    %147 = vector.shape_cast %146 : vector<1x32x16xf32> to vector<32x16xf32>
    %148 = vector.broadcast %135 : f32 to vector<32x16xf32>
    %149 = arith.mulf %148, %147 : vector<32x16xf32>
    %150 = arith.addf %144, %149 : vector<32x16xf32>
    %c1_70 = arith.constant 1 : index
    %151 = arith.index_cast %130 : i32 to index
    %152 = memref.load %arg2[%c1_70, %151] : memref<3x16xi32, #tpu.memory_space<smem>>
    %c1_71 = arith.constant 1 : index
    %153 = arith.index_cast %130 : i32 to index
    %154 = memref.load %arg3[%c1_71, %153] : memref<3x16xf32, #tpu.memory_space<smem>>
    %c1_i32_72 = arith.constant 1 : i32
    %155 = arith.addi %152, %c1_i32_72 : i32
    %c3_i32_73 = arith.constant 3 : i32
    %156 = arith.minsi %155, %c3_i32_73 : i32
    %cst_74 = arith.constant 1.000000e+00 : f32
    %157 = arith.subf %cst_74, %154 : f32
    %158 = arith.index_cast %152 : i32 to index
    %c0_75 = arith.constant 0 : index
    %c0_76 = arith.constant 0 : index
    %159 = vector.load %arg20[%158, %c0_75, %c0_76] : memref<4x32x16xf32, #tpu.memory_space<vmem>>, vector<1x32x16xf32>
    %160 = vector.shape_cast %159 : vector<1x32x16xf32> to vector<32x16xf32>
    %161 = vector.broadcast %157 : f32 to vector<32x16xf32>
    %162 = arith.mulf %161, %160 : vector<32x16xf32>
    %163 = arith.addf %150, %162 : vector<32x16xf32>
    %164 = arith.index_cast %156 : i32 to index
    %c0_77 = arith.constant 0 : index
    %c0_78 = arith.constant 0 : index
    %165 = vector.load %arg20[%164, %c0_77, %c0_78] : memref<4x32x16xf32, #tpu.memory_space<vmem>>, vector<1x32x16xf32>
    %166 = vector.shape_cast %165 : vector<1x32x16xf32> to vector<32x16xf32>
    %167 = vector.broadcast %154 : f32 to vector<32x16xf32>
    %168 = arith.mulf %167, %166 : vector<32x16xf32>
    %169 = arith.addf %163, %168 : vector<32x16xf32>
    %c2_79 = arith.constant 2 : index
    %170 = arith.index_cast %130 : i32 to index
    %171 = memref.load %arg2[%c2_79, %170] : memref<3x16xi32, #tpu.memory_space<smem>>
    %c2_80 = arith.constant 2 : index
    %172 = arith.index_cast %130 : i32 to index
    %173 = memref.load %arg3[%c2_80, %172] : memref<3x16xf32, #tpu.memory_space<smem>>
    %c1_i32_81 = arith.constant 1 : i32
    %174 = arith.addi %171, %c1_i32_81 : i32
    %c7_i32_82 = arith.constant 7 : i32
    %175 = arith.minsi %174, %c7_i32_82 : i32
    %cst_83 = arith.constant 1.000000e+00 : f32
    %176 = arith.subf %cst_83, %173 : f32
    %177 = arith.index_cast %171 : i32 to index
    %c0_84 = arith.constant 0 : index
    %c0_85 = arith.constant 0 : index
    %178 = vector.load %arg21[%177, %c0_84, %c0_85] : memref<8x32x16xf32, #tpu.memory_space<vmem>>, vector<1x32x16xf32>
    %179 = vector.shape_cast %178 : vector<1x32x16xf32> to vector<32x16xf32>
    %180 = vector.broadcast %176 : f32 to vector<32x16xf32>
    %181 = arith.mulf %180, %179 : vector<32x16xf32>
    %182 = arith.addf %169, %181 : vector<32x16xf32>
    %183 = arith.index_cast %175 : i32 to index
    %c0_86 = arith.constant 0 : index
    %c0_87 = arith.constant 0 : index
    %184 = vector.load %arg21[%183, %c0_86, %c0_87] : memref<8x32x16xf32, #tpu.memory_space<vmem>>, vector<1x32x16xf32>
    %185 = vector.shape_cast %184 : vector<1x32x16xf32> to vector<32x16xf32>
    %186 = vector.broadcast %173 : f32 to vector<32x16xf32>
    %187 = arith.mulf %186, %185 : vector<32x16xf32>
    %188 = arith.addf %182, %187 : vector<32x16xf32>
    %c0_88 = arith.constant 0 : index
    %c32 = arith.constant 32 : index
    %189 = vector.load %arg22[%c0_88, %c32] : memref<32x128xf32, #tpu.memory_space<vmem>>, vector<32x16xf32>
    tpu.vector_store %arg22[%c0_88, %c32], %188 {strides = array<i32>} : memref<32x128xf32, #tpu.memory_space<vmem>>, vector<32x16xf32>,
    %c8_i32_89 = arith.constant 8 : i32
    %190 = arith.muli %arg1, %c8_i32_89 : i32
    %c3_i32_90 = arith.constant 3 : i32
    %191 = arith.addi %190, %c3_i32_90 : i32
    %192 = vector.extract_strided_slice %6 {offsets = [0, 48], sizes = [32, 16], strides = [1, 1]} : vector<32x128xf32> to vector<32x16xf32>
    %c0_91 = arith.constant 0 : index
    %193 = arith.index_cast %191 : i32 to index
    %194 = memref.load %arg2[%c0_91, %193] : memref<3x16xi32, #tpu.memory_space<smem>>
    %c0_92 = arith.constant 0 : index
    %195 = arith.index_cast %191 : i32 to index
    %196 = memref.load %arg3[%c0_92, %195] : memref<3x16xf32, #tpu.memory_space<smem>>
    %c1_i32_93 = arith.constant 1 : i32
    %197 = arith.addi %194, %c1_i32_93 : i32
    %c1_i32_94 = arith.constant 1 : i32
    %198 = arith.minsi %197, %c1_i32_94 : i32
    %cst_95 = arith.constant 1.000000e+00 : f32
    %199 = arith.subf %cst_95, %196 : f32
    %200 = arith.index_cast %194 : i32 to index
    %c0_96 = arith.constant 0 : index
    %c0_97 = arith.constant 0 : index
    %201 = vector.load %arg19[%200, %c0_96, %c0_97] : memref<2x32x16xf32, #tpu.memory_space<vmem>>, vector<1x32x16xf32>
    %202 = vector.shape_cast %201 : vector<1x32x16xf32> to vector<32x16xf32>
    %203 = vector.broadcast %199 : f32 to vector<32x16xf32>
    %204 = arith.mulf %203, %202 : vector<32x16xf32>
    %205 = arith.addf %192, %204 : vector<32x16xf32>
    %206 = arith.index_cast %198 : i32 to index
    %c0_98 = arith.constant 0 : index
    %c0_99 = arith.constant 0 : index
    %207 = vector.load %arg19[%206, %c0_98, %c0_99] : memref<2x32x16xf32, #tpu.memory_space<vmem>>, vector<1x32x16xf32>
    %208 = vector.shape_cast %207 : vector<1x32x16xf32> to vector<32x16xf32>
    %209 = vector.broadcast %196 : f32 to vector<32x16xf32>
    %210 = arith.mulf %209, %208 : vector<32x16xf32>
    %211 = arith.addf %205, %210 : vector<32x16xf32>
    %c1_100 = arith.constant 1 : index
    %212 = arith.index_cast %191 : i32 to index
    %213 = memref.load %arg2[%c1_100, %212] : memref<3x16xi32, #tpu.memory_space<smem>>
    %c1_101 = arith.constant 1 : index
    %214 = arith.index_cast %191 : i32 to index
    %215 = memref.load %arg3[%c1_101, %214] : memref<3x16xf32, #tpu.memory_space<smem>>
    %c1_i32_102 = arith.constant 1 : i32
    %216 = arith.addi %213, %c1_i32_102 : i32
    %c3_i32_103 = arith.constant 3 : i32
    %217 = arith.minsi %216, %c3_i32_103 : i32
    %cst_104 = arith.constant 1.000000e+00 : f32
    %218 = arith.subf %cst_104, %215 : f32
    %219 = arith.index_cast %213 : i32 to index
    %c0_105 = arith.constant 0 : index
    %c0_106 = arith.constant 0 : index
    %220 = vector.load %arg20[%219, %c0_105, %c0_106] : memref<4x32x16xf32, #tpu.memory_space<vmem>>, vector<1x32x16xf32>
    %221 = vector.shape_cast %220 : vector<1x32x16xf32> to vector<32x16xf32>
    %222 = vector.broadcast %218 : f32 to vector<32x16xf32>
    %223 = arith.mulf %222, %221 : vector<32x16xf32>
    %224 = arith.addf %211, %223 : vector<32x16xf32>
    %225 = arith.index_cast %217 : i32 to index
    %c0_107 = arith.constant 0 : index
    %c0_108 = arith.constant 0 : index
    %226 = vector.load %arg20[%225, %c0_107, %c0_108] : memref<4x32x16xf32, #tpu.memory_space<vmem>>, vector<1x32x16xf32>
    %227 = vector.shape_cast %226 : vector<1x32x16xf32> to vector<32x16xf32>
    %228 = vector.broadcast %215 : f32 to vector<32x16xf32>
    %229 = arith.mulf %228, %227 : vector<32x16xf32>
    %230 = arith.addf %224, %229 : vector<32x16xf32>
    %c2_109 = arith.constant 2 : index
    %231 = arith.index_cast %191 : i32 to index
    %232 = memref.load %arg2[%c2_109, %231] : memref<3x16xi32, #tpu.memory_space<smem>>
    %c2_110 = arith.constant 2 : index
    %233 = arith.index_cast %191 : i32 to index
    %234 = memref.load %arg3[%c2_110, %233] : memref<3x16xf32, #tpu.memory_space<smem>>
    %c1_i32_111 = arith.constant 1 : i32
    %235 = arith.addi %232, %c1_i32_111 : i32
    %c7_i32_112 = arith.constant 7 : i32
    %236 = arith.minsi %235, %c7_i32_112 : i32
    %cst_113 = arith.constant 1.000000e+00 : f32
    %237 = arith.subf %cst_113, %234 : f32
    %238 = arith.index_cast %232 : i32 to index
    %c0_114 = arith.constant 0 : index
    %c0_115 = arith.constant 0 : index
    %239 = vector.load %arg21[%238, %c0_114, %c0_115] : memref<8x32x16xf32, #tpu.memory_space<vmem>>, vector<1x32x16xf32>
    %240 = vector.shape_cast %239 : vector<1x32x16xf32> to vector<32x16xf32>
    %241 = vector.broadcast %237 : f32 to vector<32x16xf32>
    %242 = arith.mulf %241, %240 : vector<32x16xf32>
    %243 = arith.addf %230, %242 : vector<32x16xf32>
    %244 = arith.index_cast %236 : i32 to index
    %c0_116 = arith.constant 0 : index
    %c0_117 = arith.constant 0 : index
    %245 = vector.load %arg21[%244, %c0_116, %c0_117] : memref<8x32x16xf32, #tpu.memory_space<vmem>>, vector<1x32x16xf32>
    %246 = vector.shape_cast %245 : vector<1x32x16xf32> to vector<32x16xf32>
    %247 = vector.broadcast %234 : f32 to vector<32x16xf32>
    %248 = arith.mulf %247, %246 : vector<32x16xf32>
    %249 = arith.addf %243, %248 : vector<32x16xf32>
    %c0_118 = arith.constant 0 : index
    %c48 = arith.constant 48 : index
    %250 = vector.load %arg22[%c0_118, %c48] : memref<32x128xf32, #tpu.memory_space<vmem>>, vector<32x16xf32>
    tpu.vector_store %arg22[%c0_118, %c48], %249 {strides = array<i32>} : memref<32x128xf32, #tpu.memory_space<vmem>>, vector<32x16xf32>,
    %c8_i32_119 = arith.constant 8 : i32
    %251 = arith.muli %arg1, %c8_i32_119 : i32
    %c4_i32 = arith.constant 4 : i32
    %252 = arith.addi %251, %c4_i32 : i32
    %253 = vector.extract_strided_slice %6 {offsets = [0, 64], sizes = [32, 16], strides = [1, 1]} : vector<32x128xf32> to vector<32x16xf32>
    %c0_120 = arith.constant 0 : index
    %254 = arith.index_cast %252 : i32 to index
    %255 = memref.load %arg2[%c0_120, %254] : memref<3x16xi32, #tpu.memory_space<smem>>
    %c0_121 = arith.constant 0 : index
    %256 = arith.index_cast %252 : i32 to index
    %257 = memref.load %arg3[%c0_121, %256] : memref<3x16xf32, #tpu.memory_space<smem>>
    %c1_i32_122 = arith.constant 1 : i32
    %258 = arith.addi %255, %c1_i32_122 : i32
    %c1_i32_123 = arith.constant 1 : i32
    %259 = arith.minsi %258, %c1_i32_123 : i32
    %cst_124 = arith.constant 1.000000e+00 : f32
    %260 = arith.subf %cst_124, %257 : f32
    %261 = arith.index_cast %255 : i32 to index
    %c0_125 = arith.constant 0 : index
    %c0_126 = arith.constant 0 : index
    %262 = vector.load %arg19[%261, %c0_125, %c0_126] : memref<2x32x16xf32, #tpu.memory_space<vmem>>, vector<1x32x16xf32>
    %263 = vector.shape_cast %262 : vector<1x32x16xf32> to vector<32x16xf32>
    %264 = vector.broadcast %260 : f32 to vector<32x16xf32>
    %265 = arith.mulf %264, %263 : vector<32x16xf32>
    %266 = arith.addf %253, %265 : vector<32x16xf32>
    %267 = arith.index_cast %259 : i32 to index
    %c0_127 = arith.constant 0 : index
    %c0_128 = arith.constant 0 : index
    %268 = vector.load %arg19[%267, %c0_127, %c0_128] : memref<2x32x16xf32, #tpu.memory_space<vmem>>, vector<1x32x16xf32>
    %269 = vector.shape_cast %268 : vector<1x32x16xf32> to vector<32x16xf32>
    %270 = vector.broadcast %257 : f32 to vector<32x16xf32>
    %271 = arith.mulf %270, %269 : vector<32x16xf32>
    %272 = arith.addf %266, %271 : vector<32x16xf32>
    %c1_129 = arith.constant 1 : index
    %273 = arith.index_cast %252 : i32 to index
    %274 = memref.load %arg2[%c1_129, %273] : memref<3x16xi32, #tpu.memory_space<smem>>
    %c1_130 = arith.constant 1 : index
    %275 = arith.index_cast %252 : i32 to index
    %276 = memref.load %arg3[%c1_130, %275] : memref<3x16xf32, #tpu.memory_space<smem>>
    %c1_i32_131 = arith.constant 1 : i32
    %277 = arith.addi %274, %c1_i32_131 : i32
    %c3_i32_132 = arith.constant 3 : i32
    %278 = arith.minsi %277, %c3_i32_132 : i32
    %cst_133 = arith.constant 1.000000e+00 : f32
    %279 = arith.subf %cst_133, %276 : f32
    %280 = arith.index_cast %274 : i32 to index
    %c0_134 = arith.constant 0 : index
    %c0_135 = arith.constant 0 : index
    %281 = vector.load %arg20[%280, %c0_134, %c0_135] : memref<4x32x16xf32, #tpu.memory_space<vmem>>, vector<1x32x16xf32>
    %282 = vector.shape_cast %281 : vector<1x32x16xf32> to vector<32x16xf32>
    %283 = vector.broadcast %279 : f32 to vector<32x16xf32>
    %284 = arith.mulf %283, %282 : vector<32x16xf32>
    %285 = arith.addf %272, %284 : vector<32x16xf32>
    %286 = arith.index_cast %278 : i32 to index
    %c0_136 = arith.constant 0 : index
    %c0_137 = arith.constant 0 : index
    %287 = vector.load %arg20[%286, %c0_136, %c0_137] : memref<4x32x16xf32, #tpu.memory_space<vmem>>, vector<1x32x16xf32>
    %288 = vector.shape_cast %287 : vector<1x32x16xf32> to vector<32x16xf32>
    %289 = vector.broadcast %276 : f32 to vector<32x16xf32>
    %290 = arith.mulf %289, %288 : vector<32x16xf32>
    %291 = arith.addf %285, %290 : vector<32x16xf32>
    %c2_138 = arith.constant 2 : index
    %292 = arith.index_cast %252 : i32 to index
    %293 = memref.load %arg2[%c2_138, %292] : memref<3x16xi32, #tpu.memory_space<smem>>
    %c2_139 = arith.constant 2 : index
    %294 = arith.index_cast %252 : i32 to index
    %295 = memref.load %arg3[%c2_139, %294] : memref<3x16xf32, #tpu.memory_space<smem>>
    %c1_i32_140 = arith.constant 1 : i32
    %296 = arith.addi %293, %c1_i32_140 : i32
    %c7_i32_141 = arith.constant 7 : i32
    %297 = arith.minsi %296, %c7_i32_141 : i32
    %cst_142 = arith.constant 1.000000e+00 : f32
    %298 = arith.subf %cst_142, %295 : f32
    %299 = arith.index_cast %293 : i32 to index
    %c0_143 = arith.constant 0 : index
    %c0_144 = arith.constant 0 : index
    %300 = vector.load %arg21[%299, %c0_143, %c0_144] : memref<8x32x16xf32, #tpu.memory_space<vmem>>, vector<1x32x16xf32>
    %301 = vector.shape_cast %300 : vector<1x32x16xf32> to vector<32x16xf32>
    %302 = vector.broadcast %298 : f32 to vector<32x16xf32>
    %303 = arith.mulf %302, %301 : vector<32x16xf32>
    %304 = arith.addf %291, %303 : vector<32x16xf32>
    %305 = arith.index_cast %297 : i32 to index
    %c0_145 = arith.constant 0 : index
    %c0_146 = arith.constant 0 : index
    %306 = vector.load %arg21[%305, %c0_145, %c0_146] : memref<8x32x16xf32, #tpu.memory_space<vmem>>, vector<1x32x16xf32>
    %307 = vector.shape_cast %306 : vector<1x32x16xf32> to vector<32x16xf32>
    %308 = vector.broadcast %295 : f32 to vector<32x16xf32>
    %309 = arith.mulf %308, %307 : vector<32x16xf32>
    %310 = arith.addf %304, %309 : vector<32x16xf32>
    %c0_147 = arith.constant 0 : index
    %c64 = arith.constant 64 : index
    %311 = vector.load %arg22[%c0_147, %c64] : memref<32x128xf32, #tpu.memory_space<vmem>>, vector<32x16xf32>
    tpu.vector_store %arg22[%c0_147, %c64], %310 {strides = array<i32>} : memref<32x128xf32, #tpu.memory_space<vmem>>, vector<32x16xf32>,
    %c8_i32_148 = arith.constant 8 : i32
    %312 = arith.muli %arg1, %c8_i32_148 : i32
    %c5_i32 = arith.constant 5 : i32
    %313 = arith.addi %312, %c5_i32 : i32
    %314 = vector.extract_strided_slice %6 {offsets = [0, 80], sizes = [32, 16], strides = [1, 1]} : vector<32x128xf32> to vector<32x16xf32>
    %c0_149 = arith.constant 0 : index
    %315 = arith.index_cast %313 : i32 to index
    %316 = memref.load %arg2[%c0_149, %315] : memref<3x16xi32, #tpu.memory_space<smem>>
    %c0_150 = arith.constant 0 : index
    %317 = arith.index_cast %313 : i32 to index
    %318 = memref.load %arg3[%c0_150, %317] : memref<3x16xf32, #tpu.memory_space<smem>>
    %c1_i32_151 = arith.constant 1 : i32
    %319 = arith.addi %316, %c1_i32_151 : i32
    %c1_i32_152 = arith.constant 1 : i32
    %320 = arith.minsi %319, %c1_i32_152 : i32
    %cst_153 = arith.constant 1.000000e+00 : f32
    %321 = arith.subf %cst_153, %318 : f32
    %322 = arith.index_cast %316 : i32 to index
    %c0_154 = arith.constant 0 : index
    %c0_155 = arith.constant 0 : index
    %323 = vector.load %arg19[%322, %c0_154, %c0_155] : memref<2x32x16xf32, #tpu.memory_space<vmem>>, vector<1x32x16xf32>
    %324 = vector.shape_cast %323 : vector<1x32x16xf32> to vector<32x16xf32>
    %325 = vector.broadcast %321 : f32 to vector<32x16xf32>
    %326 = arith.mulf %325, %324 : vector<32x16xf32>
    %327 = arith.addf %314, %326 : vector<32x16xf32>
    %328 = arith.index_cast %320 : i32 to index
    %c0_156 = arith.constant 0 : index
    %c0_157 = arith.constant 0 : index
    %329 = vector.load %arg19[%328, %c0_156, %c0_157] : memref<2x32x16xf32, #tpu.memory_space<vmem>>, vector<1x32x16xf32>
    %330 = vector.shape_cast %329 : vector<1x32x16xf32> to vector<32x16xf32>
    %331 = vector.broadcast %318 : f32 to vector<32x16xf32>
    %332 = arith.mulf %331, %330 : vector<32x16xf32>
    %333 = arith.addf %327, %332 : vector<32x16xf32>
    %c1_158 = arith.constant 1 : index
    %334 = arith.index_cast %313 : i32 to index
    %335 = memref.load %arg2[%c1_158, %334] : memref<3x16xi32, #tpu.memory_space<smem>>
    %c1_159 = arith.constant 1 : index
    %336 = arith.index_cast %313 : i32 to index
    %337 = memref.load %arg3[%c1_159, %336] : memref<3x16xf32, #tpu.memory_space<smem>>
    %c1_i32_160 = arith.constant 1 : i32
    %338 = arith.addi %335, %c1_i32_160 : i32
    %c3_i32_161 = arith.constant 3 : i32
    %339 = arith.minsi %338, %c3_i32_161 : i32
    %cst_162 = arith.constant 1.000000e+00 : f32
    %340 = arith.subf %cst_162, %337 : f32
    %341 = arith.index_cast %335 : i32 to index
    %c0_163 = arith.constant 0 : index
    %c0_164 = arith.constant 0 : index
    %342 = vector.load %arg20[%341, %c0_163, %c0_164] : memref<4x32x16xf32, #tpu.memory_space<vmem>>, vector<1x32x16xf32>
    %343 = vector.shape_cast %342 : vector<1x32x16xf32> to vector<32x16xf32>
    %344 = vector.broadcast %340 : f32 to vector<32x16xf32>
    %345 = arith.mulf %344, %343 : vector<32x16xf32>
    %346 = arith.addf %333, %345 : vector<32x16xf32>
    %347 = arith.index_cast %339 : i32 to index
    %c0_165 = arith.constant 0 : index
    %c0_166 = arith.constant 0 : index
    %348 = vector.load %arg20[%347, %c0_165, %c0_166] : memref<4x32x16xf32, #tpu.memory_space<vmem>>, vector<1x32x16xf32>
    %349 = vector.shape_cast %348 : vector<1x32x16xf32> to vector<32x16xf32>
    %350 = vector.broadcast %337 : f32 to vector<32x16xf32>
    %351 = arith.mulf %350, %349 : vector<32x16xf32>
    %352 = arith.addf %346, %351 : vector<32x16xf32>
    %c2_167 = arith.constant 2 : index
    %353 = arith.index_cast %313 : i32 to index
    %354 = memref.load %arg2[%c2_167, %353] : memref<3x16xi32, #tpu.memory_space<smem>>
    %c2_168 = arith.constant 2 : index
    %355 = arith.index_cast %313 : i32 to index
    %356 = memref.load %arg3[%c2_168, %355] : memref<3x16xf32, #tpu.memory_space<smem>>
    %c1_i32_169 = arith.constant 1 : i32
    %357 = arith.addi %354, %c1_i32_169 : i32
    %c7_i32_170 = arith.constant 7 : i32
    %358 = arith.minsi %357, %c7_i32_170 : i32
    %cst_171 = arith.constant 1.000000e+00 : f32
    %359 = arith.subf %cst_171, %356 : f32
    %360 = arith.index_cast %354 : i32 to index
    %c0_172 = arith.constant 0 : index
    %c0_173 = arith.constant 0 : index
    %361 = vector.load %arg21[%360, %c0_172, %c0_173] : memref<8x32x16xf32, #tpu.memory_space<vmem>>, vector<1x32x16xf32>
    %362 = vector.shape_cast %361 : vector<1x32x16xf32> to vector<32x16xf32>
    %363 = vector.broadcast %359 : f32 to vector<32x16xf32>
    %364 = arith.mulf %363, %362 : vector<32x16xf32>
    %365 = arith.addf %352, %364 : vector<32x16xf32>
    %366 = arith.index_cast %358 : i32 to index
    %c0_174 = arith.constant 0 : index
    %c0_175 = arith.constant 0 : index
    %367 = vector.load %arg21[%366, %c0_174, %c0_175] : memref<8x32x16xf32, #tpu.memory_space<vmem>>, vector<1x32x16xf32>
    %368 = vector.shape_cast %367 : vector<1x32x16xf32> to vector<32x16xf32>
    %369 = vector.broadcast %356 : f32 to vector<32x16xf32>
    %370 = arith.mulf %369, %368 : vector<32x16xf32>
    %371 = arith.addf %365, %370 : vector<32x16xf32>
    %c0_176 = arith.constant 0 : index
    %c80 = arith.constant 80 : index
    %372 = vector.load %arg22[%c0_176, %c80] : memref<32x128xf32, #tpu.memory_space<vmem>>, vector<32x16xf32>
    tpu.vector_store %arg22[%c0_176, %c80], %371 {strides = array<i32>} : memref<32x128xf32, #tpu.memory_space<vmem>>, vector<32x16xf32>,
    %c8_i32_177 = arith.constant 8 : i32
    %373 = arith.muli %arg1, %c8_i32_177 : i32
    %c6_i32 = arith.constant 6 : i32
    %374 = arith.addi %373, %c6_i32 : i32
    %375 = vector.extract_strided_slice %6 {offsets = [0, 96], sizes = [32, 16], strides = [1, 1]} : vector<32x128xf32> to vector<32x16xf32>
    %c0_178 = arith.constant 0 : index
    %376 = arith.index_cast %374 : i32 to index
    %377 = memref.load %arg2[%c0_178, %376] : memref<3x16xi32, #tpu.memory_space<smem>>
    %c0_179 = arith.constant 0 : index
    %378 = arith.index_cast %374 : i32 to index
    %379 = memref.load %arg3[%c0_179, %378] : memref<3x16xf32, #tpu.memory_space<smem>>
    %c1_i32_180 = arith.constant 1 : i32
    %380 = arith.addi %377, %c1_i32_180 : i32
    %c1_i32_181 = arith.constant 1 : i32
    %381 = arith.minsi %380, %c1_i32_181 : i32
    %cst_182 = arith.constant 1.000000e+00 : f32
    %382 = arith.subf %cst_182, %379 : f32
    %383 = arith.index_cast %377 : i32 to index
    %c0_183 = arith.constant 0 : index
    %c0_184 = arith.constant 0 : index
    %384 = vector.load %arg19[%383, %c0_183, %c0_184] : memref<2x32x16xf32, #tpu.memory_space<vmem>>, vector<1x32x16xf32>
    %385 = vector.shape_cast %384 : vector<1x32x16xf32> to vector<32x16xf32>
    %386 = vector.broadcast %382 : f32 to vector<32x16xf32>
    %387 = arith.mulf %386, %385 : vector<32x16xf32>
    %388 = arith.addf %375, %387 : vector<32x16xf32>
    %389 = arith.index_cast %381 : i32 to index
    %c0_185 = arith.constant 0 : index
    %c0_186 = arith.constant 0 : index
    %390 = vector.load %arg19[%389, %c0_185, %c0_186] : memref<2x32x16xf32, #tpu.memory_space<vmem>>, vector<1x32x16xf32>
    %391 = vector.shape_cast %390 : vector<1x32x16xf32> to vector<32x16xf32>
    %392 = vector.broadcast %379 : f32 to vector<32x16xf32>
    %393 = arith.mulf %392, %391 : vector<32x16xf32>
    %394 = arith.addf %388, %393 : vector<32x16xf32>
    %c1_187 = arith.constant 1 : index
    %395 = arith.index_cast %374 : i32 to index
    %396 = memref.load %arg2[%c1_187, %395] : memref<3x16xi32, #tpu.memory_space<smem>>
    %c1_188 = arith.constant 1 : index
    %397 = arith.index_cast %374 : i32 to index
    %398 = memref.load %arg3[%c1_188, %397] : memref<3x16xf32, #tpu.memory_space<smem>>
    %c1_i32_189 = arith.constant 1 : i32
    %399 = arith.addi %396, %c1_i32_189 : i32
    %c3_i32_190 = arith.constant 3 : i32
    %400 = arith.minsi %399, %c3_i32_190 : i32
    %cst_191 = arith.constant 1.000000e+00 : f32
    %401 = arith.subf %cst_191, %398 : f32
    %402 = arith.index_cast %396 : i32 to index
    %c0_192 = arith.constant 0 : index
    %c0_193 = arith.constant 0 : index
    %403 = vector.load %arg20[%402, %c0_192, %c0_193] : memref<4x32x16xf32, #tpu.memory_space<vmem>>, vector<1x32x16xf32>
    %404 = vector.shape_cast %403 : vector<1x32x16xf32> to vector<32x16xf32>
    %405 = vector.broadcast %401 : f32 to vector<32x16xf32>
    %406 = arith.mulf %405, %404 : vector<32x16xf32>
    %407 = arith.addf %394, %406 : vector<32x16xf32>
    %408 = arith.index_cast %400 : i32 to index
    %c0_194 = arith.constant 0 : index
    %c0_195 = arith.constant 0 : index
    %409 = vector.load %arg20[%408, %c0_194, %c0_195] : memref<4x32x16xf32, #tpu.memory_space<vmem>>, vector<1x32x16xf32>
    %410 = vector.shape_cast %409 : vector<1x32x16xf32> to vector<32x16xf32>
    %411 = vector.broadcast %398 : f32 to vector<32x16xf32>
    %412 = arith.mulf %411, %410 : vector<32x16xf32>
    %413 = arith.addf %407, %412 : vector<32x16xf32>
    %c2_196 = arith.constant 2 : index
    %414 = arith.index_cast %374 : i32 to index
    %415 = memref.load %arg2[%c2_196, %414] : memref<3x16xi32, #tpu.memory_space<smem>>
    %c2_197 = arith.constant 2 : index
    %416 = arith.index_cast %374 : i32 to index
    %417 = memref.load %arg3[%c2_197, %416] : memref<3x16xf32, #tpu.memory_space<smem>>
    %c1_i32_198 = arith.constant 1 : i32
    %418 = arith.addi %415, %c1_i32_198 : i32
    %c7_i32_199 = arith.constant 7 : i32
    %419 = arith.minsi %418, %c7_i32_199 : i32
    %cst_200 = arith.constant 1.000000e+00 : f32
    %420 = arith.subf %cst_200, %417 : f32
    %421 = arith.index_cast %415 : i32 to index
    %c0_201 = arith.constant 0 : index
    %c0_202 = arith.constant 0 : index
    %422 = vector.load %arg21[%421, %c0_201, %c0_202] : memref<8x32x16xf32, #tpu.memory_space<vmem>>, vector<1x32x16xf32>
    %423 = vector.shape_cast %422 : vector<1x32x16xf32> to vector<32x16xf32>
    %424 = vector.broadcast %420 : f32 to vector<32x16xf32>
    %425 = arith.mulf %424, %423 : vector<32x16xf32>
    %426 = arith.addf %413, %425 : vector<32x16xf32>
    %427 = arith.index_cast %419 : i32 to index
    %c0_203 = arith.constant 0 : index
    %c0_204 = arith.constant 0 : index
    %428 = vector.load %arg21[%427, %c0_203, %c0_204] : memref<8x32x16xf32, #tpu.memory_space<vmem>>, vector<1x32x16xf32>
    %429 = vector.shape_cast %428 : vector<1x32x16xf32> to vector<32x16xf32>
    %430 = vector.broadcast %417 : f32 to vector<32x16xf32>
    %431 = arith.mulf %430, %429 : vector<32x16xf32>
    %432 = arith.addf %426, %431 : vector<32x16xf32>
    %c0_205 = arith.constant 0 : index
    %c96 = arith.constant 96 : index
    %433 = vector.load %arg22[%c0_205, %c96] : memref<32x128xf32, #tpu.memory_space<vmem>>, vector<32x16xf32>
    tpu.vector_store %arg22[%c0_205, %c96], %432 {strides = array<i32>} : memref<32x128xf32, #tpu.memory_space<vmem>>, vector<32x16xf32>,
    %c8_i32_206 = arith.constant 8 : i32
    %434 = arith.muli %arg1, %c8_i32_206 : i32
    %c7_i32_207 = arith.constant 7 : i32
    %435 = arith.addi %434, %c7_i32_207 : i32
    %436 = vector.extract_strided_slice %6 {offsets = [0, 112], sizes = [32, 16], strides = [1, 1]} : vector<32x128xf32> to vector<32x16xf32>
    %c0_208 = arith.constant 0 : index
    %437 = arith.index_cast %435 : i32 to index
    %438 = memref.load %arg2[%c0_208, %437] : memref<3x16xi32, #tpu.memory_space<smem>>
    %c0_209 = arith.constant 0 : index
    %439 = arith.index_cast %435 : i32 to index
    %440 = memref.load %arg3[%c0_209, %439] : memref<3x16xf32, #tpu.memory_space<smem>>
    %c1_i32_210 = arith.constant 1 : i32
    %441 = arith.addi %438, %c1_i32_210 : i32
    %c1_i32_211 = arith.constant 1 : i32
    %442 = arith.minsi %441, %c1_i32_211 : i32
    %cst_212 = arith.constant 1.000000e+00 : f32
    %443 = arith.subf %cst_212, %440 : f32
    %444 = arith.index_cast %438 : i32 to index
    %c0_213 = arith.constant 0 : index
    %c0_214 = arith.constant 0 : index
    %445 = vector.load %arg19[%444, %c0_213, %c0_214] : memref<2x32x16xf32, #tpu.memory_space<vmem>>, vector<1x32x16xf32>
    %446 = vector.shape_cast %445 : vector<1x32x16xf32> to vector<32x16xf32>
    %447 = vector.broadcast %443 : f32 to vector<32x16xf32>
    %448 = arith.mulf %447, %446 : vector<32x16xf32>
    %449 = arith.addf %436, %448 : vector<32x16xf32>
    %450 = arith.index_cast %442 : i32 to index
    %c0_215 = arith.constant 0 : index
    %c0_216 = arith.constant 0 : index
    %451 = vector.load %arg19[%450, %c0_215, %c0_216] : memref<2x32x16xf32, #tpu.memory_space<vmem>>, vector<1x32x16xf32>
    %452 = vector.shape_cast %451 : vector<1x32x16xf32> to vector<32x16xf32>
    %453 = vector.broadcast %440 : f32 to vector<32x16xf32>
    %454 = arith.mulf %453, %452 : vector<32x16xf32>
    %455 = arith.addf %449, %454 : vector<32x16xf32>
    %c1_217 = arith.constant 1 : index
    %456 = arith.index_cast %435 : i32 to index
    %457 = memref.load %arg2[%c1_217, %456] : memref<3x16xi32, #tpu.memory_space<smem>>
    %c1_218 = arith.constant 1 : index
    %458 = arith.index_cast %435 : i32 to index
    %459 = memref.load %arg3[%c1_218, %458] : memref<3x16xf32, #tpu.memory_space<smem>>
    %c1_i32_219 = arith.constant 1 : i32
    %460 = arith.addi %457, %c1_i32_219 : i32
    %c3_i32_220 = arith.constant 3 : i32
    %461 = arith.minsi %460, %c3_i32_220 : i32
    %cst_221 = arith.constant 1.000000e+00 : f32
    %462 = arith.subf %cst_221, %459 : f32
    %463 = arith.index_cast %457 : i32 to index
    %c0_222 = arith.constant 0 : index
    %c0_223 = arith.constant 0 : index
    %464 = vector.load %arg20[%463, %c0_222, %c0_223] : memref<4x32x16xf32, #tpu.memory_space<vmem>>, vector<1x32x16xf32>
    %465 = vector.shape_cast %464 : vector<1x32x16xf32> to vector<32x16xf32>
    %466 = vector.broadcast %462 : f32 to vector<32x16xf32>
    %467 = arith.mulf %466, %465 : vector<32x16xf32>
    %468 = arith.addf %455, %467 : vector<32x16xf32>
    %469 = arith.index_cast %461 : i32 to index
    %c0_224 = arith.constant 0 : index
    %c0_225 = arith.constant 0 : index
    %470 = vector.load %arg20[%469, %c0_224, %c0_225] : memref<4x32x16xf32, #tpu.memory_space<vmem>>, vector<1x32x16xf32>
    %471 = vector.shape_cast %470 : vector<1x32x16xf32> to vector<32x16xf32>
    %472 = vector.broadcast %459 : f32 to vector<32x16xf32>
    %473 = arith.mulf %472, %471 : vector<32x16xf32>
    %474 = arith.addf %468, %473 : vector<32x16xf32>
    %c2_226 = arith.constant 2 : index
    %475 = arith.index_cast %435 : i32 to index
    %476 = memref.load %arg2[%c2_226, %475] : memref<3x16xi32, #tpu.memory_space<smem>>
    %c2_227 = arith.constant 2 : index
    %477 = arith.index_cast %435 : i32 to index
    %478 = memref.load %arg3[%c2_227, %477] : memref<3x16xf32, #tpu.memory_space<smem>>
    %c1_i32_228 = arith.constant 1 : i32
    %479 = arith.addi %476, %c1_i32_228 : i32
    %c7_i32_229 = arith.constant 7 : i32
    %480 = arith.minsi %479, %c7_i32_229 : i32
    %cst_230 = arith.constant 1.000000e+00 : f32
    %481 = arith.subf %cst_230, %478 : f32
    %482 = arith.index_cast %476 : i32 to index
    %c0_231 = arith.constant 0 : index
    %c0_232 = arith.constant 0 : index
    %483 = vector.load %arg21[%482, %c0_231, %c0_232] : memref<8x32x16xf32, #tpu.memory_space<vmem>>, vector<1x32x16xf32>
    %484 = vector.shape_cast %483 : vector<1x32x16xf32> to vector<32x16xf32>
    %485 = vector.broadcast %481 : f32 to vector<32x16xf32>
    %486 = arith.mulf %485, %484 : vector<32x16xf32>
    %487 = arith.addf %474, %486 : vector<32x16xf32>
    %488 = arith.index_cast %480 : i32 to index
    %c0_233 = arith.constant 0 : index
    %c0_234 = arith.constant 0 : index
    %489 = vector.load %arg21[%488, %c0_233, %c0_234] : memref<8x32x16xf32, #tpu.memory_space<vmem>>, vector<1x32x16xf32>
    %490 = vector.shape_cast %489 : vector<1x32x16xf32> to vector<32x16xf32>
    %491 = vector.broadcast %478 : f32 to vector<32x16xf32>
    %492 = arith.mulf %491, %490 : vector<32x16xf32>
    %493 = arith.addf %487, %492 : vector<32x16xf32>
    %c0_235 = arith.constant 0 : index
    %c112 = arith.constant 112 : index
    %494 = vector.load %arg22[%c0_235, %c112] : memref<32x128xf32, #tpu.memory_space<vmem>>, vector<32x16xf32>
    tpu.vector_store %arg22[%c0_235, %c112], %493 {strides = array<i32>} : memref<32x128xf32, #tpu.memory_space<vmem>>, vector<32x16xf32>,
    %c0_236 = arith.constant 0 : index
    %c0_237 = arith.constant 0 : index
    %495 = vector.load %arg22[%c0_236, %c0_237] : memref<32x128xf32, #tpu.memory_space<vmem>>, vector<32x128xf32>
    %c0_238 = arith.constant 0 : index
    %c0_239 = arith.constant 0 : index
    %496 = vector.load %arg15[%c0_238, %c0_239] : memref<32x1xf32, #tpu.memory_space<vmem>>, vector<32x1xf32>
    %497 = vector.broadcast %496 : vector<32x1xf32> to vector<32x128xf32>
    %498 = arith.addf %495, %497 : vector<32x128xf32>
    %cst_240 = arith.constant 0.000000e+00 : f32
    %499 = vector.broadcast %cst_240 : f32 to vector<32x128xf32>
    %500 = arith.maximumf %498, %499 : vector<32x128xf32>
    %c0_241 = arith.constant 0 : index
    %c0_242 = arith.constant 0 : index
    %501 = vector.load %arg16[%c0_241, %c0_242] : memref<1x32xf32, #tpu.memory_space<vmem>>, vector<1x32xf32>
    %cst_243 = arith.constant dense<0.000000e+00> : vector<1x128xf32>
    %502 = tpu.matmul %501, %500, %cst_243 {dimension_numbers = #tpu.dot_dimension_numbers<[1], [0], [0], [1], [0, 0, 1, 1], [], []>} : vector<1x32xf32>, vector<32x128xf32>, vector<1x128xf32> -> vector<1x128xf32>
    %c0_244 = arith.constant 0 : index
    %c0_245 = arith.constant 0 : index
    %503 = vector.load %arg17[%c0_244, %c0_245] : memref<1x1xf32, #tpu.memory_space<vmem>>, vector<1x1xf32>
    %504 = vector.broadcast %503 : vector<1x1xf32> to vector<1x128xf32>
    %505 = arith.addf %502, %504 : vector<1x128xf32>
    %c0_246 = arith.constant 0 : index
    %c0_247 = arith.constant 0 : index
    %c0_248 = arith.constant 0 : index
    %506 = vector.load %arg18[%c0_246, %c0_247, %c0_248] : memref<1x1x128xf32, #tpu.memory_space<vmem>>, vector<1x1x128xf32>
    %507 = vector.shape_cast %506 : vector<1x1x128xf32> to vector<1x128xf32>
    %508 = vector.shape_cast %505 : vector<1x128xf32> to vector<1x1x128xf32>
    tpu.vector_store %arg18[%c0_246, %c0_247, %c0_248], %508 {strides = array<i32>} : memref<1x1x128xf32, #tpu.memory_space<vmem>>, vector<1x1x128xf32>,
    return
  }
  func.func @transform_0(%arg0: i32, %arg1: i32, %arg2: memref<3x16xi32, #tpu.memory_space<smem>>, %arg3: memref<3x16xf32, #tpu.memory_space<smem>>) -> (i32, i32, i32) {
    %c0_i32 = arith.constant 0 : i32
    %c0_i32_0 = arith.constant 0 : i32
    return %arg0, %c0_i32, %arg1 : i32, i32, i32
  }
  func.func @transform_1(%arg0: i32, %arg1: i32, %arg2: memref<3x16xi32, #tpu.memory_space<smem>>, %arg3: memref<3x16xf32, #tpu.memory_space<smem>>) -> (i32, i32, i32) {
    %c0_i32 = arith.constant 0 : i32
    %c0_i32_0 = arith.constant 0 : i32
    %c0_i32_1 = arith.constant 0 : i32
    return %arg0, %c0_i32, %c0_i32_0 : i32, i32, i32
  }
  func.func @transform_2(%arg0: i32, %arg1: i32, %arg2: memref<3x16xi32, #tpu.memory_space<smem>>, %arg3: memref<3x16xf32, #tpu.memory_space<smem>>) -> (i32, i32, i32) {
    %c0_i32 = arith.constant 0 : i32
    %c0_i32_0 = arith.constant 0 : i32
    %c0_i32_1 = arith.constant 0 : i32
    return %arg0, %c0_i32, %c0_i32_0 : i32, i32, i32
  }
  func.func @transform_3(%arg0: i32, %arg1: i32, %arg2: memref<3x16xi32, #tpu.memory_space<smem>>, %arg3: memref<3x16xf32, #tpu.memory_space<smem>>) -> (i32, i32, i32) {
    %c0_i32 = arith.constant 0 : i32
    %c0_i32_0 = arith.constant 0 : i32
    %c0_i32_1 = arith.constant 0 : i32
    return %arg0, %c0_i32, %c0_i32_0 : i32, i32, i32
  }
  func.func @transform_4(%arg0: i32, %arg1: i32, %arg2: memref<3x16xi32, #tpu.memory_space<smem>>, %arg3: memref<3x16xf32, #tpu.memory_space<smem>>) -> (i32, i32) {
    %c0_i32 = arith.constant 0 : i32
    %c0_i32_0 = arith.constant 0 : i32
    %c0_i32_1 = arith.constant 0 : i32
    return %c0_i32, %c0_i32_0 : i32, i32
  }
  func.func @transform_5(%arg0: i32, %arg1: i32, %arg2: memref<3x16xi32, #tpu.memory_space<smem>>, %arg3: memref<3x16xf32, #tpu.memory_space<smem>>) -> (i32, i32) {
    %c0_i32 = arith.constant 0 : i32
    %c0_i32_0 = arith.constant 0 : i32
    %c0_i32_1 = arith.constant 0 : i32
    return %c0_i32, %c0_i32_0 : i32, i32
  }
  func.func @transform_6(%arg0: i32, %arg1: i32, %arg2: memref<3x16xi32, #tpu.memory_space<smem>>, %arg3: memref<3x16xf32, #tpu.memory_space<smem>>) -> (i32, i32) {
    %c0_i32 = arith.constant 0 : i32
    %c0_i32_0 = arith.constant 0 : i32
    %c0_i32_1 = arith.constant 0 : i32
    return %c0_i32, %c0_i32_0 : i32, i32
  }
  func.func @transform_7(%arg0: i32, %arg1: i32, %arg2: memref<3x16xi32, #tpu.memory_space<smem>>, %arg3: memref<3x16xf32, #tpu.memory_space<smem>>) -> (i32, i32) {
    %c0_i32 = arith.constant 0 : i32
    %c0_i32_0 = arith.constant 0 : i32
    %c0_i32_1 = arith.constant 0 : i32
    return %c0_i32, %c0_i32_0 : i32, i32
  }
  func.func @transform_8(%arg0: i32, %arg1: i32, %arg2: memref<3x16xi32, #tpu.memory_space<smem>>, %arg3: memref<3x16xf32, #tpu.memory_space<smem>>) -> (i32, i32) {
    %c0_i32 = arith.constant 0 : i32
    %c0_i32_0 = arith.constant 0 : i32
    %c0_i32_1 = arith.constant 0 : i32
    return %c0_i32, %c0_i32_0 : i32, i32
  }
  func.func @transform_9(%arg0: i32, %arg1: i32, %arg2: memref<3x16xi32, #tpu.memory_space<smem>>, %arg3: memref<3x16xf32, #tpu.memory_space<smem>>) -> (i32, i32) {
    %c0_i32 = arith.constant 0 : i32
    %c0_i32_0 = arith.constant 0 : i32
    %c0_i32_1 = arith.constant 0 : i32
    return %c0_i32, %c0_i32_0 : i32, i32
  }
  func.func @transform_10(%arg0: i32, %arg1: i32, %arg2: memref<3x16xi32, #tpu.memory_space<smem>>, %arg3: memref<3x16xf32, #tpu.memory_space<smem>>) -> (i32, i32) {
    %c0_i32 = arith.constant 0 : i32
    %c0_i32_0 = arith.constant 0 : i32
    %c0_i32_1 = arith.constant 0 : i32
    return %c0_i32, %c0_i32_0 : i32, i32
  }
  func.func @transform_11(%arg0: i32, %arg1: i32, %arg2: memref<3x16xi32, #tpu.memory_space<smem>>, %arg3: memref<3x16xf32, #tpu.memory_space<smem>>) -> (i32, i32) {
    %c0_i32 = arith.constant 0 : i32
    %c0_i32_0 = arith.constant 0 : i32
    %c0_i32_1 = arith.constant 0 : i32
    return %c0_i32, %c0_i32_0 : i32, i32
  }
  func.func @transform_12(%arg0: i32, %arg1: i32, %arg2: memref<3x16xi32, #tpu.memory_space<smem>>, %arg3: memref<3x16xf32, #tpu.memory_space<smem>>) -> (i32, i32) {
    %c0_i32 = arith.constant 0 : i32
    %c0_i32_0 = arith.constant 0 : i32
    %c0_i32_1 = arith.constant 0 : i32
    return %c0_i32, %c0_i32_0 : i32, i32
  }
  func.func @transform_13(%arg0: i32, %arg1: i32, %arg2: memref<3x16xi32, #tpu.memory_space<smem>>, %arg3: memref<3x16xf32, #tpu.memory_space<smem>>) -> (i32, i32) {
    %c0_i32 = arith.constant 0 : i32
    %c0_i32_0 = arith.constant 0 : i32
    %c0_i32_1 = arith.constant 0 : i32
    return %c0_i32, %c0_i32_0 : i32, i32
  }
  func.func @transform_14(%arg0: i32, %arg1: i32, %arg2: memref<3x16xi32, #tpu.memory_space<smem>>, %arg3: memref<3x16xf32, #tpu.memory_space<smem>>) -> (i32, i32, i32) {
    %c0_i32 = arith.constant 0 : i32
    %c0_i32_0 = arith.constant 0 : i32
    return %arg0, %c0_i32, %arg1 : i32, i32, i32
  }
}

</mosaic_0001>

<llo_original>
// kernel: tpu_custom_call.1
$region0: #{tpu_custom_call.1}
  #allocation0 [shape = 'u32[]', space=smem, size = 0x4, offset = 0x4, fixed_abs, tag = 'smem constant byte address 0x4 - core index']
  #allocation1 [shape = 'u32[144,128]{1,0:T(1,128)}', space=vmem, size = 0x12000, scoped, tag = 'internal scratch']
  #allocation2 [shape = 'f32[2,32,16]{2,1,0:T(8,128)}', space=vmem, size = 0x8000, scoped, tag = 'scratch operand']
  #allocation3 [shape = 'f32[4,32,16]{2,1,0:T(8,128)}', space=vmem, size = 0x10000, scoped, tag = 'scratch operand']
  #allocation4 [shape = 'f32[8,32,16]{2,1,0:T(8,128)}', space=vmem, size = 0x20000, scoped, tag = 'scratch operand']
  #allocation5 [shape = 'f32[32,128]{1,0:T(8,128)}', space=vmem, size = 0x4000, scoped, tag = 'scratch operand']
  #allocation6 [shape = 's32[1]{0}', space=sflag, size = 0x4, scoped, tag = 'scoped memory for tpu_custom_call.1']
  #allocation7 [shape = 'u8[2048]{0}', space=smem, size = 0x800, scoped, tag = 'prefetched SMEM operand 0']
  #allocation8 [shape = 'u8[2048]{0}', space=smem, size = 0x800, scoped, tag = 'prefetched SMEM operand 1']
  #allocation9 [shape = 'f32[1,1]{1,0:T(1,128)S(1)}', space=vmem, size = 0x200, scoped, tag = 'scoped memory for tpu_custom_call.1']
  %s0 = inlined_call_operand.vmem [shape: s32[3,16], index: 0, kind: input, shape index: {}]
  %s1 = inlined_call_operand.vmem [shape: f32[3,16], index: 1, kind: input, shape index: {}]
  %s2 = inlined_call_operand.vmem [shape: f32[2,4,256], index: 2, kind: input, shape index: {}]
  %s3 = inlined_call_operand.vmem [shape: f32[2,32,4], index: 3, kind: input, shape index: {}]
  %s4 = inlined_call_operand.vmem [shape: f32[2,16,16], index: 4, kind: input, shape index: {}]
  %s5 = inlined_call_operand.vmem [shape: f32[2,8,64], index: 5, kind: input, shape index: {}]
  %s6 = inlined_call_operand.vmem [shape: f32[2,16], index: 6, kind: input, shape index: {}]
  %s7 = inlined_call_operand.vmem [shape: f32[4,16], index: 7, kind: input, shape index: {}]
  %s8 = inlined_call_operand.vmem [shape: f32[8,16], index: 8, kind: input, shape index: {}]
  %s9 = inlined_call_operand.vmem [shape: f32[32,4], index: 9, kind: input, shape index: {}]
  %s10 = inlined_call_operand.vmem [shape: f32[32,32], index: 10, kind: input, shape index: {}]
  %s11 = inlined_call_operand.vmem [shape: f32[32,16], index: 11, kind: input, shape index: {}]
  %s12 = inlined_call_operand.vmem [shape: f32[32,8], index: 12, kind: input, shape index: {}]
  %s13 = inlined_call_operand.vmem [shape: f32[32,1], index: 13, kind: input, shape index: {}]
  %s14 = inlined_call_operand.vmem [shape: f32[1,32], index: 14, kind: input, shape index: {}]
  %s15 = inlined_call_operand.<no memory space> [shape: f32[1,1], index: 15, kind: input, shape index: {}]
  %s16 = inlined_call_operand.hbm [shape: f32[2,1,256], index: 16, kind: output, shape index: {}]
  %s17 = sld [smem:[#allocation0]]
  $region93: #{tpu_custom_call.1} parent=0
    _
  %s19 = ssub.s32 1, %s17
  %s20 = scalar_select 0, %s19, %s17
  %s21 = sshll.u32 %s0, 4
  %s22 = int_to_ptr.vmem [resolvable:$true] %s21
  %24 = dma.vmem_to_smem %s22, 64, [#allocation7], [#allocation6]
  %s25 = sshll.u32 %s1, 4
  %s26 = int_to_ptr.vmem [resolvable:$true] %s25
  %28 = dma.vmem_to_smem %s26, 64, [#allocation8], [#allocation6]
  %v29 = vstv %s15
  %30 = vst [vmem:[#allocation9] sm:$0x1] %v29
  %31 = dma.done [#allocation6], 128
  %32 = sfence
  $region1: #{tpu_custom_call.1} parent=0
    #allocation10 [shape = 'u8[1024]{0}', space=vmem, size = 0x400, scoped, tag = 'output window, operand 0']
    #allocation11 [shape = 's32[2]{0}', space=sflag, size = 0x8, scoped, tag = 'scoped memory for tpu_custom_call.1']
    %33 = vsyncpa [#allocation11], 0
    %s34 = scalar_lea.sflag [#allocation11], 1
    %35 = vsyncpa %s34, 0
    loop: start=0, step=1, limit=6
    $region2: #{tpu_custom_call.1} parent=1 // loop_pre_header
      _
    $region3: #{tpu_custom_call.1} parent=1 // loop_header
      %s37 = sphi 0, %s41
      %p38 = scmp.ge.s32.totalorder %s37, 6
      %s44 = sphi 0, %s56
      %s45 = sphi 0, %s52
      %s46 = sphi 0, %s44
      %s47 = sphi 0, %s45
      %s48 = sphi 0, %s46
      %s49 = sphi 0, %s47
      %s61 = sphi 0, %s63
      %s64 = sphi 0, %s61
      %s65 = sphi 0, %s64
      %s81 = sphi 0, %s65
      %s87 = sphi 0, %s89
      %s90 = sphi 0, %s87
      %s91 = sphi 0, %s90
      %s107 = sphi 0, %s91
      %s113 = sphi 0, %s115
      %s116 = sphi 0, %s113
      %s117 = sphi 0, %s116
      %s133 = sphi 0, %s117
      %s139 = sphi 0, %s141
      %s142 = sphi 0, %s139
      %s143 = sphi 0, %s142
      %s159 = sphi 0, %s143
      %s163 = sphi 0, %s163
      %s165 = sphi 0, %s163
      %s166 = sphi 0, %s165
      %s180 = sphi 0, %s166
      %s184 = sphi 0, %s184
      %s186 = sphi 0, %s184
      %s187 = sphi 0, %s186
      %s201 = sphi 0, %s187
      %s205 = sphi 0, %s205
      %s207 = sphi 0, %s205
      %s208 = sphi 0, %s207
      %s222 = sphi 0, %s208
      %s226 = sphi 0, %s226
      %s228 = sphi 0, %s226
      %s229 = sphi 0, %s228
      %s243 = sphi 0, %s229
      %s247 = sphi 0, %s247
      %s249 = sphi 0, %s247
      %s250 = sphi 0, %s249
      %s264 = sphi 0, %s250
      %s268 = sphi 0, %s268
      %s270 = sphi 0, %s268
      %s271 = sphi 0, %s270
      %s285 = sphi 0, %s271
      %s289 = sphi 0, %s289
      %s291 = sphi 0, %s289
      %s292 = sphi 0, %s291
      %s306 = sphi 0, %s292
      %s310 = sphi 0, %s310
      %s312 = sphi 0, %s310
      %s313 = sphi 0, %s312
      %s327 = sphi 0, %s313
      %s331 = sphi 0, %s331
      %s333 = sphi 0, %s331
      %s334 = sphi 0, %s333
      %s348 = sphi 0, %s334
      %s352 = sphi 0, %s352
      %s354 = sphi 0, %s352
      %s355 = sphi 0, %s354
      %s369 = sphi 0, %s355
      %s377 = sphi 0, %s379
      %s380 = sphi 0, %s377
      %s381 = sphi 0, %s380
      %s397 = sphi 0, %s381
    $region4: #{tpu_custom_call.1} parent=1 // loop_header_branch
      %40 = sbr.rel (%p38) target = $region8
    $region5: #{tpu_custom_call.1} parent=1 // loop_body
      %s42 = ssub.s32 %s37, 1
      %s43 = ssub.s32 %s37, 2
      %s50 = sadd.s32 1, %s45
      %p51 = scmp.ge.s32.totalorder %s50, 2
      %s52 = scalar_select %p51, 0, %s50
      %s53 = sadd.s32 1, %s44
      %s54 = scalar_select %p51, %s53, %s44
      %p55 = scmp.ge.s32.totalorder %s54, 2
      %s56 = scalar_select %p55, 0, %s54
      %s57 = ssub.s32 %s44, %s56
      %s58 = ssub.s32 %s45, %s52
      %s59 = sor.u32 %s57, %s58
      %p60 = scmp.eq.s32.totalorder %s59, 0
      %s62 = sadd.s32 %s61, 1
      %s63 = scalar_select %p60, %s61, %s62
      %p66 = pneg %p60
      %p67 = scmp.eq.s32.totalorder %s37, 3
      %p68 = por %p66, %p67
      %p69 = scmp.ne.s32.totalorder %s61, %s64
      %p70 = scmp.eq.s32.totalorder %s37, 0
      %p71 = por %p69, %p70
      %p72 = scmp.ne.s32.totalorder %s61, %s64
      %p73 = scmp.eq.s32.totalorder %s42, 3
      %p74 = por %p72, %p73
      %p75 = scmp.ne.s32.totalorder %s64, %s65
      %p76 = scmp.eq.s32.totalorder %s42, 0
      %p77 = por %p75, %p76
      %p78 = scmp.ne.s32.totalorder %s64, %s65
      %p79 = scmp.eq.s32.totalorder %s43, 3
      %p80 = por %p78, %p79
      %p82 = scmp.ne.s32.totalorder %s65, %s81
      %p83 = scmp.eq.s32.totalorder %s43, 0
      %p84 = por %p82, %p83
      %s85 = ssub.s32 %s44, %s56
      %p86 = scmp.eq.s32.totalorder %s85, 0
      %s88 = sadd.s32 %s87, 1
      %s89 = scalar_select %p86, %s87, %s88
      %p92 = pneg %p86
      %p93 = scmp.eq.s32.totalorder %s37, 3
      %p94 = por %p92, %p93
      %p95 = scmp.ne.s32.totalorder %s87, %s90
      %p96 = scmp.eq.s32.totalorder %s37, 0
      %p97 = por %p95, %p96
      %p98 = scmp.ne.s32.totalorder %s87, %s90
      %p99 = scmp.eq.s32.totalorder %s42, 3
      %p100 = por %p98, %p99
      %p101 = scmp.ne.s32.totalorder %s90, %s91
      %p102 = scmp.eq.s32.totalorder %s42, 0
      %p103 = por %p101, %p102
      %p104 = scmp.ne.s32.totalorder %s90, %s91
      %p105 = scmp.eq.s32.totalorder %s43, 3
      %p106 = por %p104, %p105
      %p108 = scmp.ne.s32.totalorder %s91, %s107
      %p109 = scmp.eq.s32.totalorder %s43, 0
      %p110 = por %p108, %p109
      %s111 = ssub.s32 %s44, %s56
      %p112 = scmp.eq.s32.totalorder %s111, 0
      %s114 = sadd.s32 %s113, 1
      %s115 = scalar_select %p112, %s113, %s114
      %p118 = pneg %p112
      %p119 = scmp.eq.s32.totalorder %s37, 3
      %p120 = por %p118, %p119
      %p121 = scmp.ne.s32.totalorder %s113, %s116
      %p122 = scmp.eq.s32.totalorder %s37, 0
      %p123 = por %p121, %p122
      %p124 = scmp.ne.s32.totalorder %s113, %s116
      %p125 = scmp.eq.s32.totalorder %s42, 3
      %p126 = por %p124, %p125
      %p127 = scmp.ne.s32.totalorder %s116, %s117
      %p128 = scmp.eq.s32.totalorder %s42, 0
      %p129 = por %p127, %p128
      %p130 = scmp.ne.s32.totalorder %s116, %s117
      %p131 = scmp.eq.s32.totalorder %s43, 3
      %p132 = por %p130, %p131
      %p134 = scmp.ne.s32.totalorder %s117, %s133
      %p135 = scmp.eq.s32.totalorder %s43, 0
      %p136 = por %p134, %p135
      %s137 = ssub.s32 %s44, %s56
      %p138 = scmp.eq.s32.totalorder %s137, 0
      %s140 = sadd.s32 %s139, 1
      %s141 = scalar_select %p138, %s139, %s140
      %p144 = pneg %p138
      %p145 = scmp.eq.s32.totalorder %s37, 3
      %p146 = por %p144, %p145
      %p147 = scmp.ne.s32.totalorder %s139, %s142
      %p148 = scmp.eq.s32.totalorder %s37, 0
      %p149 = por %p147, %p148
      %p150 = scmp.ne.s32.totalorder %s139, %s142
      %p151 = scmp.eq.s32.totalorder %s42, 3
      %p152 = por %p150, %p151
      %p153 = scmp.ne.s32.totalorder %s142, %s143
      %p154 = scmp.eq.s32.totalorder %s42, 0
      %p155 = por %p153, %p154
      %p156 = scmp.ne.s32.totalorder %s142, %s143
      %p157 = scmp.eq.s32.totalorder %s43, 3
      %p158 = por %p156, %p157
      %p160 = scmp.ne.s32.totalorder %s143, %s159
      %p161 = scmp.eq.s32.totalorder %s43, 0
      %p162 = por %p160, %p161
      %s164 = sadd.s32 %s163, 1
      %p167 = scmp.eq.s32.totalorder %s37, 3
      %p168 = scmp.ne.s32.totalorder %s163, %s165
      %p169 = scmp.eq.s32.totalorder %s37, 0
      %p170 = por %p168, %p169
      %p171 = scmp.ne.s32.totalorder %s163, %s165
      %p172 = scmp.eq.s32.totalorder %s42, 3
      %p173 = por %p171, %p172
      %p174 = scmp.ne.s32.totalorder %s165, %s166
      %p175 = scmp.eq.s32.totalorder %s42, 0
      %p176 = por %p174, %p175
      %p177 = scmp.ne.s32.totalorder %s165, %s166
      %p178 = scmp.eq.s32.totalorder %s43, 3
      %p179 = por %p177, %p178
      %p181 = scmp.ne.s32.totalorder %s166, %s180
      %p182 = scmp.eq.s32.totalorder %s43, 0
      %p183 = por %p181, %p182
      %s185 = sadd.s32 %s184, 1
      %p188 = scmp.eq.s32.totalorder %s37, 3
      %p189 = scmp.ne.s32.totalorder %s184, %s186
      %p190 = scmp.eq.s32.totalorder %s37, 0
      %p191 = por %p189, %p190
      %p192 = scmp.ne.s32.totalorder %s184, %s186
      %p193 = scmp.eq.s32.totalorder %s42, 3
      %p194 = por %p192, %p193
      %p195 = scmp.ne.s32.totalorder %s186, %s187
      %p196 = scmp.eq.s32.totalorder %s42, 0
      %p197 = por %p195, %p196
      %p198 = scmp.ne.s32.totalorder %s186, %s187
      %p199 = scmp.eq.s32.totalorder %s43, 3
      %p200 = por %p198, %p199
      %p202 = scmp.ne.s32.totalorder %s187, %s201
      %p203 = scmp.eq.s32.totalorder %s43, 0
      %p204 = por %p202, %p203
      %s206 = sadd.s32 %s205, 1
      %p209 = scmp.eq.s32.totalorder %s37, 3
      %p210 = scmp.ne.s32.totalorder %s205, %s207
      %p211 = scmp.eq.s32.totalorder %s37, 0
      %p212 = por %p210, %p211
      %p213 = scmp.ne.s32.totalorder %s205, %s207
      %p214 = scmp.eq.s32.totalorder %s42, 3
      %p215 = por %p213, %p214
      %p216 = scmp.ne.s32.totalorder %s207, %s208
      %p217 = scmp.eq.s32.totalorder %s42, 0
      %p218 = por %p216, %p217
      %p219 = scmp.ne.s32.totalorder %s207, %s208
      %p220 = scmp.eq.s32.totalorder %s43, 3
      %p221 = por %p219, %p220
      %p223 = scmp.ne.s32.totalorder %s208, %s222
      %p224 = scmp.eq.s32.totalorder %s43, 0
      %p225 = por %p223, %p224
      %s227 = sadd.s32 %s226, 1
      %p230 = scmp.eq.s32.totalorder %s37, 3
      %p231 = scmp.ne.s32.totalorder %s226, %s228
      %p232 = scmp.eq.s32.totalorder %s37, 0
      %p233 = por %p231, %p232
      %p234 = scmp.ne.s32.totalorder %s226, %s228
      %p235 = scmp.eq.s32.totalorder %s42, 3
      %p236 = por %p234, %p235
      %p237 = scmp.ne.s32.totalorder %s228, %s229
      %p238 = scmp.eq.s32.totalorder %s42, 0
      %p239 = por %p237, %p238
      %p240 = scmp.ne.s32.totalorder %s228, %s229
      %p241 = scmp.eq.s32.totalorder %s43, 3
      %p242 = por %p240, %p241
      %p244 = scmp.ne.s32.totalorder %s229, %s243
      %p245 = scmp.eq.s32.totalorder %s43, 0
      %p246 = por %p244, %p245
      %s248 = sadd.s32 %s247, 1
      %p251 = scmp.eq.s32.totalorder %s37, 3
      %p252 = scmp.ne.s32.totalorder %s247, %s249
      %p253 = scmp.eq.s32.totalorder %s37, 0
      %p254 = por %p252, %p253
      %p255 = scmp.ne.s32.totalorder %s247, %s249
      %p256 = scmp.eq.s32.totalorder %s42, 3
      %p257 = por %p255, %p256
      %p258 = scmp.ne.s32.totalorder %s249, %s250
      %p259 = scmp.eq.s32.totalorder %s42, 0
      %p260 = por %p258, %p259
      %p261 = scmp.ne.s32.totalorder %s249, %s250
      %p262 = scmp.eq.s32.totalorder %s43, 3
      %p263 = por %p261, %p262
      %p265 = scmp.ne.s32.totalorder %s250, %s264
      %p266 = scmp.eq.s32.totalorder %s43, 0
      %p267 = por %p265, %p266
      %s269 = sadd.s32 %s268, 1
      %p272 = scmp.eq.s32.totalorder %s37, 3
      %p273 = scmp.ne.s32.totalorder %s268, %s270
      %p274 = scmp.eq.s32.totalorder %s37, 0
      %p275 = por %p273, %p274
      %p276 = scmp.ne.s32.totalorder %s268, %s270
      %p277 = scmp.eq.s32.totalorder %s42, 3
      %p278 = por %p276, %p277
      %p279 = scmp.ne.s32.totalorder %s270, %s271
      %p280 = scmp.eq.s32.totalorder %s42, 0
      %p281 = por %p279, %p280
      %p282 = scmp.ne.s32.totalorder %s270, %s271
      %p283 = scmp.eq.s32.totalorder %s43, 3
      %p284 = por %p282, %p283
      %p286 = scmp.ne.s32.totalorder %s271, %s285
      %p287 = scmp.eq.s32.totalorder %s43, 0
      %p288 = por %p286, %p287
      %s290 = sadd.s32 %s289, 1
      %p293 = scmp.eq.s32.totalorder %s37, 3
      %p294 = scmp.ne.s32.totalorder %s289, %s291
      %p295 = scmp.eq.s32.totalorder %s37, 0
      %p296 = por %p294, %p295
      %p297 = scmp.ne.s32.totalorder %s289, %s291
      %p298 = scmp.eq.s32.totalorder %s42, 3
      %p299 = por %p297, %p298
      %p300 = scmp.ne.s32.totalorder %s291, %s292
      %p301 = scmp.eq.s32.totalorder %s42, 0
      %p302 = por %p300, %p301
      %p303 = scmp.ne.s32.totalorder %s291, %s292
      %p304 = scmp.eq.s32.totalorder %s43, 3
      %p305 = por %p303, %p304
      %p307 = scmp.ne.s32.totalorder %s292, %s306
      %p308 = scmp.eq.s32.totalorder %s43, 0
      %p309 = por %p307, %p308
      %s311 = sadd.s32 %s310, 1
      %p314 = scmp.eq.s32.totalorder %s37, 3
      %p315 = scmp.ne.s32.totalorder %s310, %s312
      %p316 = scmp.eq.s32.totalorder %s37, 0
      %p317 = por %p315, %p316
      %p318 = scmp.ne.s32.totalorder %s310, %s312
      %p319 = scmp.eq.s32.totalorder %s42, 3
      %p320 = por %p318, %p319
      %p321 = scmp.ne.s32.totalorder %s312, %s313
      %p322 = scmp.eq.s32.totalorder %s42, 0
      %p323 = por %p321, %p322
      %p324 = scmp.ne.s32.totalorder %s312, %s313
      %p325 = scmp.eq.s32.totalorder %s43, 3
      %p326 = por %p324, %p325
      %p328 = scmp.ne.s32.totalorder %s313, %s327
      %p329 = scmp.eq.s32.totalorder %s43, 0
      %p330 = por %p328, %p329
      %s332 = sadd.s32 %s331, 1
      %p335 = scmp.eq.s32.totalorder %s37, 3
      %p336 = scmp.ne.s32.totalorder %s331, %s333
      %p337 = scmp.eq.s32.totalorder %s37, 0
      %p338 = por %p336, %p337
      %p339 = scmp.ne.s32.totalorder %s331, %s333
      %p340 = scmp.eq.s32.totalorder %s42, 3
      %p341 = por %p339, %p340
      %p342 = scmp.ne.s32.totalorder %s333, %s334
      %p343 = scmp.eq.s32.totalorder %s42, 0
      %p344 = por %p342, %p343
      %p345 = scmp.ne.s32.totalorder %s333, %s334
      %p346 = scmp.eq.s32.totalorder %s43, 3
      %p347 = por %p345, %p346
      %p349 = scmp.ne.s32.totalorder %s334, %s348
      %p350 = scmp.eq.s32.totalorder %s43, 0
      %p351 = por %p349, %p350
      %s353 = sadd.s32 %s352, 1
      %p356 = scmp.eq.s32.totalorder %s37, 3
      %p357 = scmp.ne.s32.totalorder %s352, %s354
      %p358 = scmp.eq.s32.totalorder %s37, 0
      %p359 = por %p357, %p358
      %p360 = scmp.ne.s32.totalorder %s352, %s354
      %p361 = scmp.eq.s32.totalorder %s42, 3
      %p362 = por %p360, %p361
      %p363 = scmp.ne.s32.totalorder %s354, %s355
      %p364 = scmp.eq.s32.totalorder %s42, 0
      %p365 = por %p363, %p364
      %p366 = scmp.ne.s32.totalorder %s354, %s355
      %p367 = scmp.eq.s32.totalorder %s43, 3
      %p368 = por %p366, %p367
      %p370 = scmp.ne.s32.totalorder %s355, %s369
      %p371 = scmp.eq.s32.totalorder %s43, 0
      %p372 = por %p370, %p371
      %s373 = ssub.s32 %s44, %s56
      %s374 = ssub.s32 %s45, %s52
      %s375 = sor.u32 %s373, %s374
      %p376 = scmp.eq.s32.totalorder %s375, 0
      %s378 = sadd.s32 %s377, 1
      %s379 = scalar_select %p376, %s377, %s378
      %p382 = pneg %p376
      %p383 = scmp.eq.s32.totalorder %s37, 3
      %p384 = por %p382, %p383
      %p385 = scmp.ne.s32.totalorder %s377, %s380
      %p386 = scmp.eq.s32.totalorder %s37, 0
      %p387 = por %p385, %p386
      %p388 = scmp.ne.s32.totalorder %s377, %s380
      %p389 = scmp.eq.s32.totalorder %s42, 3
      %p390 = por %p388, %p389
      %p391 = scmp.ne.s32.totalorder %s380, %s381
      %p392 = scmp.eq.s32.totalorder %s42, 0
      %p393 = por %p391, %p392
      %p394 = scmp.ne.s32.totalorder %s380, %s381
      %p395 = scmp.eq.s32.totalorder %s43, 3
      %p396 = por %p394, %p395
      %p398 = scmp.ne.s32.totalorder %s381, %s397
      %p399 = scmp.eq.s32.totalorder %s43, 0
      %p400 = por %p398, %p399
      %p401 = scmp.le.s32.totalorder 1, %s37
      %p402 = scmp.lt.s32.totalorder %s37, 5
      %p403 = pnand %p401, %p402
      %p404 = pneg %p403
      // Predicated region
      $region9: #{tpu_custom_call.1} parent=5 // pred_check
        _
      $region10: #{tpu_custom_call.1} parent=5 // pred_check_branch
        %406 = sbr.rel (%p403) target = $region12
      $region11: #{tpu_custom_call.1} parent=5 // pred_region
        %s407 = ssub.s32 %s37, 1
        // Predicated region
        $region13: #{tpu_custom_call.1} parent=11 // pred_check
          %p408 = pneg %p176
        $region14: #{tpu_custom_call.1} parent=11 // pred_check_branch
          %410 = sbr.rel (%p408) target = $region16
        $region15: #{tpu_custom_call.1} parent=11 // pred_region
          _
        $region16: #{tpu_custom_call.1} parent=11 // pred_fallthru
          _
        // Predicated region
        $region17: #{tpu_custom_call.1} parent=11 // pred_check
          %p411 = pneg %p197
        $region18: #{tpu_custom_call.1} parent=11 // pred_check_branch
          %413 = sbr.rel (%p411) target = $region20
        $region19: #{tpu_custom_call.1} parent=11 // pred_region
          _
        $region20: #{tpu_custom_call.1} parent=11 // pred_fallthru
          _
        // Predicated region
        $region21: #{tpu_custom_call.1} parent=11 // pred_check
          %p414 = pneg %p218
        $region22: #{tpu_custom_call.1} parent=11 // pred_check_branch
          %416 = sbr.rel (%p414) target = $region24
        $region23: #{tpu_custom_call.1} parent=11 // pred_region
          _
        $region24: #{tpu_custom_call.1} parent=11 // pred_fallthru
          _
        // Predicated region
        $region25: #{tpu_custom_call.1} parent=11 // pred_check
          %p417 = pneg %p239
        $region26: #{tpu_custom_call.1} parent=11 // pred_check_branch
          %419 = sbr.rel (%p417) target = $region28
        $region27: #{tpu_custom_call.1} parent=11 // pred_region
          _
        $region28: #{tpu_custom_call.1} parent=11 // pred_fallthru
          _
        // Predicated region
        $region29: #{tpu_custom_call.1} parent=11 // pred_check
          %p420 = pneg %p260
        $region30: #{tpu_custom_call.1} parent=11 // pred_check_branch
          %422 = sbr.rel (%p420) target = $region32
        $region31: #{tpu_custom_call.1} parent=11 // pred_region
          _
        $region32: #{tpu_custom_call.1} parent=11 // pred_fallthru
          _
        // Predicated region
        $region33: #{tpu_custom_call.1} parent=11 // pred_check
          %p423 = pneg %p281
        $region34: #{tpu_custom_call.1} parent=11 // pred_check_branch
          %425 = sbr.rel (%p423) target = $region36
        $region35: #{tpu_custom_call.1} parent=11 // pred_region
          _
        $region36: #{tpu_custom_call.1} parent=11 // pred_fallthru
          _
        // Predicated region
        $region37: #{tpu_custom_call.1} parent=11 // pred_check
          %p426 = pneg %p302
        $region38: #{tpu_custom_call.1} parent=11 // pred_check_branch
          %428 = sbr.rel (%p426) target = $region40
        $region39: #{tpu_custom_call.1} parent=11 // pred_region
          _
        $region40: #{tpu_custom_call.1} parent=11 // pred_fallthru
          _
        // Predicated region
        $region41: #{tpu_custom_call.1} parent=11 // pred_check
          %p429 = pneg %p323
        $region42: #{tpu_custom_call.1} parent=11 // pred_check_branch
          %431 = sbr.rel (%p429) target = $region44
        $region43: #{tpu_custom_call.1} parent=11 // pred_region
          _
        $region44: #{tpu_custom_call.1} parent=11 // pred_fallthru
          _
        // Predicated region
        $region45: #{tpu_custom_call.1} parent=11 // pred_check
          %p432 = pneg %p344
        $region46: #{tpu_custom_call.1} parent=11 // pred_check_branch
          %434 = sbr.rel (%p432) target = $region48
        $region47: #{tpu_custom_call.1} parent=11 // pred_region
          _
        $region48: #{tpu_custom_call.1} parent=11 // pred_fallthru
          _
        // Predicated region
        $region49: #{tpu_custom_call.1} parent=11 // pred_check
          %p435 = pneg %p365
        $region50: #{tpu_custom_call.1} parent=11 // pred_check_branch
          %437 = sbr.rel (%p435) target = $region52
        $region51: #{tpu_custom_call.1} parent=11 // pred_region
          _
        $region52: #{tpu_custom_call.1} parent=11 // pred_fallthru
          _
      $region12: #{tpu_custom_call.1} parent=5 // pred_fallthru
        _
      %p438 = scmp.lt.s32.totalorder %s37, 4
      // Predicated region
      $region53: #{tpu_custom_call.1} parent=5 // pred_check
        %p439 = pneg %p438
      $region54: #{tpu_custom_call.1} parent=5 // pred_check_branch
        %441 = sbr.rel (%p439) target = $region56
      $region55: #{tpu_custom_call.1} parent=5 // pred_region
        // Predicated region
        $region57: #{tpu_custom_call.1} parent=55 // pred_check
          %p442 = pneg %p71
        $region58: #{tpu_custom_call.1} parent=55 // pred_check_branch
          %444 = sbr.rel (%p442) target = $region60
        $region59: #{tpu_custom_call.1} parent=55 // pred_region
          %p445 = scmp.lt.s32.totalorder %s44, 1
          %s446 = scalar_select %p445, %s44, 1
          %p447 = scmp.lt.s32.totalorder %s45, 1
          %s448 = scalar_select %p447, %s45, 1
          %s449 = smul.addr %s446, 2
          %s450 = sadd.s32 %s448, %s449
          %s451 = smul.addr %s450, 4
          %s452 = scalar_lea.vmem %s2, %s451
        $region60: #{tpu_custom_call.1} parent=55 // pred_fallthru
          _
        // Predicated region
        $region61: #{tpu_custom_call.1} parent=55 // pred_check
          %p453 = pneg %p97
        $region62: #{tpu_custom_call.1} parent=55 // pred_check_branch
          %455 = sbr.rel (%p453) target = $region64
        $region63: #{tpu_custom_call.1} parent=55 // pred_region
          %p456 = scmp.lt.s32.totalorder %s44, 1
          %s457 = scalar_select %p456, %s44, 1
          %s458 = smul.addr %s457, 4
          %s459 = smul.addr %s458, 8
          %s460 = scalar_lea.vmem %s3, %s459
        $region64: #{tpu_custom_call.1} parent=55 // pred_fallthru
          _
        // Predicated region
        $region65: #{tpu_custom_call.1} parent=55 // pred_check
          %p461 = pneg %p123
        $region66: #{tpu_custom_call.1} parent=55 // pred_check_branch
          %463 = sbr.rel (%p461) target = $region68
        $region67: #{tpu_custom_call.1} parent=55 // pred_region
          %p464 = scmp.lt.s32.totalorder %s44, 1
          %s465 = scalar_select %p464, %s44, 1
          %s466 = smul.addr %s465, 2
          %s467 = smul.addr %s466, 8
          %s468 = scalar_lea.vmem %s4, %s467
        $region68: #{tpu_custom_call.1} parent=55 // pred_fallthru
          _
        // Predicated region
        $region69: #{tpu_custom_call.1} parent=55 // pred_check
          %p469 = pneg %p149
        $region70: #{tpu_custom_call.1} parent=55 // pred_check_branch
          %471 = sbr.rel (%p469) target = $region72
        $region71: #{tpu_custom_call.1} parent=55 // pred_region
          %p472 = scmp.lt.s32.totalorder %s44, 1
          %s473 = scalar_select %p472, %s44, 1
          %s474 = smul.addr %s473, 8
          %s475 = scalar_lea.vmem %s5, %s474
        $region72: #{tpu_custom_call.1} parent=55 // pred_fallthru
          _
      $region56: #{tpu_custom_call.1} parent=5 // pred_fallthru
        _
      %p476 = scmp.le.s32.totalorder 1, %s37
      %p477 = scmp.lt.s32.totalorder %s37, 5
      %p478 = pnand %p476, %p477
      %p479 = pneg %p478
      // Predicated region
      $region73: #{tpu_custom_call.1} parent=5 // pred_check
        _
      $region74: #{tpu_custom_call.1} parent=5 // pred_check_branch
        %481 = sbr.rel (%p478) target = $region76
      $region75: #{tpu_custom_call.1} parent=5 // pred_region
        %s482 = ssub.s32 %s37, 1
        %p483 = scmp.lt.s32.totalorder %s46, 1
        %s484 = scalar_select %p483, %s46, 1
        %p485 = scmp.lt.s32.totalorder %s47, 1
        %s486 = scalar_select %p485, %s47, 1
        %s487 = smul.addr %s484, 2
        %s488 = sadd.s32 %s486, %s487
        %s489 = smul.addr %s488, 4
        %s490 = scalar_lea.vmem %s2, %s489
        %p491 = pneg %p77
        %p492 = pneg %p74
        %p493 = scmp.lt.s32.totalorder %s46, 1
        %s494 = scalar_select %p493, %s46, 1
        %s495 = smul.addr %s494, 4
        %s496 = smul.addr %s495, 8
        %s497 = scalar_lea.vmem %s3, %s496
        %p498 = pneg %p103
        %p499 = pneg %p100
        %p500 = scmp.lt.s32.totalorder %s46, 1
        %s501 = scalar_select %p500, %s46, 1
        %s502 = smul.addr %s501, 2
        %s503 = smul.addr %s502, 8
        %s504 = scalar_lea.vmem %s4, %s503
        %p505 = pneg %p129
        %p506 = pneg %p126
        %p507 = scmp.lt.s32.totalorder %s46, 1
        %s508 = scalar_select %p507, %s46, 1
        %s509 = smul.addr %s508, 8
        %s510 = scalar_lea.vmem %s5, %s509
        %p511 = pneg %p155
        %p512 = pneg %p152
        %p513 = pneg %p176
        %p514 = pneg %p173
        %p515 = pneg %p197
        %p516 = pneg %p194
        %p517 = pneg %p218
        %p518 = pneg %p215
        %p519 = pneg %p239
        %p520 = pneg %p236
        %p521 = pneg %p260
        %p522 = pneg %p257
        %p523 = pneg %p281
        %p524 = pneg %p278
        %p525 = pneg %p302
        %p526 = pneg %p299
        %p527 = pneg %p323
        %p528 = pneg %p320
        %p529 = pneg %p344
        %p530 = pneg %p341
        %p531 = pneg %p365
        %p532 = pneg %p362
        %p533 = pneg %p393
        %p534 = pneg %p390
        %s535 = sand.u32 %s380, 1
        %s536 = scalar_lea.sflag [#allocation11], %s535
        %s537 = sand.u32 %s380, 1
        %s538 = scalar_lea.vmem [#allocation10], %s537
        %p539 = scmp.lt.s32.totalorder %s46, 1
        %s540 = scalar_select %p539, %s46, 1
        %p541 = scmp.lt.s32.totalorder %s47, 1
        %s542 = scalar_select %p541, %s47, 1
        %s543 = smul.addr %s540, 2
        %s544 = sadd.s32 %s542, %s543
        %s545 = smul.addr %s544, 4
        %s546 = scalar_lea.vmem %s2, %s545
        %p547 = scmp.lt.s32.totalorder %s46, 1
        %s548 = scalar_select %p547, %s46, 1
        %s549 = smul.addr %s548, 4
        %s550 = smul.addr %s549, 8
        %s551 = scalar_lea.vmem %s3, %s550
        %p552 = scmp.lt.s32.totalorder %s46, 1
        %s553 = scalar_select %p552, %s46, 1
        %s554 = smul.addr %s553, 2
        %s555 = smul.addr %s554, 8
        %s556 = scalar_lea.vmem %s4, %s555
        %p557 = scmp.lt.s32.totalorder %s46, 1
        %s558 = scalar_select %p557, %s46, 1
        %s559 = smul.addr %s558, 8
        %s560 = scalar_lea.vmem %s5, %s559
        %p561 = scmp.eq.s32.totalorder %s47, 0
        // Predicated region
        $region77: #{tpu_custom_call.1} parent=75 // pred_check
          %p562 = pneg %p561
        $region78: #{tpu_custom_call.1} parent=75 // pred_check_branch
          %564 = sbr.rel (%p562) target = $region80
        $region79: #{tpu_custom_call.1} parent=75 // pred_region
          %v565 = vld [vmem:[%s10] sm:$0xff]
          %v566 = vld [vmem:[%s10 + $0x8] sm:$0xff]
          %v567 = vld [vmem:[%s10 + $0x10] sm:$0xff]
          %v568 = vld [vmem:[%s10 + $0x18] sm:$0xff]
          %v569 = vld [vmem:[%s551] sm:$0xff]
          %v570 = vld [vmem:[%s551 + $0x8] sm:$0xff]
          %v571 = vld [vmem:[%s551 + $0x10] sm:$0xff]
          %v572 = vld [vmem:[%s551 + $0x18] sm:$0xff]
          %vm573 = vcmask 261120
          %v575 = vsel %vm573, %v565, 0
          %v578 = vsel %vm573, %v566, 0
          %v581 = vsel %vm573, %v567, 0
          %v584 = vsel %vm573, %v568, 0
          %586 = vmatprep.subr.mxu0 0.0
          %587 = vmatpush1.msra.mxu0 0.0
          %588 = vmatprep.subr.mxu0 0.0
          %589 = vmatpush1.msra.mxu0 0.0
          %590 = vmatprep.subr.mxu0 0.0
          %591 = vmatpush1.msra.mxu0 0.0
          %592 = vmatprep.subr.mxu0 0.0
          %593 = vmatpush1.msra.mxu0 0.0
          %594 = vmatprep.subr.mxu0 0.0
          %595 = vmatpush1.msra.mxu0 0.0
          %596 = vmatprep.subr.mxu0 0.0
          %597 = vmatpush1.msra.mxu0 0.0
          %598 = vmatprep.subr.mxu0 0.0
          %599 = vmatpush1.msra.mxu0 0.0
          %600 = vmatprep.subr.mxu0 0.0
          %601 = vmatpush1.msra.mxu0 0.0
          %602 = vmatprep.subr.mxu0 0.0
          %603 = vmatpush1.msra.mxu0 0.0
          %604 = vmatprep.subr.mxu0 0.0
          %605 = vmatpush1.msra.mxu0 0.0
          %606 = vmatprep.subr.mxu0 0.0
          %607 = vmatpush1.msra.mxu0 0.0
          %608 = vmatprep.subr.mxu0 0.0
          %609 = vmatpush1.msra.mxu0 0.0
          %610 = vmatprep.subr.mxu0 0.0
          %611 = vmatpush1.msra.mxu0 %v572
          %612 = vmatprep.subr.mxu0 0.0
          %613 = vmatpush1.msra.mxu0 %v571
          %614 = vmatprep.subr.mxu0 0.0
          %615 = vmatpush1.msra.mxu0 %v570
          %616 = vmatprep.subr.mxu0 0.0
          %617 = vmatpush1.msra.mxu0 %v569
          %618 = vmatprep.subr.mxu0 0.0
          %619 = vmatpush2.msra.mxu0 0.0
          %620 = vmatprep.subr.mxu0 0.0
          %621 = vmatpush2.msra.mxu0 0.0
          %622 = vmatprep.subr.mxu0 0.0
          %623 = vmatpush2.msra.mxu0 0.0
          %624 = vmatprep.subr.mxu0 0.0
          %625 = vmatpush2.msra.mxu0 0.0
          %626 = vmatprep.subr.mxu0 0.0
          %627 = vmatpush2.msra.mxu0 0.0
          %628 = vmatprep.subr.mxu0 0.0
          %629 = vmatpush2.msra.mxu0 0.0
          %630 = vmatprep.subr.mxu0 0.0
          %631 = vmatpush2.msra.mxu0 0.0
          %632 = vmatprep.subr.mxu0 0.0
          %633 = vmatpush2.msra.mxu0 0.0
          %634 = vmatprep.subr.mxu0 0.0
          %635 = vmatpush2.msra.mxu0 0.0
          %636 = vmatprep.subr.mxu0 0.0
          %637 = vmatpush2.msra.mxu0 0.0
          %638 = vmatprep.subr.mxu0 0.0
          %639 = vmatpush2.msra.mxu0 0.0
          %640 = vmatprep.subr.mxu0 0.0
          %641 = vmatpush2.msra.mxu0 0.0
          %642 = vmatprep.subr.mxu0 0.0
          %643 = vmatpush2.msra.mxu0 0.0
          %644 = vmatprep.subr.mxu0 0.0
          %645 = vmatpush2.msra.mxu0 0.0
          %646 = vmatprep.subr.mxu0 0.0
          %647 = vmatpush2.msra.mxu0 0.0
          %648 = vmatprep.subr.mxu0 0.0
          %649 = vmatpush2.msra.mxu0 0.0
          %650 = vmatprep.mubr.f32.mxu0 0.0
          %651 = vmatmul.mubr.f32.gmra.mxu0 %v575
          %v652 = vpop.f32.mrf.mxu0
          %v653 = vadd.f32 0.0, %v652
          %v654 = vpop.f32.mrf.mxu0
          %655 = vmatprep.mubr.f32.mxu0 0.0
          %656 = vmatmul.mubr.f32.gmra.mxu0 %v578
          %v657 = vpop.f32.mrf.mxu0
          %v658 = vadd.f32 0.0, %v657
          %v659 = vpop.f32.mrf.mxu0
          %660 = vmatprep.mubr.f32.mxu0 0.0
          %661 = vmatmul.mubr.f32.gmra.mxu0 %v581
          %v662 = vpop.f32.mrf.mxu0
          %v663 = vadd.f32 0.0, %v662
          %v664 = vpop.f32.mrf.mxu0
          %665 = vmatprep.mubr.f32.mxu0 0.0
          %666 = vmatmul.mubr.f32.gmra.mxu0 %v584
          %v667 = vpop.f32.mrf.mxu0
          %v668 = vadd.f32 0.0, %v667
          %v669 = vpop.f32.mrf.mxu0
          %670 = vdwg.mxu0
          %v671 = vld [vmem:[%s6] sm:$0x3]
          %vm672 = vcmask 15360
          %v674 = vsel %vm672, %v653, 0
          %v677 = vsel %vm672, %v658, 0
          %v680 = vsel %vm672, %v663, 0
          %v683 = vsel %vm672, %v668, 0
          %vm685 = vcmask 1041408
          %v687 = vsel %vm685, %v671, 0
          %689 = vmatprep.subr.mxu0 0.0
          %690 = vmatpush1.msra.mxu0 0.0
          %691 = vmatprep.subr.mxu0 0.0
          %692 = vmatpush1.msra.mxu0 0.0
          %693 = vmatprep.subr.mxu0 0.0
          %694 = vmatpush1.msra.mxu0 0.0
          %695 = vmatprep.subr.mxu0 0.0
          %696 = vmatpush1.msra.mxu0 0.0
          %697 = vmatprep.subr.mxu0 0.0
          %698 = vmatpush1.msra.mxu0 0.0
          %699 = vmatprep.subr.mxu0 0.0
          %700 = vmatpush1.msra.mxu0 0.0
          %701 = vmatprep.subr.mxu0 0.0
          %702 = vmatpush1.msra.mxu0 0.0
          %703 = vmatprep.subr.mxu0 0.0
          %704 = vmatpush1.msra.mxu0 0.0
          %705 = vmatprep.subr.mxu0 0.0
          %706 = vmatpush1.msra.mxu0 0.0
          %707 = vmatprep.subr.mxu0 0.0
          %708 = vmatpush1.msra.mxu0 0.0
          %709 = vmatprep.subr.mxu0 0.0
          %710 = vmatpush1.msra.mxu0 0.0
          %711 = vmatprep.subr.mxu0 0.0
          %712 = vmatpush1.msra.mxu0 0.0
          %713 = vmatprep.subr.mxu0 0.0
          %714 = vmatpush1.msra.mxu0 0.0
          %715 = vmatprep.subr.mxu0 0.0
          %716 = vmatpush1.msra.mxu0 0.0
          %717 = vmatprep.subr.mxu0 0.0
          %718 = vmatpush1.msra.mxu0 0.0
          %719 = vmatprep.subr.mxu0 0.0
          %720 = vmatpush1.msra.mxu0 %v687
          %721 = vmatprep.subr.mxu0 0.0
          %722 = vmatpush2.msra.mxu0 0.0
          %723 = vmatprep.subr.mxu0 0.0
          %724 = vmatpush2.msra.mxu0 0.0
          %725 = vmatprep.subr.mxu0 0.0
          %726 = vmatpush2.msra.mxu0 0.0
          %727 = vmatprep.subr.mxu0 0.0
          %728 = vmatpush2.msra.mxu0 0.0
          %729 = vmatprep.subr.mxu0 0.0
          %730 = vmatpush2.msra.mxu0 0.0
          %731 = vmatprep.subr.mxu0 0.0
          %732 = vmatpush2.msra.mxu0 0.0
          %733 = vmatprep.subr.mxu0 0.0
          %734 = vmatpush2.msra.mxu0 0.0
          %735 = vmatprep.subr.mxu0 0.0
          %736 = vmatpush2.msra.mxu0 0.0
          %737 = vmatprep.subr.mxu0 0.0
          %738 = vmatpush2.msra.mxu0 0.0
          %739 = vmatprep.subr.mxu0 0.0
          %740 = vmatpush2.msra.mxu0 0.0
          %741 = vmatprep.subr.mxu0 0.0
          %742 = vmatpush2.msra.mxu0 0.0
          %743 = vmatprep.subr.mxu0 0.0
          %744 = vmatpush2.msra.mxu0 0.0
          %745 = vmatprep.subr.mxu0 0.0
          %746 = vmatpush2.msra.mxu0 0.0
          %747 = vmatprep.subr.mxu0 0.0
          %748 = vmatpush2.msra.mxu0 0.0
          %749 = vmatprep.subr.mxu0 0.0
          %750 = vmatpush2.msra.mxu0 0.0
          %751 = vmatprep.subr.mxu0 0.0
          %752 = vmatpush2.msra.mxu0 0.0
          %753 = vmatprep.mubr.f32.mxu0 0.0
          %754 = vmatmul.mubr.f32.gmra.mxu0 %v674
          %v755 = vpop.f32.mrf.mxu0
          %v756 = vadd.f32 0.0, %v755
          %v757 = vpop.f32.mrf.mxu0
          %758 = vmatprep.mubr.f32.mxu0 0.0
          %759 = vmatmul.mubr.f32.gmra.mxu0 %v677
          %v760 = vpop.f32.mrf.mxu0
          %v761 = vadd.f32 0.0, %v760
          %v762 = vpop.f32.mrf.mxu0
          %763 = vmatprep.mubr.f32.mxu0 0.0
          %764 = vmatmul.mubr.f32.gmra.mxu0 %v680
          %v765 = vpop.f32.mrf.mxu0
          %v766 = vadd.f32 0.0, %v765
          %v767 = vpop.f32.mrf.mxu0
          %768 = vmatprep.mubr.f32.mxu0 0.0
          %769 = vmatmul.mubr.f32.gmra.mxu0 %v683
          %v770 = vpop.f32.mrf.mxu0
          %v771 = vadd.f32 0.0, %v770
          %v772 = vpop.f32.mrf.mxu0
          %773 = vdwg.mxu0
          %vm774 = vcmask 130048
          %775 = vst.msk [vmem:[#allocation2] sm:$0xff] %vm774, %v756
          %776 = vst.msk [vmem:[#allocation2 + $0x8] sm:$0xff] %vm774, %v761
          %777 = vst.msk [vmem:[#allocation2 + $0x10] sm:$0xff] %vm774, %v766
          %778 = vst.msk [vmem:[#allocation2 + $0x18] sm:$0xff] %vm774, %v771
          %779 = vrot.lane.b32.xlu0 %v653, 126
          %v780 = vpop.permute.xlu0 %779
          %781 = vrot.lane.b32.xlu0 %v658, 126
          %v782 = vpop.permute.xlu0 %781
          %783 = vrot.lane.b32.xlu0 %v663, 126
          %v784 = vpop.permute.xlu0 %783
          %785 = vrot.lane.b32.xlu0 %v668, 126
          %v786 = vpop.permute.xlu0 %785
          %v787 = vsel %vm672, %v780, 0
          %v789 = vsel %vm672, %v782, 0
          %v791 = vsel %vm672, %v784, 0
          %v793 = vsel %vm672, %v786, 0
          %795 = vmatprep.subr.mxu0 0.0
          %796 = vmatpush1.msra.mxu0 0.0
          %797 = vmatprep.subr.mxu0 0.0
          %798 = vmatpush1.msra.mxu0 0.0
          %799 = vmatprep.subr.mxu0 0.0
          %800 = vmatpush1.msra.mxu0 0.0
          %801 = vmatprep.subr.mxu0 0.0
          %802 = vmatpush1.msra.mxu0 0.0
          %803 = vmatprep.subr.mxu0 0.0
          %804 = vmatpush1.msra.mxu0 0.0
          %805 = vmatprep.subr.mxu0 0.0
          %806 = vmatpush1.msra.mxu0 0.0
          %807 = vmatprep.subr.mxu0 0.0
          %808 = vmatpush1.msra.mxu0 0.0
          %809 = vmatprep.subr.mxu0 0.0
          %810 = vmatpush1.msra.mxu0 0.0
          %811 = vmatprep.subr.mxu0 0.0
          %812 = vmatpush1.msra.mxu0 0.0
          %813 = vmatprep.subr.mxu0 0.0
          %814 = vmatpush1.msra.mxu0 0.0
          %815 = vmatprep.subr.mxu0 0.0
          %816 = vmatpush1.msra.mxu0 0.0
          %817 = vmatprep.subr.mxu0 0.0
          %818 = vmatpush1.msra.mxu0 0.0
          %819 = vmatprep.subr.mxu0 0.0
          %820 = vmatpush1.msra.mxu0 0.0
          %821 = vmatprep.subr.mxu0 0.0
          %822 = vmatpush1.msra.mxu0 0.0
          %823 = vmatprep.subr.mxu0 0.0
          %824 = vmatpush1.msra.mxu0 0.0
          %825 = vmatprep.subr.mxu0 0.0
          %826 = vmatpush1.msra.mxu0 %v687
          %827 = vmatprep.subr.mxu0 0.0
          %828 = vmatpush2.msra.mxu0 0.0
          %829 = vmatprep.subr.mxu0 0.0
          %830 = vmatpush2.msra.mxu0 0.0
          %831 = vmatprep.subr.mxu0 0.0
          %832 = vmatpush2.msra.mxu0 0.0
          %833 = vmatprep.subr.mxu0 0.0
          %834 = vmatpush2.msra.mxu0 0.0
          %835 = vmatprep.subr.mxu0 0.0
          %836 = vmatpush2.msra.mxu0 0.0
          %837 = vmatprep.subr.mxu0 0.0
          %838 = vmatpush2.msra.mxu0 0.0
          %839 = vmatprep.subr.mxu0 0.0
          %840 = vmatpush2.msra.mxu0 0.0
          %841 = vmatprep.subr.mxu0 0.0
          %842 = vmatpush2.msra.mxu0 0.0
          %843 = vmatprep.subr.mxu0 0.0
          %844 = vmatpush2.msra.mxu0 0.0
          %845 = vmatprep.subr.mxu0 0.0
          %846 = vmatpush2.msra.mxu0 0.0
          %847 = vmatprep.subr.mxu0 0.0
          %848 = vmatpush2.msra.mxu0 0.0
          %849 = vmatprep.subr.mxu0 0.0
          %850 = vmatpush2.msra.mxu0 0.0
          %851 = vmatprep.subr.mxu0 0.0
          %852 = vmatpush2.msra.mxu0 0.0
          %853 = vmatprep.subr.mxu0 0.0
          %854 = vmatpush2.msra.mxu0 0.0
          %855 = vmatprep.subr.mxu0 0.0
          %856 = vmatpush2.msra.mxu0 0.0
          %857 = vmatprep.subr.mxu0 0.0
          %858 = vmatpush2.msra.mxu0 0.0
          %859 = vmatprep.mubr.f32.mxu0 0.0
          %860 = vmatmul.mubr.f32.gmra.mxu0 %v787
          %v861 = vpop.f32.mrf.mxu0
          %v862 = vadd.f32 0.0, %v861
          %v863 = vpop.f32.mrf.mxu0
          %864 = vmatprep.mubr.f32.mxu0 0.0
          %865 = vmatmul.mubr.f32.gmra.mxu0 %v789
          %v866 = vpop.f32.mrf.mxu0
          %v867 = vadd.f32 0.0, %v866
          %v868 = vpop.f32.mrf.mxu0
          %869 = vmatprep.mubr.f32.mxu0 0.0
          %870 = vmatmul.mubr.f32.gmra.mxu0 %v791
          %v871 = vpop.f32.mrf.mxu0
          %v872 = vadd.f32 0.0, %v871
          %v873 = vpop.f32.mrf.mxu0
          %874 = vmatprep.mubr.f32.mxu0 0.0
          %875 = vmatmul.mubr.f32.gmra.mxu0 %v793
          %v876 = vpop.f32.mrf.mxu0
          %v877 = vadd.f32 0.0, %v876
          %v878 = vpop.f32.mrf.mxu0
          %879 = vdwg.mxu0
          %s880 = scalar_lea.vmem [#allocation2], 32
          %881 = vst.msk [vmem:[%s880] sm:$0xff] %vm774, %v862
          %882 = vst.msk [vmem:[%s880 + $0x8] sm:$0xff] %vm774, %v867
          %883 = vst.msk [vmem:[%s880 + $0x10] sm:$0xff] %vm774, %v872
          %884 = vst.msk [vmem:[%s880 + $0x18] sm:$0xff] %vm774, %v877
          %v885 = vld [vmem:[%s11] sm:$0xff]
          %v886 = vld [vmem:[%s11 + $0x8] sm:$0xff]
          %v887 = vld [vmem:[%s11 + $0x10] sm:$0xff]
          %v888 = vld [vmem:[%s11 + $0x18] sm:$0xff]
          %v889 = vld [vmem:[%s556] sm:$0xff]
          %v890 = vld [vmem:[%s556 + $0x8] sm:$0xff]
          %v892 = vsel %vm774, %v885, 0
          %v895 = vsel %vm774, %v886, 0
          %v898 = vsel %vm774, %v887, 0
          %v901 = vsel %vm774, %v888, 0
          %903 = vmatprep.subr.mxu0 0.0
          %904 = vmatpush1.msra.mxu0 0.0
          %905 = vmatprep.subr.mxu0 0.0
          %906 = vmatpush1.msra.mxu0 0.0
          %907 = vmatprep.subr.mxu0 0.0
          %908 = vmatpush1.msra.mxu0 0.0
          %909 = vmatprep.subr.mxu0 0.0
          %910 = vmatpush1.msra.mxu0 0.0
          %911 = vmatprep.subr.mxu0 0.0
          %912 = vmatpush1.msra.mxu0 0.0
          %913 = vmatprep.subr.mxu0 0.0
          %914 = vmatpush1.msra.mxu0 0.0
          %915 = vmatprep.subr.mxu0 0.0
          %916 = vmatpush1.msra.mxu0 0.0
          %917 = vmatprep.subr.mxu0 0.0
          %918 = vmatpush1.msra.mxu0 0.0
          %919 = vmatprep.subr.mxu0 0.0
          %920 = vmatpush1.msra.mxu0 0.0
          %921 = vmatprep.subr.mxu0 0.0
          %922 = vmatpush1.msra.mxu0 0.0
          %923 = vmatprep.subr.mxu0 0.0
          %924 = vmatpush1.msra.mxu0 0.0
          %925 = vmatprep.subr.mxu0 0.0
          %926 = vmatpush1.msra.mxu0 0.0
          %927 = vmatprep.subr.mxu0 0.0
          %928 = vmatpush1.msra.mxu0 0.0
          %929 = vmatprep.subr.mxu0 0.0
          %930 = vmatpush1.msra.mxu0 0.0
          %931 = vmatprep.subr.mxu0 0.0
          %932 = vmatpush1.msra.mxu0 %v890
          %933 = vmatprep.subr.mxu0 0.0
          %934 = vmatpush1.msra.mxu0 %v889
          %935 = vmatprep.subr.mxu0 0.0
          %936 = vmatpush2.msra.mxu0 0.0
          %937 = vmatprep.subr.mxu0 0.0
          %938 = vmatpush2.msra.mxu0 0.0
          %939 = vmatprep.subr.mxu0 0.0
          %940 = vmatpush2.msra.mxu0 0.0
          %941 = vmatprep.subr.mxu0 0.0
          %942 = vmatpush2.msra.mxu0 0.0
          %943 = vmatprep.subr.mxu0 0.0
          %944 = vmatpush2.msra.mxu0 0.0
          %945 = vmatprep.subr.mxu0 0.0
          %946 = vmatpush2.msra.mxu0 0.0
          %947 = vmatprep.subr.mxu0 0.0
          %948 = vmatpush2.msra.mxu0 0.0
          %949 = vmatprep.subr.mxu0 0.0
          %950 = vmatpush2.msra.mxu0 0.0
          %951 = vmatprep.subr.mxu0 0.0
          %952 = vmatpush2.msra.mxu0 0.0
          %953 = vmatprep.subr.mxu0 0.0
          %954 = vmatpush2.msra.mxu0 0.0
          %955 = vmatprep.subr.mxu0 0.0
          %956 = vmatpush2.msra.mxu0 0.0
          %957 = vmatprep.subr.mxu0 0.0
          %958 = vmatpush2.msra.mxu0 0.0
          %959 = vmatprep.subr.mxu0 0.0
          %960 = vmatpush2.msra.mxu0 0.0
          %961 = vmatprep.subr.mxu0 0.0
          %962 = vmatpush2.msra.mxu0 0.0
          %963 = vmatprep.subr.mxu0 0.0
          %964 = vmatpush2.msra.mxu0 0.0
          %965 = vmatprep.subr.mxu0 0.0
          %966 = vmatpush2.msra.mxu0 0.0
          %967 = vmatprep.mubr.f32.mxu0 0.0
          %968 = vmatmul.mubr.f32.gmra.mxu0 %v892
          %v969 = vpop.f32.mrf.mxu0
          %v970 = vadd.f32 0.0, %v969
          %v971 = vpop.f32.mrf.mxu0
          %972 = vmatprep.mubr.f32.mxu0 0.0
          %973 = vmatmul.mubr.f32.gmra.mxu0 %v895
          %v974 = vpop.f32.mrf.mxu0
          %v975 = vadd.f32 0.0, %v974
          %v976 = vpop.f32.mrf.mxu0
          %977 = vmatprep.mubr.f32.mxu0 0.0
          %978 = vmatmul.mubr.f32.gmra.mxu0 %v898
          %v979 = vpop.f32.mrf.mxu0
          %v980 = vadd.f32 0.0, %v979
          %v981 = vpop.f32.mrf.mxu0
          %982 = vmatprep.mubr.f32.mxu0 0.0
          %983 = vmatmul.mubr.f32.gmra.mxu0 %v901
          %v984 = vpop.f32.mrf.mxu0
          %v985 = vadd.f32 0.0, %v984
          %v986 = vpop.f32.mrf.mxu0
          %987 = vdwg.mxu0
          %v988 = vld [vmem:[%s7] sm:$0xf]
          %vm989 = vcmask 31744
          %v991 = vsel %vm989, %v970, 0
          %v994 = vsel %vm989, %v975, 0
          %v997 = vsel %vm989, %v980, 0
          %v1000 = vsel %vm989, %v985, 0
          %vm1002 = vcmask 1043456
          %v1004 = vsel %vm1002, %v988, 0
          %1006 = vmatprep.subr.mxu0 0.0
          %1007 = vmatpush1.msra.mxu0 0.0
          %1008 = vmatprep.subr.mxu0 0.0
          %1009 = vmatpush1.msra.mxu0 0.0
          %1010 = vmatprep.subr.mxu0 0.0
          %1011 = vmatpush1.msra.mxu0 0.0
          %1012 = vmatprep.subr.mxu0 0.0
          %1013 = vmatpush1.msra.mxu0 0.0
          %1014 = vmatprep.subr.mxu0 0.0
          %1015 = vmatpush1.msra.mxu0 0.0
          %1016 = vmatprep.subr.mxu0 0.0
          %1017 = vmatpush1.msra.mxu0 0.0
          %1018 = vmatprep.subr.mxu0 0.0
          %1019 = vmatpush1.msra.mxu0 0.0
          %1020 = vmatprep.subr.mxu0 0.0
          %1021 = vmatpush1.msra.mxu0 0.0
          %1022 = vmatprep.subr.mxu0 0.0
          %1023 = vmatpush1.msra.mxu0 0.0
          %1024 = vmatprep.subr.mxu0 0.0
          %1025 = vmatpush1.msra.mxu0 0.0
          %1026 = vmatprep.subr.mxu0 0.0
          %1027 = vmatpush1.msra.mxu0 0.0
          %1028 = vmatprep.subr.mxu0 0.0
          %1029 = vmatpush1.msra.mxu0 0.0
          %1030 = vmatprep.subr.mxu0 0.0
          %1031 = vmatpush1.msra.mxu0 0.0
          %1032 = vmatprep.subr.mxu0 0.0
          %1033 = vmatpush1.msra.mxu0 0.0
          %1034 = vmatprep.subr.mxu0 0.0
          %1035 = vmatpush1.msra.mxu0 0.0
          %1036 = vmatprep.subr.mxu0 0.0
          %1037 = vmatpush1.msra.mxu0 %v1004
          %1038 = vmatprep.subr.mxu0 0.0
          %1039 = vmatpush2.msra.mxu0 0.0
          %1040 = vmatprep.subr.mxu0 0.0
          %1041 = vmatpush2.msra.mxu0 0.0
          %1042 = vmatprep.subr.mxu0 0.0
          %1043 = vmatpush2.msra.mxu0 0.0
          %1044 = vmatprep.subr.mxu0 0.0
          %1045 = vmatpush2.msra.mxu0 0.0
          %1046 = vmatprep.subr.mxu0 0.0
          %1047 = vmatpush2.msra.mxu0 0.0
          %1048 = vmatprep.subr.mxu0 0.0
          %1049 = vmatpush2.msra.mxu0 0.0
          %1050 = vmatprep.subr.mxu0 0.0
          %1051 = vmatpush2.msra.mxu0 0.0
          %1052 = vmatprep.subr.mxu0 0.0
          %1053 = vmatpush2.msra.mxu0 0.0
          %1054 = vmatprep.subr.mxu0 0.0
          %1055 = vmatpush2.msra.mxu0 0.0
          %1056 = vmatprep.subr.mxu0 0.0
          %1057 = vmatpush2.msra.mxu0 0.0
          %1058 = vmatprep.subr.mxu0 0.0
          %1059 = vmatpush2.msra.mxu0 0.0
          %1060 = vmatprep.subr.mxu0 0.0
          %1061 = vmatpush2.msra.mxu0 0.0
          %1062 = vmatprep.subr.mxu0 0.0
          %1063 = vmatpush2.msra.mxu0 0.0
          %1064 = vmatprep.subr.mxu0 0.0
          %1065 = vmatpush2.msra.mxu0 0.0
          %1066 = vmatprep.subr.mxu0 0.0
          %1067 = vmatpush2.msra.mxu0 0.0
          %1068 = vmatprep.subr.mxu0 0.0
          %1069 = vmatpush2.msra.mxu0 0.0
          %1070 = vmatprep.mubr.f32.mxu0 0.0
          %1071 = vmatmul.mubr.f32.gmra.mxu0 %v991
          %v1072 = vpop.f32.mrf.mxu0
          %v1073 = vadd.f32 0.0, %v1072
          %v1074 = vpop.f32.mrf.mxu0
          %1075 = vmatprep.mubr.f32.mxu0 0.0
          %1076 = vmatmul.mubr.f32.gmra.mxu0 %v994
          %v1077 = vpop.f32.mrf.mxu0
          %v1078 = vadd.f32 0.0, %v1077
          %v1079 = vpop.f32.mrf.mxu0
          %1080 = vmatprep.mubr.f32.mxu0 0.0
          %1081 = vmatmul.mubr.f32.gmra.mxu0 %v997
          %v1082 = vpop.f32.mrf.mxu0
          %v1083 = vadd.f32 0.0, %v1082
          %v1084 = vpop.f32.mrf.mxu0
          %1085 = vmatprep.mubr.f32.mxu0 0.0
          %1086 = vmatmul.mubr.f32.gmra.mxu0 %v1000
          %v1087 = vpop.f32.mrf.mxu0
          %v1088 = vadd.f32 0.0, %v1087
          %v1089 = vpop.f32.mrf.mxu0
          %1090 = vdwg.mxu0
          %1091 = vst.msk [vmem:[#allocation3] sm:$0xff] %vm774, %v1073
          %1092 = vst.msk [vmem:[#allocation3 + $0x8] sm:$0xff] %vm774, %v1078
          %1093 = vst.msk [vmem:[#allocation3 + $0x10] sm:$0xff] %vm774, %v1083
          %1094 = vst.msk [vmem:[#allocation3 + $0x18] sm:$0xff] %vm774, %v1088
          %1095 = vrot.lane.b32.xlu0 %v970, 124
          %v1096 = vpop.permute.xlu0 %1095
          %1097 = vrot.lane.b32.xlu0 %v975, 124
          %v1098 = vpop.permute.xlu0 %1097
          %1099 = vrot.lane.b32.xlu0 %v980, 124
          %v1100 = vpop.permute.xlu0 %1099
          %1101 = vrot.lane.b32.xlu0 %v985, 124
          %v1102 = vpop.permute.xlu0 %1101
          %v1103 = vsel %vm989, %v1096, 0
          %v1105 = vsel %vm989, %v1098, 0
          %v1107 = vsel %vm989, %v1100, 0
          %v1109 = vsel %vm989, %v1102, 0
          %1111 = vmatprep.subr.mxu0 0.0
          %1112 = vmatpush1.msra.mxu0 0.0
          %1113 = vmatprep.subr.mxu0 0.0
          %1114 = vmatpush1.msra.mxu0 0.0
          %1115 = vmatprep.subr.mxu0 0.0
          %1116 = vmatpush1.msra.mxu0 0.0
          %1117 = vmatprep.subr.mxu0 0.0
          %1118 = vmatpush1.msra.mxu0 0.0
          %1119 = vmatprep.subr.mxu0 0.0
          %1120 = vmatpush1.msra.mxu0 0.0
          %1121 = vmatprep.subr.mxu0 0.0
          %1122 = vmatpush1.msra.mxu0 0.0
          %1123 = vmatprep.subr.mxu0 0.0
          %1124 = vmatpush1.msra.mxu0 0.0
          %1125 = vmatprep.subr.mxu0 0.0
          %1126 = vmatpush1.msra.mxu0 0.0
          %1127 = vmatprep.subr.mxu0 0.0
          %1128 = vmatpush1.msra.mxu0 0.0
          %1129 = vmatprep.subr.mxu0 0.0
          %1130 = vmatpush1.msra.mxu0 0.0
          %1131 = vmatprep.subr.mxu0 0.0
          %1132 = vmatpush1.msra.mxu0 0.0
          %1133 = vmatprep.subr.mxu0 0.0
          %1134 = vmatpush1.msra.mxu0 0.0
          %1135 = vmatprep.subr.mxu0 0.0
          %1136 = vmatpush1.msra.mxu0 0.0
          %1137 = vmatprep.subr.mxu0 0.0
          %1138 = vmatpush1.msra.mxu0 0.0
          %1139 = vmatprep.subr.mxu0 0.0
          %1140 = vmatpush1.msra.mxu0 0.0
          %1141 = vmatprep.subr.mxu0 0.0
          %1142 = vmatpush1.msra.mxu0 %v1004
          %1143 = vmatprep.subr.mxu0 0.0
          %1144 = vmatpush2.msra.mxu0 0.0
          %1145 = vmatprep.subr.mxu0 0.0
          %1146 = vmatpush2.msra.mxu0 0.0
          %1147 = vmatprep.subr.mxu0 0.0
          %1148 = vmatpush2.msra.mxu0 0.0
          %1149 = vmatprep.subr.mxu0 0.0
          %1150 = vmatpush2.msra.mxu0 0.0
          %1151 = vmatprep.subr.mxu0 0.0
          %1152 = vmatpush2.msra.mxu0 0.0
          %1153 = vmatprep.subr.mxu0 0.0
          %1154 = vmatpush2.msra.mxu0 0.0
          %1155 = vmatprep.subr.mxu0 0.0
          %1156 = vmatpush2.msra.mxu0 0.0
          %1157 = vmatprep.subr.mxu0 0.0
          %1158 = vmatpush2.msra.mxu0 0.0
          %1159 = vmatprep.subr.mxu0 0.0
          %1160 = vmatpush2.msra.mxu0 0.0
          %1161 = vmatprep.subr.mxu0 0.0
          %1162 = vmatpush2.msra.mxu0 0.0
          %1163 = vmatprep.subr.mxu0 0.0
          %1164 = vmatpush2.msra.mxu0 0.0
          %1165 = vmatprep.subr.mxu0 0.0
          %1166 = vmatpush2.msra.mxu0 0.0
          %1167 = vmatprep.subr.mxu0 0.0
          %1168 = vmatpush2.msra.mxu0 0.0
          %1169 = vmatprep.subr.mxu0 0.0
          %1170 = vmatpush2.msra.mxu0 0.0
          %1171 = vmatprep.subr.mxu0 0.0
          %1172 = vmatpush2.msra.mxu0 0.0
          %1173 = vmatprep.subr.mxu0 0.0
          %1174 = vmatpush2.msra.mxu0 0.0
          %1175 = vmatprep.mubr.f32.mxu0 0.0
          %1176 = vmatmul.mubr.f32.gmra.mxu0 %v1103
          %v1177 = vpop.f32.mrf.mxu0
          %v1178 = vadd.f32 0.0, %v1177
          %v1179 = vpop.f32.mrf.mxu0
          %1180 = vmatprep.mubr.f32.mxu0 0.0
          %1181 = vmatmul.mubr.f32.gmra.mxu0 %v1105
          %v1182 = vpop.f32.mrf.mxu0
          %v1183 = vadd.f32 0.0, %v1182
          %v1184 = vpop.f32.mrf.mxu0
          %1185 = vmatprep.mubr.f32.mxu0 0.0
          %1186 = vmatmul.mubr.f32.gmra.mxu0 %v1107
          %v1187 = vpop.f32.mrf.mxu0
          %v1188 = vadd.f32 0.0, %v1187
          %v1189 = vpop.f32.mrf.mxu0
          %1190 = vmatprep.mubr.f32.mxu0 0.0
          %1191 = vmatmul.mubr.f32.gmra.mxu0 %v1109
          %v1192 = vpop.f32.mrf.mxu0
          %v1193 = vadd.f32 0.0, %v1192
          %v1194 = vpop.f32.mrf.mxu0
          %1195 = vdwg.mxu0
          %s1196 = scalar_lea.vmem [#allocation3], 32
          %1197 = vst.msk [vmem:[%s1196] sm:$0xff] %vm774, %v1178
          %1198 = vst.msk [vmem:[%s1196 + $0x8] sm:$0xff] %vm774, %v1183
          %1199 = vst.msk [vmem:[%s1196 + $0x10] sm:$0xff] %vm774, %v1188
          %1200 = vst.msk [vmem:[%s1196 + $0x18] sm:$0xff] %vm774, %v1193
          %1201 = vrot.lane.b32.xlu0 %v970, 120
          %v1202 = vpop.permute.xlu0 %1201
          %1203 = vrot.lane.b32.xlu0 %v975, 120
          %v1204 = vpop.permute.xlu0 %1203
          %1205 = vrot.lane.b32.xlu0 %v980, 120
          %v1206 = vpop.permute.xlu0 %1205
          %1207 = vrot.lane.b32.xlu0 %v985, 120
          %v1208 = vpop.permute.xlu0 %1207
          %v1209 = vsel %vm989, %v1202, 0
          %v1211 = vsel %vm989, %v1204, 0
          %v1213 = vsel %vm989, %v1206, 0
          %v1215 = vsel %vm989, %v1208, 0
          %1217 = vmatprep.subr.mxu0 0.0
          %1218 = vmatpush1.msra.mxu0 0.0
          %1219 = vmatprep.subr.mxu0 0.0
          %1220 = vmatpush1.msra.mxu0 0.0
          %1221 = vmatprep.subr.mxu0 0.0
          %1222 = vmatpush1.msra.mxu0 0.0
          %1223 = vmatprep.subr.mxu0 0.0
          %1224 = vmatpush1.msra.mxu0 0.0
          %1225 = vmatprep.subr.mxu0 0.0
          %1226 = vmatpush1.msra.mxu0 0.0
          %1227 = vmatprep.subr.mxu0 0.0
          %1228 = vmatpush1.msra.mxu0 0.0
          %1229 = vmatprep.subr.mxu0 0.0
          %1230 = vmatpush1.msra.mxu0 0.0
          %1231 = vmatprep.subr.mxu0 0.0
          %1232 = vmatpush1.msra.mxu0 0.0
          %1233 = vmatprep.subr.mxu0 0.0
          %1234 = vmatpush1.msra.mxu0 0.0
          %1235 = vmatprep.subr.mxu0 0.0
          %1236 = vmatpush1.msra.mxu0 0.0
          %1237 = vmatprep.subr.mxu0 0.0
          %1238 = vmatpush1.msra.mxu0 0.0
          %1239 = vmatprep.subr.mxu0 0.0
          %1240 = vmatpush1.msra.mxu0 0.0
          %1241 = vmatprep.subr.mxu0 0.0
          %1242 = vmatpush1.msra.mxu0 0.0
          %1243 = vmatprep.subr.mxu0 0.0
          %1244 = vmatpush1.msra.mxu0 0.0
          %1245 = vmatprep.subr.mxu0 0.0
          %1246 = vmatpush1.msra.mxu0 0.0
          %1247 = vmatprep.subr.mxu0 0.0
          %1248 = vmatpush1.msra.mxu0 %v1004
          %1249 = vmatprep.subr.mxu0 0.0
          %1250 = vmatpush2.msra.mxu0 0.0
          %1251 = vmatprep.subr.mxu0 0.0
          %1252 = vmatpush2.msra.mxu0 0.0
          %1253 = vmatprep.subr.mxu0 0.0
          %1254 = vmatpush2.msra.mxu0 0.0
          %1255 = vmatprep.subr.mxu0 0.0
          %1256 = vmatpush2.msra.mxu0 0.0
          %1257 = vmatprep.subr.mxu0 0.0
          %1258 = vmatpush2.msra.mxu0 0.0
          %1259 = vmatprep.subr.mxu0 0.0
          %1260 = vmatpush2.msra.mxu0 0.0
          %1261 = vmatprep.subr.mxu0 0.0
          %1262 = vmatpush2.msra.mxu0 0.0
          %1263 = vmatprep.subr.mxu0 0.0
          %1264 = vmatpush2.msra.mxu0 0.0
          %1265 = vmatprep.subr.mxu0 0.0
          %1266 = vmatpush2.msra.mxu0 0.0
          %1267 = vmatprep.subr.mxu0 0.0
          %1268 = vmatpush2.msra.mxu0 0.0
          %1269 = vmatprep.subr.mxu0 0.0
          %1270 = vmatpush2.msra.mxu0 0.0
          %1271 = vmatprep.subr.mxu0 0.0
          %1272 = vmatpush2.msra.mxu0 0.0
          %1273 = vmatprep.subr.mxu0 0.0
          %1274 = vmatpush2.msra.mxu0 0.0
          %1275 = vmatprep.subr.mxu0 0.0
          %1276 = vmatpush2.msra.mxu0 0.0
          %1277 = vmatprep.subr.mxu0 0.0
          %1278 = vmatpush2.msra.mxu0 0.0
          %1279 = vmatprep.subr.mxu0 0.0
          %1280 = vmatpush2.msra.mxu0 0.0
          %1281 = vmatprep.mubr.f32.mxu0 0.0
          %1282 = vmatmul.mubr.f32.gmra.mxu0 %v1209
          %v1283 = vpop.f32.mrf.mxu0
          %v1284 = vadd.f32 0.0, %v1283
          %v1285 = vpop.f32.mrf.mxu0
          %1286 = vmatprep.mubr.f32.mxu0 0.0
          %1287 = vmatmul.mubr.f32.gmra.mxu0 %v1211
          %v1288 = vpop.f32.mrf.mxu0
          %v1289 = vadd.f32 0.0, %v1288
          %v1290 = vpop.f32.mrf.mxu0
          %1291 = vmatprep.mubr.f32.mxu0 0.0
          %1292 = vmatmul.mubr.f32.gmra.mxu0 %v1213
          %v1293 = vpop.f32.mrf.mxu0
          %v1294 = vadd.f32 0.0, %v1293
          %v1295 = vpop.f32.mrf.mxu0
          %1296 = vmatprep.mubr.f32.mxu0 0.0
          %1297 = vmatmul.mubr.f32.gmra.mxu0 %v1215
          %v1298 = vpop.f32.mrf.mxu0
          %v1299 = vadd.f32 0.0, %v1298
          %v1300 = vpop.f32.mrf.mxu0
          %1301 = vdwg.mxu0
          %s1302 = scalar_lea.vmem [#allocation3], 64
          %1303 = vst.msk [vmem:[%s1302] sm:$0xff] %vm774, %v1284
          %1304 = vst.msk [vmem:[%s1302 + $0x8] sm:$0xff] %vm774, %v1289
          %1305 = vst.msk [vmem:[%s1302 + $0x10] sm:$0xff] %vm774, %v1294
          %1306 = vst.msk [vmem:[%s1302 + $0x18] sm:$0xff] %vm774, %v1299
          %1307 = vrot.lane.b32.xlu0 %v970, 116
          %v1308 = vpop.permute.xlu0 %1307
          %1309 = vrot.lane.b32.xlu0 %v975, 116
          %v1310 = vpop.permute.xlu0 %1309
          %1311 = vrot.lane.b32.xlu0 %v980, 116
          %v1312 = vpop.permute.xlu0 %1311
          %1313 = vrot.lane.b32.xlu0 %v985, 116
          %v1314 = vpop.permute.xlu0 %1313
          %v1315 = vsel %vm989, %v1308, 0
          %v1317 = vsel %vm989, %v1310, 0
          %v1319 = vsel %vm989, %v1312, 0
          %v1321 = vsel %vm989, %v1314, 0
          %1323 = vmatprep.subr.mxu0 0.0
          %1324 = vmatpush1.msra.mxu0 0.0
          %1325 = vmatprep.subr.mxu0 0.0
          %1326 = vmatpush1.msra.mxu0 0.0
          %1327 = vmatprep.subr.mxu0 0.0
          %1328 = vmatpush1.msra.mxu0 0.0
          %1329 = vmatprep.subr.mxu0 0.0
          %1330 = vmatpush1.msra.mxu0 0.0
          %1331 = vmatprep.subr.mxu0 0.0
          %1332 = vmatpush1.msra.mxu0 0.0
          %1333 = vmatprep.subr.mxu0 0.0
          %1334 = vmatpush1.msra.mxu0 0.0
          %1335 = vmatprep.subr.mxu0 0.0
          %1336 = vmatpush1.msra.mxu0 0.0
          %1337 = vmatprep.subr.mxu0 0.0
          %1338 = vmatpush1.msra.mxu0 0.0
          %1339 = vmatprep.subr.mxu0 0.0
          %1340 = vmatpush1.msra.mxu0 0.0
          %1341 = vmatprep.subr.mxu0 0.0
          %1342 = vmatpush1.msra.mxu0 0.0
          %1343 = vmatprep.subr.mxu0 0.0
          %1344 = vmatpush1.msra.mxu0 0.0
          %1345 = vmatprep.subr.mxu0 0.0
          %1346 = vmatpush1.msra.mxu0 0.0
          %1347 = vmatprep.subr.mxu0 0.0
          %1348 = vmatpush1.msra.mxu0 0.0
          %1349 = vmatprep.subr.mxu0 0.0
          %1350 = vmatpush1.msra.mxu0 0.0
          %1351 = vmatprep.subr.mxu0 0.0
          %1352 = vmatpush1.msra.mxu0 0.0
          %1353 = vmatprep.subr.mxu0 0.0
          %1354 = vmatpush1.msra.mxu0 %v1004
          %1355 = vmatprep.subr.mxu0 0.0
          %1356 = vmatpush2.msra.mxu0 0.0
          %1357 = vmatprep.subr.mxu0 0.0
          %1358 = vmatpush2.msra.mxu0 0.0
          %1359 = vmatprep.subr.mxu0 0.0
          %1360 = vmatpush2.msra.mxu0 0.0
          %1361 = vmatprep.subr.mxu0 0.0
          %1362 = vmatpush2.msra.mxu0 0.0
          %1363 = vmatprep.subr.mxu0 0.0
          %1364 = vmatpush2.msra.mxu0 0.0
          %1365 = vmatprep.subr.mxu0 0.0
          %1366 = vmatpush2.msra.mxu0 0.0
          %1367 = vmatprep.subr.mxu0 0.0
          %1368 = vmatpush2.msra.mxu0 0.0
          %1369 = vmatprep.subr.mxu0 0.0
          %1370 = vmatpush2.msra.mxu0 0.0
          %1371 = vmatprep.subr.mxu0 0.0
          %1372 = vmatpush2.msra.mxu0 0.0
          %1373 = vmatprep.subr.mxu0 0.0
          %1374 = vmatpush2.msra.mxu0 0.0
          %1375 = vmatprep.subr.mxu0 0.0
          %1376 = vmatpush2.msra.mxu0 0.0
          %1377 = vmatprep.subr.mxu0 0.0
          %1378 = vmatpush2.msra.mxu0 0.0
          %1379 = vmatprep.subr.mxu0 0.0
          %1380 = vmatpush2.msra.mxu0 0.0
          %1381 = vmatprep.subr.mxu0 0.0
          %1382 = vmatpush2.msra.mxu0 0.0
          %1383 = vmatprep.subr.mxu0 0.0
          %1384 = vmatpush2.msra.mxu0 0.0
          %1385 = vmatprep.subr.mxu0 0.0
          %1386 = vmatpush2.msra.mxu0 0.0
          %1387 = vmatprep.mubr.f32.mxu0 0.0
          %1388 = vmatmul.mubr.f32.gmra.mxu0 %v1315
          %v1389 = vpop.f32.mrf.mxu0
          %v1390 = vadd.f32 0.0, %v1389
          %v1391 = vpop.f32.mrf.mxu0
          %1392 = vmatprep.mubr.f32.mxu0 0.0
          %1393 = vmatmul.mubr.f32.gmra.mxu0 %v1317
          %v1394 = vpop.f32.mrf.mxu0
          %v1395 = vadd.f32 0.0, %v1394
          %v1396 = vpop.f32.mrf.mxu0
          %1397 = vmatprep.mubr.f32.mxu0 0.0
          %1398 = vmatmul.mubr.f32.gmra.mxu0 %v1319
          %v1399 = vpop.f32.mrf.mxu0
          %v1400 = vadd.f32 0.0, %v1399
          %v1401 = vpop.f32.mrf.mxu0
          %1402 = vmatprep.mubr.f32.mxu0 0.0
          %1403 = vmatmul.mubr.f32.gmra.mxu0 %v1321
          %v1404 = vpop.f32.mrf.mxu0
          %v1405 = vadd.f32 0.0, %v1404
          %v1406 = vpop.f32.mrf.mxu0
          %1407 = vdwg.mxu0
          %s1408 = scalar_lea.vmem [#allocation3], 96
          %1409 = vst.msk [vmem:[%s1408] sm:$0xff] %vm774, %v1390
          %1410 = vst.msk [vmem:[%s1408 + $0x8] sm:$0xff] %vm774, %v1395
          %1411 = vst.msk [vmem:[%s1408 + $0x10] sm:$0xff] %vm774, %v1400
          %1412 = vst.msk [vmem:[%s1408 + $0x18] sm:$0xff] %vm774, %v1405
          %v1413 = vld [vmem:[%s12] sm:$0xff]
          %v1414 = vld [vmem:[%s12 + $0x8] sm:$0xff]
          %v1415 = vld [vmem:[%s12 + $0x10] sm:$0xff]
          %v1416 = vld [vmem:[%s12 + $0x18] sm:$0xff]
          %v1417 = vld [vmem:[%s560] sm:$0xff]
          %vm1418 = vcmask 64512
          %v1420 = vsel %vm1418, %v1413, 0
          %v1423 = vsel %vm1418, %v1414, 0
          %v1426 = vsel %vm1418, %v1415, 0
          %v1429 = vsel %vm1418, %v1416, 0
          %1431 = vmatprep.subr.mxu0 0.0
          %1432 = vmatpush1.msra.mxu0 0.0
          %1433 = vmatprep.subr.mxu0 0.0
          %1434 = vmatpush1.msra.mxu0 0.0
          %1435 = vmatprep.subr.mxu0 0.0
          %1436 = vmatpush1.msra.mxu0 0.0
          %1437 = vmatprep.subr.mxu0 0.0
          %1438 = vmatpush1.msra.mxu0 0.0
          %1439 = vmatprep.subr.mxu0 0.0
          %1440 = vmatpush1.msra.mxu0 0.0
          %1441 = vmatprep.subr.mxu0 0.0
          %1442 = vmatpush1.msra.mxu0 0.0
          %1443 = vmatprep.subr.mxu0 0.0
          %1444 = vmatpush1.msra.mxu0 0.0
          %1445 = vmatprep.subr.mxu0 0.0
          %1446 = vmatpush1.msra.mxu0 0.0
          %1447 = vmatprep.subr.mxu0 0.0
          %1448 = vmatpush1.msra.mxu0 0.0
          %1449 = vmatprep.subr.mxu0 0.0
          %1450 = vmatpush1.msra.mxu0 0.0
          %1451 = vmatprep.subr.mxu0 0.0
          %1452 = vmatpush1.msra.mxu0 0.0
          %1453 = vmatprep.subr.mxu0 0.0
          %1454 = vmatpush1.msra.mxu0 0.0
          %1455 = vmatprep.subr.mxu0 0.0
          %1456 = vmatpush1.msra.mxu0 0.0
          %1457 = vmatprep.subr.mxu0 0.0
          %1458 = vmatpush1.msra.mxu0 0.0
          %1459 = vmatprep.subr.mxu0 0.0
          %1460 = vmatpush1.msra.mxu0 0.0
          %1461 = vmatprep.subr.mxu0 0.0
          %1462 = vmatpush1.msra.mxu0 %v1417
          %1463 = vmatprep.subr.mxu0 0.0
          %1464 = vmatpush2.msra.mxu0 0.0
          %1465 = vmatprep.subr.mxu0 0.0
          %1466 = vmatpush2.msra.mxu0 0.0
          %1467 = vmatprep.subr.mxu0 0.0
          %1468 = vmatpush2.msra.mxu0 0.0
          %1469 = vmatprep.subr.mxu0 0.0
          %1470 = vmatpush2.msra.mxu0 0.0
          %1471 = vmatprep.subr.mxu0 0.0
          %1472 = vmatpush2.msra.mxu0 0.0
          %1473 = vmatprep.subr.mxu0 0.0
          %1474 = vmatpush2.msra.mxu0 0.0
          %1475 = vmatprep.subr.mxu0 0.0
          %1476 = vmatpush2.msra.mxu0 0.0
          %1477 = vmatprep.subr.mxu0 0.0
          %1478 = vmatpush2.msra.mxu0 0.0
          %1479 = vmatprep.subr.mxu0 0.0
          %1480 = vmatpush2.msra.mxu0 0.0
          %1481 = vmatprep.subr.mxu0 0.0
          %1482 = vmatpush2.msra.mxu0 0.0
          %1483 = vmatprep.subr.mxu0 0.0
          %1484 = vmatpush2.msra.mxu0 0.0
          %1485 = vmatprep.subr.mxu0 0.0
          %1486 = vmatpush2.msra.mxu0 0.0
          %1487 = vmatprep.subr.mxu0 0.0
          %1488 = vmatpush2.msra.mxu0 0.0
          %1489 = vmatprep.subr.mxu0 0.0
          %1490 = vmatpush2.msra.mxu0 0.0
          %1491 = vmatprep.subr.mxu0 0.0
          %1492 = vmatpush2.msra.mxu0 0.0
          %1493 = vmatprep.subr.mxu0 0.0
          %1494 = vmatpush2.msra.mxu0 0.0
          %1495 = vmatprep.mubr.f32.mxu0 0.0
          %1496 = vmatmul.mubr.f32.gmra.mxu0 %v1420
          %v1497 = vpop.f32.mrf.mxu0
          %v1498 = vadd.f32 0.0, %v1497
          %v1499 = vpop.f32.mrf.mxu0
          %1500 = vmatprep.mubr.f32.mxu0 0.0
          %1501 = vmatmul.mubr.f32.gmra.mxu0 %v1423
          %v1502 = vpop.f32.mrf.mxu0
          %v1503 = vadd.f32 0.0, %v1502
          %v1504 = vpop.f32.mrf.mxu0
          %1505 = vmatprep.mubr.f32.mxu0 0.0
          %1506 = vmatmul.mubr.f32.gmra.mxu0 %v1426
          %v1507 = vpop.f32.mrf.mxu0
          %v1508 = vadd.f32 0.0, %v1507
          %v1509 = vpop.f32.mrf.mxu0
          %1510 = vmatprep.mubr.f32.mxu0 0.0
          %1511 = vmatmul.mubr.f32.gmra.mxu0 %v1429
          %v1512 = vpop.f32.mrf.mxu0
          %v1513 = vadd.f32 0.0, %v1512
          %v1514 = vpop.f32.mrf.mxu0
          %1515 = vdwg.mxu0
          %v1516 = vld [vmem:[%s8] sm:$0xff]
          %v1518 = vsel %vm1418, %v1498, 0
          %v1521 = vsel %vm1418, %v1503, 0
          %v1524 = vsel %vm1418, %v1508, 0
          %v1527 = vsel %vm1418, %v1513, 0
          %1529 = vmatprep.subr.mxu0 0.0
          %1530 = vmatpush1.msra.mxu0 0.0
          %1531 = vmatprep.subr.mxu0 0.0
          %1532 = vmatpush1.msra.mxu0 0.0
          %1533 = vmatprep.subr.mxu0 0.0
          %1534 = vmatpush1.msra.mxu0 0.0
          %1535 = vmatprep.subr.mxu0 0.0
          %1536 = vmatpush1.msra.mxu0 0.0
          %1537 = vmatprep.subr.mxu0 0.0
          %1538 = vmatpush1.msra.mxu0 0.0
          %1539 = vmatprep.subr.mxu0 0.0
          %1540 = vmatpush1.msra.mxu0 0.0
          %1541 = vmatprep.subr.mxu0 0.0
          %1542 = vmatpush1.msra.mxu0 0.0
          %1543 = vmatprep.subr.mxu0 0.0
          %1544 = vmatpush1.msra.mxu0 0.0
          %1545 = vmatprep.subr.mxu0 0.0
          %1546 = vmatpush1.msra.mxu0 0.0
          %1547 = vmatprep.subr.mxu0 0.0
          %1548 = vmatpush1.msra.mxu0 0.0
          %1549 = vmatprep.subr.mxu0 0.0
          %1550 = vmatpush1.msra.mxu0 0.0
          %1551 = vmatprep.subr.mxu0 0.0
          %1552 = vmatpush1.msra.mxu0 0.0
          %1553 = vmatprep.subr.mxu0 0.0
          %1554 = vmatpush1.msra.mxu0 0.0
          %1555 = vmatprep.subr.mxu0 0.0
          %1556 = vmatpush1.msra.mxu0 0.0
          %1557 = vmatprep.subr.mxu0 0.0
          %1558 = vmatpush1.msra.mxu0 0.0
          %1559 = vmatprep.subr.mxu0 0.0
          %1560 = vmatpush1.msra.mxu0 %v1516
          %1561 = vmatprep.subr.mxu0 0.0
          %1562 = vmatpush2.msra.mxu0 0.0
          %1563 = vmatprep.subr.mxu0 0.0
          %1564 = vmatpush2.msra.mxu0 0.0
          %1565 = vmatprep.subr.mxu0 0.0
          %1566 = vmatpush2.msra.mxu0 0.0
          %1567 = vmatprep.subr.mxu0 0.0
          %1568 = vmatpush2.msra.mxu0 0.0
          %1569 = vmatprep.subr.mxu0 0.0
          %1570 = vmatpush2.msra.mxu0 0.0
          %1571 = vmatprep.subr.mxu0 0.0
          %1572 = vmatpush2.msra.mxu0 0.0
          %1573 = vmatprep.subr.mxu0 0.0
          %1574 = vmatpush2.msra.mxu0 0.0
          %1575 = vmatprep.subr.mxu0 0.0
          %1576 = vmatpush2.msra.mxu0 0.0
          %1577 = vmatprep.subr.mxu0 0.0
          %1578 = vmatpush2.msra.mxu0 0.0
          %1579 = vmatprep.subr.mxu0 0.0
          %1580 = vmatpush2.msra.mxu0 0.0
          %1581 = vmatprep.subr.mxu0 0.0
          %1582 = vmatpush2.msra.mxu0 0.0
          %1583 = vmatprep.subr.mxu0 0.0
          %1584 = vmatpush2.msra.mxu0 0.0
          %1585 = vmatprep.subr.mxu0 0.0
          %1586 = vmatpush2.msra.mxu0 0.0
          %1587 = vmatprep.subr.mxu0 0.0
          %1588 = vmatpush2.msra.mxu0 0.0
          %1589 = vmatprep.subr.mxu0 0.0
          %1590 = vmatpush2.msra.mxu0 0.0
          %1591 = vmatprep.subr.mxu0 0.0
          %1592 = vmatpush2.msra.mxu0 0.0
          %1593 = vmatprep.mubr.f32.mxu0 0.0
          %1594 = vmatmul.mubr.f32.gmra.mxu0 %v1518
          %v1595 = vpop.f32.mrf.mxu0
          %v1596 = vadd.f32 0.0, %v1595
          %v1597 = vpop.f32.mrf.mxu0
          %1598 = vmatprep.mubr.f32.mxu0 0.0
          %1599 = vmatmul.mubr.f32.gmra.mxu0 %v1521
          %v1600 = vpop.f32.mrf.mxu0
          %v1601 = vadd.f32 0.0, %v1600
          %v1602 = vpop.f32.mrf.mxu0
          %1603 = vmatprep.mubr.f32.mxu0 0.0
          %1604 = vmatmul.mubr.f32.gmra.mxu0 %v1524
          %v1605 = vpop.f32.mrf.mxu0
          %v1606 = vadd.f32 0.0, %v1605
          %v1607 = vpop.f32.mrf.mxu0
          %1608 = vmatprep.mubr.f32.mxu0 0.0
          %1609 = vmatmul.mubr.f32.gmra.mxu0 %v1527
          %v1610 = vpop.f32.mrf.mxu0
          %v1611 = vadd.f32 0.0, %v1610
          %v1612 = vpop.f32.mrf.mxu0
          %1613 = vdwg.mxu0
          %1614 = vst.msk [vmem:[#allocation4] sm:$0xff] %vm774, %v1596
          %1615 = vst.msk [vmem:[#allocation4 + $0x8] sm:$0xff] %vm774, %v1601
          %1616 = vst.msk [vmem:[#allocation4 + $0x10] sm:$0xff] %vm774, %v1606
          %1617 = vst.msk [vmem:[#allocation4 + $0x18] sm:$0xff] %vm774, %v1611
          %1618 = vrot.lane.b32.xlu0 %v1498, 120
          %v1619 = vpop.permute.xlu0 %1618
          %1620 = vrot.lane.b32.xlu0 %v1503, 120
          %v1621 = vpop.permute.xlu0 %1620
          %1622 = vrot.lane.b32.xlu0 %v1508, 120
          %v1623 = vpop.permute.xlu0 %1622
          %1624 = vrot.lane.b32.xlu0 %v1513, 120
          %v1625 = vpop.permute.xlu0 %1624
          %v1626 = vsel %vm1418, %v1619, 0
          %v1628 = vsel %vm1418, %v1621, 0
          %v1630 = vsel %vm1418, %v1623, 0
          %v1632 = vsel %vm1418, %v1625, 0
          %1634 = vmatprep.subr.mxu0 0.0
          %1635 = vmatpush1.msra.mxu0 0.0
          %1636 = vmatprep.subr.mxu0 0.0
          %1637 = vmatpush1.msra.mxu0 0.0
          %1638 = vmatprep.subr.mxu0 0.0
          %1639 = vmatpush1.msra.mxu0 0.0
          %1640 = vmatprep.subr.mxu0 0.0
          %1641 = vmatpush1.msra.mxu0 0.0
          %1642 = vmatprep.subr.mxu0 0.0
          %1643 = vmatpush1.msra.mxu0 0.0
          %1644 = vmatprep.subr.mxu0 0.0
          %1645 = vmatpush1.msra.mxu0 0.0
          %1646 = vmatprep.subr.mxu0 0.0
          %1647 = vmatpush1.msra.mxu0 0.0
          %1648 = vmatprep.subr.mxu0 0.0
          %1649 = vmatpush1.msra.mxu0 0.0
          %1650 = vmatprep.subr.mxu0 0.0
          %1651 = vmatpush1.msra.mxu0 0.0
          %1652 = vmatprep.subr.mxu0 0.0
          %1653 = vmatpush1.msra.mxu0 0.0
          %1654 = vmatprep.subr.mxu0 0.0
          %1655 = vmatpush1.msra.mxu0 0.0
          %1656 = vmatprep.subr.mxu0 0.0
          %1657 = vmatpush1.msra.mxu0 0.0
          %1658 = vmatprep.subr.mxu0 0.0
          %1659 = vmatpush1.msra.mxu0 0.0
          %1660 = vmatprep.subr.mxu0 0.0
          %1661 = vmatpush1.msra.mxu0 0.0
          %1662 = vmatprep.subr.mxu0 0.0
          %1663 = vmatpush1.msra.mxu0 0.0
          %1664 = vmatprep.subr.mxu0 0.0
          %1665 = vmatpush1.msra.mxu0 %v1516
          %1666 = vmatprep.subr.mxu0 0.0
          %1667 = vmatpush2.msra.mxu0 0.0
          %1668 = vmatprep.subr.mxu0 0.0
          %1669 = vmatpush2.msra.mxu0 0.0
          %1670 = vmatprep.subr.mxu0 0.0
          %1671 = vmatpush2.msra.mxu0 0.0
          %1672 = vmatprep.subr.mxu0 0.0
          %1673 = vmatpush2.msra.mxu0 0.0
          %1674 = vmatprep.subr.mxu0 0.0
          %1675 = vmatpush2.msra.mxu0 0.0
          %1676 = vmatprep.subr.mxu0 0.0
          %1677 = vmatpush2.msra.mxu0 0.0
          %1678 = vmatprep.subr.mxu0 0.0
          %1679 = vmatpush2.msra.mxu0 0.0
          %1680 = vmatprep.subr.mxu0 0.0
          %1681 = vmatpush2.msra.mxu0 0.0
          %1682 = vmatprep.subr.mxu0 0.0
          %1683 = vmatpush2.msra.mxu0 0.0
          %1684 = vmatprep.subr.mxu0 0.0
          %1685 = vmatpush2.msra.mxu0 0.0
          %1686 = vmatprep.subr.mxu0 0.0
          %1687 = vmatpush2.msra.mxu0 0.0
          %1688 = vmatprep.subr.mxu0 0.0
          %1689 = vmatpush2.msra.mxu0 0.0
          %1690 = vmatprep.subr.mxu0 0.0
          %1691 = vmatpush2.msra.mxu0 0.0
          %1692 = vmatprep.subr.mxu0 0.0
          %1693 = vmatpush2.msra.mxu0 0.0
          %1694 = vmatprep.subr.mxu0 0.0
          %1695 = vmatpush2.msra.mxu0 0.0
          %1696 = vmatprep.subr.mxu0 0.0
          %1697 = vmatpush2.msra.mxu0 0.0
          %1698 = vmatprep.mubr.f32.mxu0 0.0
          %1699 = vmatmul.mubr.f32.gmra.mxu0 %v1626
          %v1700 = vpop.f32.mrf.mxu0
          %v1701 = vadd.f32 0.0, %v1700
          %v1702 = vpop.f32.mrf.mxu0
          %1703 = vmatprep.mubr.f32.mxu0 0.0
          %1704 = vmatmul.mubr.f32.gmra.mxu0 %v1628
          %v1705 = vpop.f32.mrf.mxu0
          %v1706 = vadd.f32 0.0, %v1705
          %v1707 = vpop.f32.mrf.mxu0
          %1708 = vmatprep.mubr.f32.mxu0 0.0
          %1709 = vmatmul.mubr.f32.gmra.mxu0 %v1630
          %v1710 = vpop.f32.mrf.mxu0
          %v1711 = vadd.f32 0.0, %v1710
          %v1712 = vpop.f32.mrf.mxu0
          %1713 = vmatprep.mubr.f32.mxu0 0.0
          %1714 = vmatmul.mubr.f32.gmra.mxu0 %v1632
          %v1715 = vpop.f32.mrf.mxu0
          %v1716 = vadd.f32 0.0, %v1715
          %v1717 = vpop.f32.mrf.mxu0
          %1718 = vdwg.mxu0
          %s1719 = scalar_lea.vmem [#allocation4], 32
          %1720 = vst.msk [vmem:[%s1719] sm:$0xff] %vm774, %v1701
          %1721 = vst.msk [vmem:[%s1719 + $0x8] sm:$0xff] %vm774, %v1706
          %1722 = vst.msk [vmem:[%s1719 + $0x10] sm:$0xff] %vm774, %v1711
          %1723 = vst.msk [vmem:[%s1719 + $0x18] sm:$0xff] %vm774, %v1716
          %1724 = vrot.lane.b32.xlu0 %v1498, 112
          %v1725 = vpop.permute.xlu0 %1724
          %1726 = vrot.lane.b32.xlu0 %v1503, 112
          %v1727 = vpop.permute.xlu0 %1726
          %1728 = vrot.lane.b32.xlu0 %v1508, 112
          %v1729 = vpop.permute.xlu0 %1728
          %1730 = vrot.lane.b32.xlu0 %v1513, 112
          %v1731 = vpop.permute.xlu0 %1730
          %v1732 = vsel %vm1418, %v1725, 0
          %v1734 = vsel %vm1418, %v1727, 0
          %v1736 = vsel %vm1418, %v1729, 0
          %v1738 = vsel %vm1418, %v1731, 0
          %1740 = vmatprep.subr.mxu0 0.0
          %1741 = vmatpush1.msra.mxu0 0.0
          %1742 = vmatprep.subr.mxu0 0.0
          %1743 = vmatpush1.msra.mxu0 0.0
          %1744 = vmatprep.subr.mxu0 0.0
          %1745 = vmatpush1.msra.mxu0 0.0
          %1746 = vmatprep.subr.mxu0 0.0
          %1747 = vmatpush1.msra.mxu0 0.0
          %1748 = vmatprep.subr.mxu0 0.0
          %1749 = vmatpush1.msra.mxu0 0.0
          %1750 = vmatprep.subr.mxu0 0.0
          %1751 = vmatpush1.msra.mxu0 0.0
          %1752 = vmatprep.subr.mxu0 0.0
          %1753 = vmatpush1.msra.mxu0 0.0
          %1754 = vmatprep.subr.mxu0 0.0
          %1755 = vmatpush1.msra.mxu0 0.0
          %1756 = vmatprep.subr.mxu0 0.0
          %1757 = vmatpush1.msra.mxu0 0.0
          %1758 = vmatprep.subr.mxu0 0.0
          %1759 = vmatpush1.msra.mxu0 0.0
          %1760 = vmatprep.subr.mxu0 0.0
          %1761 = vmatpush1.msra.mxu0 0.0
          %1762 = vmatprep.subr.mxu0 0.0
          %1763 = vmatpush1.msra.mxu0 0.0
          %1764 = vmatprep.subr.mxu0 0.0
          %1765 = vmatpush1.msra.mxu0 0.0
          %1766 = vmatprep.subr.mxu0 0.0
          %1767 = vmatpush1.msra.mxu0 0.0
          %1768 = vmatprep.subr.mxu0 0.0
          %1769 = vmatpush1.msra.mxu0 0.0
          %1770 = vmatprep.subr.mxu0 0.0
          %1771 = vmatpush1.msra.mxu0 %v1516
          %1772 = vmatprep.subr.mxu0 0.0
          %1773 = vmatpush2.msra.mxu0 0.0
          %1774 = vmatprep.subr.mxu0 0.0
          %1775 = vmatpush2.msra.mxu0 0.0
          %1776 = vmatprep.subr.mxu0 0.0
          %1777 = vmatpush2.msra.mxu0 0.0
          %1778 = vmatprep.subr.mxu0 0.0
          %1779 = vmatpush2.msra.mxu0 0.0
          %1780 = vmatprep.subr.mxu0 0.0
          %1781 = vmatpush2.msra.mxu0 0.0
          %1782 = vmatprep.subr.mxu0 0.0
          %1783 = vmatpush2.msra.mxu0 0.0
          %1784 = vmatprep.subr.mxu0 0.0
          %1785 = vmatpush2.msra.mxu0 0.0
          %1786 = vmatprep.subr.mxu0 0.0
          %1787 = vmatpush2.msra.mxu0 0.0
          %1788 = vmatprep.subr.mxu0 0.0
          %1789 = vmatpush2.msra.mxu0 0.0
          %1790 = vmatprep.subr.mxu0 0.0
          %1791 = vmatpush2.msra.mxu0 0.0
          %1792 = vmatprep.subr.mxu0 0.0
          %1793 = vmatpush2.msra.mxu0 0.0
          %1794 = vmatprep.subr.mxu0 0.0
          %1795 = vmatpush2.msra.mxu0 0.0
          %1796 = vmatprep.subr.mxu0 0.0
          %1797 = vmatpush2.msra.mxu0 0.0
          %1798 = vmatprep.subr.mxu0 0.0
          %1799 = vmatpush2.msra.mxu0 0.0
          %1800 = vmatprep.subr.mxu0 0.0
          %1801 = vmatpush2.msra.mxu0 0.0
          %1802 = vmatprep.subr.mxu0 0.0
          %1803 = vmatpush2.msra.mxu0 0.0
          %1804 = vmatprep.mubr.f32.mxu0 0.0
          %1805 = vmatmul.mubr.f32.gmra.mxu0 %v1732
          %v1806 = vpop.f32.mrf.mxu0
          %v1807 = vadd.f32 0.0, %v1806
          %v1808 = vpop.f32.mrf.mxu0
          %1809 = vmatprep.mubr.f32.mxu0 0.0
          %1810 = vmatmul.mubr.f32.gmra.mxu0 %v1734
          %v1811 = vpop.f32.mrf.mxu0
          %v1812 = vadd.f32 0.0, %v1811
          %v1813 = vpop.f32.mrf.mxu0
          %1814 = vmatprep.mubr.f32.mxu0 0.0
          %1815 = vmatmul.mubr.f32.gmra.mxu0 %v1736
          %v1816 = vpop.f32.mrf.mxu0
          %v1817 = vadd.f32 0.0, %v1816
          %v1818 = vpop.f32.mrf.mxu0
          %1819 = vmatprep.mubr.f32.mxu0 0.0
          %1820 = vmatmul.mubr.f32.gmra.mxu0 %v1738
          %v1821 = vpop.f32.mrf.mxu0
          %v1822 = vadd.f32 0.0, %v1821
          %v1823 = vpop.f32.mrf.mxu0
          %1824 = vdwg.mxu0
          %s1825 = scalar_lea.vmem [#allocation4], 64
          %1826 = vst.msk [vmem:[%s1825] sm:$0xff] %vm774, %v1807
          %1827 = vst.msk [vmem:[%s1825 + $0x8] sm:$0xff] %vm774, %v1812
          %1828 = vst.msk [vmem:[%s1825 + $0x10] sm:$0xff] %vm774, %v1817
          %1829 = vst.msk [vmem:[%s1825 + $0x18] sm:$0xff] %vm774, %v1822
          %1830 = vrot.lane.b32.xlu0 %v1498, 104
          %v1831 = vpop.permute.xlu0 %1830
          %1832 = vrot.lane.b32.xlu0 %v1503, 104
          %v1833 = vpop.permute.xlu0 %1832
          %1834 = vrot.lane.b32.xlu0 %v1508, 104
          %v1835 = vpop.permute.xlu0 %1834
          %1836 = vrot.lane.b32.xlu0 %v1513, 104
          %v1837 = vpop.permute.xlu0 %1836
          %v1838 = vsel %vm1418, %v1831, 0
          %v1840 = vsel %vm1418, %v1833, 0
          %v1842 = vsel %vm1418, %v1835, 0
          %v1844 = vsel %vm1418, %v1837, 0
          %1846 = vmatprep.subr.mxu0 0.0
          %1847 = vmatpush1.msra.mxu0 0.0
          %1848 = vmatprep.subr.mxu0 0.0
          %1849 = vmatpush1.msra.mxu0 0.0
          %1850 = vmatprep.subr.mxu0 0.0
          %1851 = vmatpush1.msra.mxu0 0.0
          %1852 = vmatprep.subr.mxu0 0.0
          %1853 = vmatpush1.msra.mxu0 0.0
          %1854 = vmatprep.subr.mxu0 0.0
          %1855 = vmatpush1.msra.mxu0 0.0
          %1856 = vmatprep.subr.mxu0 0.0
          %1857 = vmatpush1.msra.mxu0 0.0
          %1858 = vmatprep.subr.mxu0 0.0
          %1859 = vmatpush1.msra.mxu0 0.0
          %1860 = vmatprep.subr.mxu0 0.0
          %1861 = vmatpush1.msra.mxu0 0.0
          %1862 = vmatprep.subr.mxu0 0.0
          %1863 = vmatpush1.msra.mxu0 0.0
          %1864 = vmatprep.subr.mxu0 0.0
          %1865 = vmatpush1.msra.mxu0 0.0
          %1866 = vmatprep.subr.mxu0 0.0
          %1867 = vmatpush1.msra.mxu0 0.0
          %1868 = vmatprep.subr.mxu0 0.0
          %1869 = vmatpush1.msra.mxu0 0.0
          %1870 = vmatprep.subr.mxu0 0.0
          %1871 = vmatpush1.msra.mxu0 0.0
          %1872 = vmatprep.subr.mxu0 0.0
          %1873 = vmatpush1.msra.mxu0 0.0
          %1874 = vmatprep.subr.mxu0 0.0
          %1875 = vmatpush1.msra.mxu0 0.0
          %1876 = vmatprep.subr.mxu0 0.0
          %1877 = vmatpush1.msra.mxu0 %v1516
          %1878 = vmatprep.subr.mxu0 0.0
          %1879 = vmatpush2.msra.mxu0 0.0
          %1880 = vmatprep.subr.mxu0 0.0
          %1881 = vmatpush2.msra.mxu0 0.0
          %1882 = vmatprep.subr.mxu0 0.0
          %1883 = vmatpush2.msra.mxu0 0.0
          %1884 = vmatprep.subr.mxu0 0.0
          %1885 = vmatpush2.msra.mxu0 0.0
          %1886 = vmatprep.subr.mxu0 0.0
          %1887 = vmatpush2.msra.mxu0 0.0
          %1888 = vmatprep.subr.mxu0 0.0
          %1889 = vmatpush2.msra.mxu0 0.0
          %1890 = vmatprep.subr.mxu0 0.0
          %1891 = vmatpush2.msra.mxu0 0.0
          %1892 = vmatprep.subr.mxu0 0.0
          %1893 = vmatpush2.msra.mxu0 0.0
          %1894 = vmatprep.subr.mxu0 0.0
          %1895 = vmatpush2.msra.mxu0 0.0
          %1896 = vmatprep.subr.mxu0 0.0
          %1897 = vmatpush2.msra.mxu0 0.0
          %1898 = vmatprep.subr.mxu0 0.0
          %1899 = vmatpush2.msra.mxu0 0.0
          %1900 = vmatprep.subr.mxu0 0.0
          %1901 = vmatpush2.msra.mxu0 0.0
          %1902 = vmatprep.subr.mxu0 0.0
          %1903 = vmatpush2.msra.mxu0 0.0
          %1904 = vmatprep.subr.mxu0 0.0
          %1905 = vmatpush2.msra.mxu0 0.0
          %1906 = vmatprep.subr.mxu0 0.0
          %1907 = vmatpush2.msra.mxu0 0.0
          %1908 = vmatprep.subr.mxu0 0.0
          %1909 = vmatpush2.msra.mxu0 0.0
          %1910 = vmatprep.mubr.f32.mxu0 0.0
          %1911 = vmatmul.mubr.f32.gmra.mxu0 %v1838
          %v1912 = vpop.f32.mrf.mxu0
          %v1913 = vadd.f32 0.0, %v1912
          %v1914 = vpop.f32.mrf.mxu0
          %1915 = vmatprep.mubr.f32.mxu0 0.0
          %1916 = vmatmul.mubr.f32.gmra.mxu0 %v1840
          %v1917 = vpop.f32.mrf.mxu0
          %v1918 = vadd.f32 0.0, %v1917
          %v1919 = vpop.f32.mrf.mxu0
          %1920 = vmatprep.mubr.f32.mxu0 0.0
          %1921 = vmatmul.mubr.f32.gmra.mxu0 %v1842
          %v1922 = vpop.f32.mrf.mxu0
          %v1923 = vadd.f32 0.0, %v1922
          %v1924 = vpop.f32.mrf.mxu0
          %1925 = vmatprep.mubr.f32.mxu0 0.0
          %1926 = vmatmul.mubr.f32.gmra.mxu0 %v1844
          %v1927 = vpop.f32.mrf.mxu0
          %v1928 = vadd.f32 0.0, %v1927
          %v1929 = vpop.f32.mrf.mxu0
          %1930 = vdwg.mxu0
          %s1931 = scalar_lea.vmem [#allocation4], 96
          %1932 = vst.msk [vmem:[%s1931] sm:$0xff] %vm774, %v1913
          %1933 = vst.msk [vmem:[%s1931 + $0x8] sm:$0xff] %vm774, %v1918
          %1934 = vst.msk [vmem:[%s1931 + $0x10] sm:$0xff] %vm774, %v1923
          %1935 = vst.msk [vmem:[%s1931 + $0x18] sm:$0xff] %vm774, %v1928
          %1936 = vrot.lane.b32.xlu0 %v1498, 96
          %v1937 = vpop.permute.xlu0 %1936
          %1938 = vrot.lane.b32.xlu0 %v1503, 96
          %v1939 = vpop.permute.xlu0 %1938
          %1940 = vrot.lane.b32.xlu0 %v1508, 96
          %v1941 = vpop.permute.xlu0 %1940
          %1942 = vrot.lane.b32.xlu0 %v1513, 96
          %v1943 = vpop.permute.xlu0 %1942
          %v1944 = vsel %vm1418, %v1937, 0
          %v1946 = vsel %vm1418, %v1939, 0
          %v1948 = vsel %vm1418, %v1941, 0
          %v1950 = vsel %vm1418, %v1943, 0
          %1952 = vmatprep.subr.mxu0 0.0
          %1953 = vmatpush1.msra.mxu0 0.0
          %1954 = vmatprep.subr.mxu0 0.0
          %1955 = vmatpush1.msra.mxu0 0.0
          %1956 = vmatprep.subr.mxu0 0.0
          %1957 = vmatpush1.msra.mxu0 0.0
          %1958 = vmatprep.subr.mxu0 0.0
          %1959 = vmatpush1.msra.mxu0 0.0
          %1960 = vmatprep.subr.mxu0 0.0
          %1961 = vmatpush1.msra.mxu0 0.0
          %1962 = vmatprep.subr.mxu0 0.0
          %1963 = vmatpush1.msra.mxu0 0.0
          %1964 = vmatprep.subr.mxu0 0.0
          %1965 = vmatpush1.msra.mxu0 0.0
          %1966 = vmatprep.subr.mxu0 0.0
          %1967 = vmatpush1.msra.mxu0 0.0
          %1968 = vmatprep.subr.mxu0 0.0
          %1969 = vmatpush1.msra.mxu0 0.0
          %1970 = vmatprep.subr.mxu0 0.0
          %1971 = vmatpush1.msra.mxu0 0.0
          %1972 = vmatprep.subr.mxu0 0.0
          %1973 = vmatpush1.msra.mxu0 0.0
          %1974 = vmatprep.subr.mxu0 0.0
          %1975 = vmatpush1.msra.mxu0 0.0
          %1976 = vmatprep.subr.mxu0 0.0
          %1977 = vmatpush1.msra.mxu0 0.0
          %1978 = vmatprep.subr.mxu0 0.0
          %1979 = vmatpush1.msra.mxu0 0.0
          %1980 = vmatprep.subr.mxu0 0.0
          %1981 = vmatpush1.msra.mxu0 0.0
          %1982 = vmatprep.subr.mxu0 0.0
          %1983 = vmatpush1.msra.mxu0 %v1516
          %1984 = vmatprep.subr.mxu0 0.0
          %1985 = vmatpush2.msra.mxu0 0.0
          %1986 = vmatprep.subr.mxu0 0.0
          %1987 = vmatpush2.msra.mxu0 0.0
          %1988 = vmatprep.subr.mxu0 0.0
          %1989 = vmatpush2.msra.mxu0 0.0
          %1990 = vmatprep.subr.mxu0 0.0
          %1991 = vmatpush2.msra.mxu0 0.0
          %1992 = vmatprep.subr.mxu0 0.0
          %1993 = vmatpush2.msra.mxu0 0.0
          %1994 = vmatprep.subr.mxu0 0.0
          %1995 = vmatpush2.msra.mxu0 0.0
          %1996 = vmatprep.subr.mxu0 0.0
          %1997 = vmatpush2.msra.mxu0 0.0
          %1998 = vmatprep.subr.mxu0 0.0
          %1999 = vmatpush2.msra.mxu0 0.0
          %2000 = vmatprep.subr.mxu0 0.0
          %2001 = vmatpush2.msra.mxu0 0.0
          %2002 = vmatprep.subr.mxu0 0.0
          %2003 = vmatpush2.msra.mxu0 0.0
          %2004 = vmatprep.subr.mxu0 0.0
          %2005 = vmatpush2.msra.mxu0 0.0
          %2006 = vmatprep.subr.mxu0 0.0
          %2007 = vmatpush2.msra.mxu0 0.0
          %2008 = vmatprep.subr.mxu0 0.0
          %2009 = vmatpush2.msra.mxu0 0.0
          %2010 = vmatprep.subr.mxu0 0.0
          %2011 = vmatpush2.msra.mxu0 0.0
          %2012 = vmatprep.subr.mxu0 0.0
          %2013 = vmatpush2.msra.mxu0 0.0
          %2014 = vmatprep.subr.mxu0 0.0
          %2015 = vmatpush2.msra.mxu0 0.0
          %2016 = vmatprep.mubr.f32.mxu0 0.0
          %2017 = vmatmul.mubr.f32.gmra.mxu0 %v1944
          %v2018 = vpop.f32.mrf.mxu0
          %v2019 = vadd.f32 0.0, %v2018
          %v2020 = vpop.f32.mrf.mxu0
          %2021 = vmatprep.mubr.f32.mxu0 0.0
          %2022 = vmatmul.mubr.f32.gmra.mxu0 %v1946
          %v2023 = vpop.f32.mrf.mxu0
          %v2024 = vadd.f32 0.0, %v2023
          %v2025 = vpop.f32.mrf.mxu0
          %2026 = vmatprep.mubr.f32.mxu0 0.0
          %2027 = vmatmul.mubr.f32.gmra.mxu0 %v1948
          %v2028 = vpop.f32.mrf.mxu0
          %v2029 = vadd.f32 0.0, %v2028
          %v2030 = vpop.f32.mrf.mxu0
          %2031 = vmatprep.mubr.f32.mxu0 0.0
          %2032 = vmatmul.mubr.f32.gmra.mxu0 %v1950
          %v2033 = vpop.f32.mrf.mxu0
          %v2034 = vadd.f32 0.0, %v2033
          %v2035 = vpop.f32.mrf.mxu0
          %2036 = vdwg.mxu0
          %s2037 = scalar_lea.vmem [#allocation4], 128
          %2038 = vst.msk [vmem:[%s2037] sm:$0xff] %vm774, %v2019
          %2039 = vst.msk [vmem:[%s2037 + $0x8] sm:$0xff] %vm774, %v2024
          %2040 = vst.msk [vmem:[%s2037 + $0x10] sm:$0xff] %vm774, %v2029
          %2041 = vst.msk [vmem:[%s2037 + $0x18] sm:$0xff] %vm774, %v2034
          %2042 = vrot.lane.b32.xlu0 %v1498, 88
          %v2043 = vpop.permute.xlu0 %2042
          %2044 = vrot.lane.b32.xlu0 %v1503, 88
          %v2045 = vpop.permute.xlu0 %2044
          %2046 = vrot.lane.b32.xlu0 %v1508, 88
          %v2047 = vpop.permute.xlu0 %2046
          %2048 = vrot.lane.b32.xlu0 %v1513, 88
          %v2049 = vpop.permute.xlu0 %2048
          %v2050 = vsel %vm1418, %v2043, 0
          %v2052 = vsel %vm1418, %v2045, 0
          %v2054 = vsel %vm1418, %v2047, 0
          %v2056 = vsel %vm1418, %v2049, 0
          %2058 = vmatprep.subr.mxu0 0.0
          %2059 = vmatpush1.msra.mxu0 0.0
          %2060 = vmatprep.subr.mxu0 0.0
          %2061 = vmatpush1.msra.mxu0 0.0
          %2062 = vmatprep.subr.mxu0 0.0
          %2063 = vmatpush1.msra.mxu0 0.0
          %2064 = vmatprep.subr.mxu0 0.0
          %2065 = vmatpush1.msra.mxu0 0.0
          %2066 = vmatprep.subr.mxu0 0.0
          %2067 = vmatpush1.msra.mxu0 0.0
          %2068 = vmatprep.subr.mxu0 0.0
          %2069 = vmatpush1.msra.mxu0 0.0
          %2070 = vmatprep.subr.mxu0 0.0
          %2071 = vmatpush1.msra.mxu0 0.0
          %2072 = vmatprep.subr.mxu0 0.0
          %2073 = vmatpush1.msra.mxu0 0.0
          %2074 = vmatprep.subr.mxu0 0.0
          %2075 = vmatpush1.msra.mxu0 0.0
          %2076 = vmatprep.subr.mxu0 0.0
          %2077 = vmatpush1.msra.mxu0 0.0
          %2078 = vmatprep.subr.mxu0 0.0
          %2079 = vmatpush1.msra.mxu0 0.0
          %2080 = vmatprep.subr.mxu0 0.0
          %2081 = vmatpush1.msra.mxu0 0.0
          %2082 = vmatprep.subr.mxu0 0.0
          %2083 = vmatpush1.msra.mxu0 0.0
          %2084 = vmatprep.subr.mxu0 0.0
          %2085 = vmatpush1.msra.mxu0 0.0
          %2086 = vmatprep.subr.mxu0 0.0
          %2087 = vmatpush1.msra.mxu0 0.0
          %2088 = vmatprep.subr.mxu0 0.0
          %2089 = vmatpush1.msra.mxu0 %v1516
          %2090 = vmatprep.subr.mxu0 0.0
          %2091 = vmatpush2.msra.mxu0 0.0
          %2092 = vmatprep.subr.mxu0 0.0
          %2093 = vmatpush2.msra.mxu0 0.0
          %2094 = vmatprep.subr.mxu0 0.0
          %2095 = vmatpush2.msra.mxu0 0.0
          %2096 = vmatprep.subr.mxu0 0.0
          %2097 = vmatpush2.msra.mxu0 0.0
          %2098 = vmatprep.subr.mxu0 0.0
          %2099 = vmatpush2.msra.mxu0 0.0
          %2100 = vmatprep.subr.mxu0 0.0
          %2101 = vmatpush2.msra.mxu0 0.0
          %2102 = vmatprep.subr.mxu0 0.0
          %2103 = vmatpush2.msra.mxu0 0.0
          %2104 = vmatprep.subr.mxu0 0.0
          %2105 = vmatpush2.msra.mxu0 0.0
          %2106 = vmatprep.subr.mxu0 0.0
          %2107 = vmatpush2.msra.mxu0 0.0
          %2108 = vmatprep.subr.mxu0 0.0
          %2109 = vmatpush2.msra.mxu0 0.0
          %2110 = vmatprep.subr.mxu0 0.0
          %2111 = vmatpush2.msra.mxu0 0.0
          %2112 = vmatprep.subr.mxu0 0.0
          %2113 = vmatpush2.msra.mxu0 0.0
          %2114 = vmatprep.subr.mxu0 0.0
          %2115 = vmatpush2.msra.mxu0 0.0
          %2116 = vmatprep.subr.mxu0 0.0
          %2117 = vmatpush2.msra.mxu0 0.0
          %2118 = vmatprep.subr.mxu0 0.0
          %2119 = vmatpush2.msra.mxu0 0.0
          %2120 = vmatprep.subr.mxu0 0.0
          %2121 = vmatpush2.msra.mxu0 0.0
          %2122 = vmatprep.mubr.f32.mxu0 0.0
          %2123 = vmatmul.mubr.f32.gmra.mxu0 %v2050
          %v2124 = vpop.f32.mrf.mxu0
          %v2125 = vadd.f32 0.0, %v2124
          %v2126 = vpop.f32.mrf.mxu0
          %2127 = vmatprep.mubr.f32.mxu0 0.0
          %2128 = vmatmul.mubr.f32.gmra.mxu0 %v2052
          %v2129 = vpop.f32.mrf.mxu0
          %v2130 = vadd.f32 0.0, %v2129
          %v2131 = vpop.f32.mrf.mxu0
          %2132 = vmatprep.mubr.f32.mxu0 0.0
          %2133 = vmatmul.mubr.f32.gmra.mxu0 %v2054
          %v2134 = vpop.f32.mrf.mxu0
          %v2135 = vadd.f32 0.0, %v2134
          %v2136 = vpop.f32.mrf.mxu0
          %2137 = vmatprep.mubr.f32.mxu0 0.0
          %2138 = vmatmul.mubr.f32.gmra.mxu0 %v2056
          %v2139 = vpop.f32.mrf.mxu0
          %v2140 = vadd.f32 0.0, %v2139
          %v2141 = vpop.f32.mrf.mxu0
          %2142 = vdwg.mxu0
          %s2143 = scalar_lea.vmem [#allocation4], 160
          %2144 = vst.msk [vmem:[%s2143] sm:$0xff] %vm774, %v2125
          %2145 = vst.msk [vmem:[%s2143 + $0x8] sm:$0xff] %vm774, %v2130
          %2146 = vst.msk [vmem:[%s2143 + $0x10] sm:$0xff] %vm774, %v2135
          %2147 = vst.msk [vmem:[%s2143 + $0x18] sm:$0xff] %vm774, %v2140
          %2148 = vrot.lane.b32.xlu0 %v1498, 80
          %v2149 = vpop.permute.xlu0 %2148
          %2150 = vrot.lane.b32.xlu0 %v1503, 80
          %v2151 = vpop.permute.xlu0 %2150
          %2152 = vrot.lane.b32.xlu0 %v1508, 80
          %v2153 = vpop.permute.xlu0 %2152
          %2154 = vrot.lane.b32.xlu0 %v1513, 80
          %v2155 = vpop.permute.xlu0 %2154
          %v2156 = vsel %vm1418, %v2149, 0
          %v2158 = vsel %vm1418, %v2151, 0
          %v2160 = vsel %vm1418, %v2153, 0
          %v2162 = vsel %vm1418, %v2155, 0
          %2164 = vmatprep.subr.mxu0 0.0
          %2165 = vmatpush1.msra.mxu0 0.0
          %2166 = vmatprep.subr.mxu0 0.0
          %2167 = vmatpush1.msra.mxu0 0.0
          %2168 = vmatprep.subr.mxu0 0.0
          %2169 = vmatpush1.msra.mxu0 0.0
          %2170 = vmatprep.subr.mxu0 0.0
          %2171 = vmatpush1.msra.mxu0 0.0
          %2172 = vmatprep.subr.mxu0 0.0
          %2173 = vmatpush1.msra.mxu0 0.0
          %2174 = vmatprep.subr.mxu0 0.0
          %2175 = vmatpush1.msra.mxu0 0.0
          %2176 = vmatprep.subr.mxu0 0.0
          %2177 = vmatpush1.msra.mxu0 0.0
          %2178 = vmatprep.subr.mxu0 0.0
          %2179 = vmatpush1.msra.mxu0 0.0
          %2180 = vmatprep.subr.mxu0 0.0
          %2181 = vmatpush1.msra.mxu0 0.0
          %2182 = vmatprep.subr.mxu0 0.0
          %2183 = vmatpush1.msra.mxu0 0.0
          %2184 = vmatprep.subr.mxu0 0.0
          %2185 = vmatpush1.msra.mxu0 0.0
          %2186 = vmatprep.subr.mxu0 0.0
          %2187 = vmatpush1.msra.mxu0 0.0
          %2188 = vmatprep.subr.mxu0 0.0
          %2189 = vmatpush1.msra.mxu0 0.0
          %2190 = vmatprep.subr.mxu0 0.0
          %2191 = vmatpush1.msra.mxu0 0.0
          %2192 = vmatprep.subr.mxu0 0.0
          %2193 = vmatpush1.msra.mxu0 0.0
          %2194 = vmatprep.subr.mxu0 0.0
          %2195 = vmatpush1.msra.mxu0 %v1516
          %2196 = vmatprep.subr.mxu0 0.0
          %2197 = vmatpush2.msra.mxu0 0.0
          %2198 = vmatprep.subr.mxu0 0.0
          %2199 = vmatpush2.msra.mxu0 0.0
          %2200 = vmatprep.subr.mxu0 0.0
          %2201 = vmatpush2.msra.mxu0 0.0
          %2202 = vmatprep.subr.mxu0 0.0
          %2203 = vmatpush2.msra.mxu0 0.0
          %2204 = vmatprep.subr.mxu0 0.0
          %2205 = vmatpush2.msra.mxu0 0.0
          %2206 = vmatprep.subr.mxu0 0.0
          %2207 = vmatpush2.msra.mxu0 0.0
          %2208 = vmatprep.subr.mxu0 0.0
          %2209 = vmatpush2.msra.mxu0 0.0
          %2210 = vmatprep.subr.mxu0 0.0
          %2211 = vmatpush2.msra.mxu0 0.0
          %2212 = vmatprep.subr.mxu0 0.0
          %2213 = vmatpush2.msra.mxu0 0.0
          %2214 = vmatprep.subr.mxu0 0.0
          %2215 = vmatpush2.msra.mxu0 0.0
          %2216 = vmatprep.subr.mxu0 0.0
          %2217 = vmatpush2.msra.mxu0 0.0
          %2218 = vmatprep.subr.mxu0 0.0
          %2219 = vmatpush2.msra.mxu0 0.0
          %2220 = vmatprep.subr.mxu0 0.0
          %2221 = vmatpush2.msra.mxu0 0.0
          %2222 = vmatprep.subr.mxu0 0.0
          %2223 = vmatpush2.msra.mxu0 0.0
          %2224 = vmatprep.subr.mxu0 0.0
          %2225 = vmatpush2.msra.mxu0 0.0
          %2226 = vmatprep.subr.mxu0 0.0
          %2227 = vmatpush2.msra.mxu0 0.0
          %2228 = vmatprep.mubr.f32.mxu0 0.0
          %2229 = vmatmul.mubr.f32.gmra.mxu0 %v2156
          %v2230 = vpop.f32.mrf.mxu0
          %v2231 = vadd.f32 0.0, %v2230
          %v2232 = vpop.f32.mrf.mxu0
          %2233 = vmatprep.mubr.f32.mxu0 0.0
          %2234 = vmatmul.mubr.f32.gmra.mxu0 %v2158
          %v2235 = vpop.f32.mrf.mxu0
          %v2236 = vadd.f32 0.0, %v2235
          %v2237 = vpop.f32.mrf.mxu0
          %2238 = vmatprep.mubr.f32.mxu0 0.0
          %2239 = vmatmul.mubr.f32.gmra.mxu0 %v2160
          %v2240 = vpop.f32.mrf.mxu0
          %v2241 = vadd.f32 0.0, %v2240
          %v2242 = vpop.f32.mrf.mxu0
          %2243 = vmatprep.mubr.f32.mxu0 0.0
          %2244 = vmatmul.mubr.f32.gmra.mxu0 %v2162
          %v2245 = vpop.f32.mrf.mxu0
          %v2246 = vadd.f32 0.0, %v2245
          %v2247 = vpop.f32.mrf.mxu0
          %2248 = vdwg.mxu0
          %s2249 = scalar_lea.vmem [#allocation4], 192
          %2250 = vst.msk [vmem:[%s2249] sm:$0xff] %vm774, %v2231
          %2251 = vst.msk [vmem:[%s2249 + $0x8] sm:$0xff] %vm774, %v2236
          %2252 = vst.msk [vmem:[%s2249 + $0x10] sm:$0xff] %vm774, %v2241
          %2253 = vst.msk [vmem:[%s2249 + $0x18] sm:$0xff] %vm774, %v2246
          %2254 = vrot.lane.b32.xlu0 %v1498, 72
          %v2255 = vpop.permute.xlu0 %2254
          %2256 = vrot.lane.b32.xlu0 %v1503, 72
          %v2257 = vpop.permute.xlu0 %2256
          %2258 = vrot.lane.b32.xlu0 %v1508, 72
          %v2259 = vpop.permute.xlu0 %2258
          %2260 = vrot.lane.b32.xlu0 %v1513, 72
          %v2261 = vpop.permute.xlu0 %2260
          %v2262 = vsel %vm1418, %v2255, 0
          %v2264 = vsel %vm1418, %v2257, 0
          %v2266 = vsel %vm1418, %v2259, 0
          %v2268 = vsel %vm1418, %v2261, 0
          %2270 = vmatprep.subr.mxu0 0.0
          %2271 = vmatpush1.msra.mxu0 0.0
          %2272 = vmatprep.subr.mxu0 0.0
          %2273 = vmatpush1.msra.mxu0 0.0
          %2274 = vmatprep.subr.mxu0 0.0
          %2275 = vmatpush1.msra.mxu0 0.0
          %2276 = vmatprep.subr.mxu0 0.0
          %2277 = vmatpush1.msra.mxu0 0.0
          %2278 = vmatprep.subr.mxu0 0.0
          %2279 = vmatpush1.msra.mxu0 0.0
          %2280 = vmatprep.subr.mxu0 0.0
          %2281 = vmatpush1.msra.mxu0 0.0
          %2282 = vmatprep.subr.mxu0 0.0
          %2283 = vmatpush1.msra.mxu0 0.0
          %2284 = vmatprep.subr.mxu0 0.0
          %2285 = vmatpush1.msra.mxu0 0.0
          %2286 = vmatprep.subr.mxu0 0.0
          %2287 = vmatpush1.msra.mxu0 0.0
          %2288 = vmatprep.subr.mxu0 0.0
          %2289 = vmatpush1.msra.mxu0 0.0
          %2290 = vmatprep.subr.mxu0 0.0
          %2291 = vmatpush1.msra.mxu0 0.0
          %2292 = vmatprep.subr.mxu0 0.0
          %2293 = vmatpush1.msra.mxu0 0.0
          %2294 = vmatprep.subr.mxu0 0.0
          %2295 = vmatpush1.msra.mxu0 0.0
          %2296 = vmatprep.subr.mxu0 0.0
          %2297 = vmatpush1.msra.mxu0 0.0
          %2298 = vmatprep.subr.mxu0 0.0
          %2299 = vmatpush1.msra.mxu0 0.0
          %2300 = vmatprep.subr.mxu0 0.0
          %2301 = vmatpush1.msra.mxu0 %v1516
          %2302 = vmatprep.subr.mxu0 0.0
          %2303 = vmatpush2.msra.mxu0 0.0
          %2304 = vmatprep.subr.mxu0 0.0
          %2305 = vmatpush2.msra.mxu0 0.0
          %2306 = vmatprep.subr.mxu0 0.0
          %2307 = vmatpush2.msra.mxu0 0.0
          %2308 = vmatprep.subr.mxu0 0.0
          %2309 = vmatpush2.msra.mxu0 0.0
          %2310 = vmatprep.subr.mxu0 0.0
          %2311 = vmatpush2.msra.mxu0 0.0
          %2312 = vmatprep.subr.mxu0 0.0
          %2313 = vmatpush2.msra.mxu0 0.0
          %2314 = vmatprep.subr.mxu0 0.0
          %2315 = vmatpush2.msra.mxu0 0.0
          %2316 = vmatprep.subr.mxu0 0.0
          %2317 = vmatpush2.msra.mxu0 0.0
          %2318 = vmatprep.subr.mxu0 0.0
          %2319 = vmatpush2.msra.mxu0 0.0
          %2320 = vmatprep.subr.mxu0 0.0
          %2321 = vmatpush2.msra.mxu0 0.0
          %2322 = vmatprep.subr.mxu0 0.0
          %2323 = vmatpush2.msra.mxu0 0.0
          %2324 = vmatprep.subr.mxu0 0.0
          %2325 = vmatpush2.msra.mxu0 0.0
          %2326 = vmatprep.subr.mxu0 0.0
          %2327 = vmatpush2.msra.mxu0 0.0
          %2328 = vmatprep.subr.mxu0 0.0
          %2329 = vmatpush2.msra.mxu0 0.0
          %2330 = vmatprep.subr.mxu0 0.0
          %2331 = vmatpush2.msra.mxu0 0.0
          %2332 = vmatprep.subr.mxu0 0.0
          %2333 = vmatpush2.msra.mxu0 0.0
          %2334 = vmatprep.mubr.f32.mxu0 0.0
          %2335 = vmatmul.mubr.f32.gmra.mxu0 %v2262
          %v2336 = vpop.f32.mrf.mxu0
          %v2337 = vadd.f32 0.0, %v2336
          %v2338 = vpop.f32.mrf.mxu0
          %2339 = vmatprep.mubr.f32.mxu0 0.0
          %2340 = vmatmul.mubr.f32.gmra.mxu0 %v2264
          %v2341 = vpop.f32.mrf.mxu0
          %v2342 = vadd.f32 0.0, %v2341
          %v2343 = vpop.f32.mrf.mxu0
          %2344 = vmatprep.mubr.f32.mxu0 0.0
          %2345 = vmatmul.mubr.f32.gmra.mxu0 %v2266
          %v2346 = vpop.f32.mrf.mxu0
          %v2347 = vadd.f32 0.0, %v2346
          %v2348 = vpop.f32.mrf.mxu0
          %2349 = vmatprep.mubr.f32.mxu0 0.0
          %2350 = vmatmul.mubr.f32.gmra.mxu0 %v2268
          %v2351 = vpop.f32.mrf.mxu0
          %v2352 = vadd.f32 0.0, %v2351
          %v2353 = vpop.f32.mrf.mxu0
          %2354 = vdwg.mxu0
          %s2355 = scalar_lea.vmem [#allocation4], 224
          %2356 = vst.msk [vmem:[%s2355] sm:$0xff] %vm774, %v2337
          %2357 = vst.msk [vmem:[%s2355 + $0x8] sm:$0xff] %vm774, %v2342
          %2358 = vst.msk [vmem:[%s2355 + $0x10] sm:$0xff] %vm774, %v2347
          %2359 = vst.msk [vmem:[%s2355 + $0x18] sm:$0xff] %vm774, %v2352
        $region80: #{tpu_custom_call.1} parent=75 // pred_fallthru
          _
        %v2360 = vld [vmem:[%s9] sm:$0xff]
        %v2361 = vld [vmem:[%s9 + $0x8] sm:$0xff]
        %v2362 = vld [vmem:[%s9 + $0x10] sm:$0xff]
        %v2363 = vld [vmem:[%s9 + $0x18] sm:$0xff]
        %v2364 = vld [vmem:[%s546] sm:$0xf]
        %vm2365 = vcmask 31744
        %v2367 = vsel %vm2365, %v2360, 0
        %v2370 = vsel %vm2365, %v2361, 0
        %v2373 = vsel %vm2365, %v2362, 0
        %v2376 = vsel %vm2365, %v2363, 0
        %vm2378 = vcmask 1043456
        %v2380 = vsel %vm2378, %v2364, 0
        %2382 = vmatprep.subr.mxu0 0.0
        %2383 = vmatpush1.msra.mxu0 0.0
        %2384 = vmatprep.subr.mxu0 0.0
        %2385 = vmatpush1.msra.mxu0 0.0
        %2386 = vmatprep.subr.mxu0 0.0
        %2387 = vmatpush1.msra.mxu0 0.0
        %2388 = vmatprep.subr.mxu0 0.0
        %2389 = vmatpush1.msra.mxu0 0.0
        %2390 = vmatprep.subr.mxu0 0.0
        %2391 = vmatpush1.msra.mxu0 0.0
        %2392 = vmatprep.subr.mxu0 0.0
        %2393 = vmatpush1.msra.mxu0 0.0
        %2394 = vmatprep.subr.mxu0 0.0
        %2395 = vmatpush1.msra.mxu0 0.0
        %2396 = vmatprep.subr.mxu0 0.0
        %2397 = vmatpush1.msra.mxu0 0.0
        %2398 = vmatprep.subr.mxu0 0.0
        %2399 = vmatpush1.msra.mxu0 0.0
        %2400 = vmatprep.subr.mxu0 0.0
        %2401 = vmatpush1.msra.mxu0 0.0
        %2402 = vmatprep.subr.mxu0 0.0
        %2403 = vmatpush1.msra.mxu0 0.0
        %2404 = vmatprep.subr.mxu0 0.0
        %2405 = vmatpush1.msra.mxu0 0.0
        %2406 = vmatprep.subr.mxu0 0.0
        %2407 = vmatpush1.msra.mxu0 0.0
        %2408 = vmatprep.subr.mxu0 0.0
        %2409 = vmatpush1.msra.mxu0 0.0
        %2410 = vmatprep.subr.mxu0 0.0
        %2411 = vmatpush1.msra.mxu0 0.0
        %2412 = vmatprep.subr.mxu0 0.0
        %2413 = vmatpush1.msra.mxu0 %v2380
        %2414 = vmatprep.subr.mxu0 0.0
        %2415 = vmatpush2.msra.mxu0 0.0
        %2416 = vmatprep.subr.mxu0 0.0
        %2417 = vmatpush2.msra.mxu0 0.0
        %2418 = vmatprep.subr.mxu0 0.0
        %2419 = vmatpush2.msra.mxu0 0.0
        %2420 = vmatprep.subr.mxu0 0.0
        %2421 = vmatpush2.msra.mxu0 0.0
        %2422 = vmatprep.subr.mxu0 0.0
        %2423 = vmatpush2.msra.mxu0 0.0
        %2424 = vmatprep.subr.mxu0 0.0
        %2425 = vmatpush2.msra.mxu0 0.0
        %2426 = vmatprep.subr.mxu0 0.0
        %2427 = vmatpush2.msra.mxu0 0.0
        %2428 = vmatprep.subr.mxu0 0.0
        %2429 = vmatpush2.msra.mxu0 0.0
        %2430 = vmatprep.subr.mxu0 0.0
        %2431 = vmatpush2.msra.mxu0 0.0
        %2432 = vmatprep.subr.mxu0 0.0
        %2433 = vmatpush2.msra.mxu0 0.0
        %2434 = vmatprep.subr.mxu0 0.0
        %2435 = vmatpush2.msra.mxu0 0.0
        %2436 = vmatprep.subr.mxu0 0.0
        %2437 = vmatpush2.msra.mxu0 0.0
        %2438 = vmatprep.subr.mxu0 0.0
        %2439 = vmatpush2.msra.mxu0 0.0
        %2440 = vmatprep.subr.mxu0 0.0
        %2441 = vmatpush2.msra.mxu0 0.0
        %2442 = vmatprep.subr.mxu0 0.0
        %2443 = vmatpush2.msra.mxu0 0.0
        %2444 = vmatprep.subr.mxu0 0.0
        %2445 = vmatpush2.msra.mxu0 0.0
        %2446 = vmatprep.mubr.f32.mxu0 0.0
        %2447 = vmatmul.mubr.f32.gmra.mxu0 %v2367
        %v2448 = vpop.f32.mrf.mxu0
        %v2449 = vadd.f32 0.0, %v2448
        %v2450 = vpop.f32.mrf.mxu0
        %2451 = vmatprep.mubr.f32.mxu0 0.0
        %2452 = vmatmul.mubr.f32.gmra.mxu0 %v2370
        %v2453 = vpop.f32.mrf.mxu0
        %v2454 = vadd.f32 0.0, %v2453
        %v2455 = vpop.f32.mrf.mxu0
        %2456 = vmatprep.mubr.f32.mxu0 0.0
        %2457 = vmatmul.mubr.f32.gmra.mxu0 %v2373
        %v2458 = vpop.f32.mrf.mxu0
        %v2459 = vadd.f32 0.0, %v2458
        %v2460 = vpop.f32.mrf.mxu0
        %2461 = vmatprep.mubr.f32.mxu0 0.0
        %2462 = vmatmul.mubr.f32.gmra.mxu0 %v2376
        %v2463 = vpop.f32.mrf.mxu0
        %v2464 = vadd.f32 0.0, %v2463
        %v2465 = vpop.f32.mrf.mxu0
        %2466 = vdwg.mxu0
        %s2467 = smul.u32 %s47, 8
        %s2468 = sld [smem:[#allocation7 + %s2467]]
        %s2469 = sld [smem:[#allocation8 + %s2467]]
        %s2470 = sadd.s32 %s2468, 1
        %p2471 = scmp.lt.s32.totalorder %s2470, 1
        %s2472 = scalar_select %p2471, %s2470, 1
        %s2473 = ssub.f32 1.0, %s2469
        %s2474 = smul.u32 %s2468, 32
        %s2475 = scalar_lea.vmem [#allocation2], %s2474
        %v2476 = vld [vmem:[%s2475] sm:$0xff]
        %v2477 = vld [vmem:[%s2475 + $0x8] sm:$0xff]
        %v2478 = vld [vmem:[%s2475 + $0x10] sm:$0xff]
        %v2479 = vld [vmem:[%s2475 + $0x18] sm:$0xff]
        %v2480 = vstv %s2473
        %v2481 = vmul.f32 %v2480, %v2476
        %v2482 = vmul.f32 %v2480, %v2477
        %v2483 = vmul.f32 %v2480, %v2478
        %v2484 = vmul.f32 %v2480, %v2479
        %v2485 = vadd.f32 %v2449, %v2481
        %v2486 = vadd.f32 %v2454, %v2482
        %v2487 = vadd.f32 %v2459, %v2483
        %v2488 = vadd.f32 %v2464, %v2484
        %s2489 = smul.u32 %s2472, 32
        %s2490 = scalar_lea.vmem [#allocation2], %s2489
        %v2491 = vld [vmem:[%s2490] sm:$0xff]
        %v2492 = vld [vmem:[%s2490 + $0x8] sm:$0xff]
        %v2493 = vld [vmem:[%s2490 + $0x10] sm:$0xff]
        %v2494 = vld [vmem:[%s2490 + $0x18] sm:$0xff]
        %v2495 = vstv %s2469
        %v2496 = vmul.f32 %v2495, %v2491
        %v2497 = vmul.f32 %v2495, %v2492
        %v2498 = vmul.f32 %v2495, %v2493
        %v2499 = vmul.f32 %v2495, %v2494
        %v2500 = vadd.f32 %v2485, %v2496
        %v2501 = vadd.f32 %v2486, %v2497
        %v2502 = vadd.f32 %v2487, %v2498
        %v2503 = vadd.f32 %v2488, %v2499
        %s2504 = sshra.s32 %s2467, 7
        %s2505 = sand.u32 %s2467, 127
        %s2506 = sadd.s32 %s2504, 1
        %s2507 = smul.u32 %s2506, 128
        %s2508 = sshra.s32 %s2467, 7
        %s2509 = sand.u32 %s2467, 127
        %s2510 = sadd.s32 %s2507, %s2509
        %s2511 = sld [smem:[#allocation7 + %s2510]]
        %s2512 = sld [smem:[#allocation8 + %s2510]]
        %s2513 = sadd.s32 %s2511, 1
        %p2514 = scmp.lt.s32.totalorder %s2513, 3
        %s2515 = scalar_select %p2514, %s2513, 3
        %s2516 = ssub.f32 1.0, %s2512
        %s2517 = smul.u32 %s2511, 32
        %s2518 = scalar_lea.vmem [#allocation3], %s2517
        %v2519 = vld [vmem:[%s2518] sm:$0xff]
        %v2520 = vld [vmem:[%s2518 + $0x8] sm:$0xff]
        %v2521 = vld [vmem:[%s2518 + $0x10] sm:$0xff]
        %v2522 = vld [vmem:[%s2518 + $0x18] sm:$0xff]
        %v2523 = vstv %s2516
        %v2524 = vmul.f32 %v2523, %v2519
        %v2525 = vmul.f32 %v2523, %v2520
        %v2526 = vmul.f32 %v2523, %v2521
        %v2527 = vmul.f32 %v2523, %v2522
        %v2528 = vadd.f32 %v2500, %v2524
        %v2529 = vadd.f32 %v2501, %v2525
        %v2530 = vadd.f32 %v2502, %v2526
        %v2531 = vadd.f32 %v2503, %v2527
        %s2532 = smul.u32 %s2515, 32
        %s2533 = scalar_lea.vmem [#allocation3], %s2532
        %v2534 = vld [vmem:[%s2533] sm:$0xff]
        %v2535 = vld [vmem:[%s2533 + $0x8] sm:$0xff]
        %v2536 = vld [vmem:[%s2533 + $0x10] sm:$0xff]
        %v2537 = vld [vmem:[%s2533 + $0x18] sm:$0xff]
        %v2538 = vstv %s2512
        %v2539 = vmul.f32 %v2538, %v2534
        %v2540 = vmul.f32 %v2538, %v2535
        %v2541 = vmul.f32 %v2538, %v2536
        %v2542 = vmul.f32 %v2538, %v2537
        %v2543 = vadd.f32 %v2528, %v2539
        %v2544 = vadd.f32 %v2529, %v2540
        %v2545 = vadd.f32 %v2530, %v2541
        %v2546 = vadd.f32 %v2531, %v2542
        %s2547 = sadd.s32 %s2504, 2
        %s2548 = smul.u32 %s2547, 128
        %s2549 = sadd.s32 %s2548, %s2509
        %s2550 = sld [smem:[#allocation7 + %s2549]]
        %s2551 = sld [smem:[#allocation8 + %s2549]]
        %s2552 = sadd.s32 %s2550, 1
        %p2553 = scmp.lt.s32.totalorder %s2552, 7
        %s2554 = scalar_select %p2553, %s2552, 7
        %s2555 = ssub.f32 1.0, %s2551
        %s2556 = smul.u32 %s2550, 32
        %s2557 = scalar_lea.vmem [#allocation4], %s2556
        %v2558 = vld [vmem:[%s2557] sm:$0xff]
        %v2559 = vld [vmem:[%s2557 + $0x8] sm:$0xff]
        %v2560 = vld [vmem:[%s2557 + $0x10] sm:$0xff]
        %v2561 = vld [vmem:[%s2557 + $0x18] sm:$0xff]
        %v2562 = vstv %s2555
        %v2563 = vmul.f32 %v2562, %v2558
        %v2564 = vmul.f32 %v2562, %v2559
        %v2565 = vmul.f32 %v2562, %v2560
        %v2566 = vmul.f32 %v2562, %v2561
        %v2567 = vadd.f32 %v2543, %v2563
        %v2568 = vadd.f32 %v2544, %v2564
        %v2569 = vadd.f32 %v2545, %v2565
        %v2570 = vadd.f32 %v2546, %v2566
        %s2571 = smul.u32 %s2554, 32
        %s2572 = scalar_lea.vmem [#allocation4], %s2571
        %v2573 = vld [vmem:[%s2572] sm:$0xff]
        %v2574 = vld [vmem:[%s2572 + $0x8] sm:$0xff]
        %v2575 = vld [vmem:[%s2572 + $0x10] sm:$0xff]
        %v2576 = vld [vmem:[%s2572 + $0x18] sm:$0xff]
        %v2577 = vstv %s2551
        %v2578 = vmul.f32 %v2577, %v2573
        %v2579 = vmul.f32 %v2577, %v2574
        %v2580 = vmul.f32 %v2577, %v2575
        %v2581 = vmul.f32 %v2577, %v2576
        %v2582 = vadd.f32 %v2567, %v2578
        %v2583 = vadd.f32 %v2568, %v2579
        %v2584 = vadd.f32 %v2569, %v2580
        %v2585 = vadd.f32 %v2570, %v2581
        %vm2586 = vcmask 130048
        %2587 = vst.msk [vmem:[#allocation5] sm:$0xff] %vm2586, %v2582
        %2588 = vst.msk [vmem:[#allocation5 + $0x8] sm:$0xff] %vm2586, %v2583
        %2589 = vst.msk [vmem:[#allocation5 + $0x10] sm:$0xff] %vm2586, %v2584
        %2590 = vst.msk [vmem:[#allocation5 + $0x18] sm:$0xff] %vm2586, %v2585
        %s2591 = sadd.s32 %s2467, 1
        %s2592 = sld [smem:[#allocation7 + %s2591]]
        %s2593 = sld [smem:[#allocation8 + %s2591]]
        %s2594 = sadd.s32 %s2592, 1
        %p2595 = scmp.lt.s32.totalorder %s2594, 1
        %s2596 = scalar_select %p2595, %s2594, 1
        %s2597 = ssub.f32 1.0, %s2593
        %s2598 = smul.u32 %s2592, 32
        %s2599 = scalar_lea.vmem [#allocation2], %s2598
        %v2600 = vld [vmem:[%s2599] sm:$0xff]
        %v2601 = vld [vmem:[%s2599 + $0x8] sm:$0xff]
        %v2602 = vld [vmem:[%s2599 + $0x10] sm:$0xff]
        %v2603 = vld [vmem:[%s2599 + $0x18] sm:$0xff]
        %v2604 = vstv %s2597
        %v2605 = vmul.f32 %v2604, %v2600
        %v2606 = vmul.f32 %v2604, %v2601
        %v2607 = vmul.f32 %v2604, %v2602
        %v2608 = vmul.f32 %v2604, %v2603
        %2613 = vrot.lane.b32.xlu0 %v2605, 16
        %v2614 = vpop.permute.xlu0 %2613
        %2615 = vrot.lane.b32.xlu0 %v2606, 16
        %v2616 = vpop.permute.xlu0 %2615
        %2617 = vrot.lane.b32.xlu0 %v2607, 16
        %v2618 = vpop.permute.xlu0 %2617
        %2619 = vrot.lane.b32.xlu0 %v2608, 16
        %v2620 = vpop.permute.xlu0 %2619
        %v2625 = vadd.f32 %v2449, %v2614
        %v2626 = vadd.f32 %v2454, %v2616
        %v2627 = vadd.f32 %v2459, %v2618
        %v2628 = vadd.f32 %v2464, %v2620
        %s2629 = smul.u32 %s2596, 32
        %s2630 = scalar_lea.vmem [#allocation2], %s2629
        %v2631 = vld [vmem:[%s2630] sm:$0xff]
        %v2632 = vld [vmem:[%s2630 + $0x8] sm:$0xff]
        %v2633 = vld [vmem:[%s2630 + $0x10] sm:$0xff]
        %v2634 = vld [vmem:[%s2630 + $0x18] sm:$0xff]
        %v2635 = vstv %s2593
        %v2636 = vmul.f32 %v2635, %v2631
        %v2637 = vmul.f32 %v2635, %v2632
        %v2638 = vmul.f32 %v2635, %v2633
        %v2639 = vmul.f32 %v2635, %v2634
        %2644 = vrot.lane.b32.xlu0 %v2636, 16
        %v2645 = vpop.permute.xlu0 %2644
        %2646 = vrot.lane.b32.xlu0 %v2637, 16
        %v2647 = vpop.permute.xlu0 %2646
        %2648 = vrot.lane.b32.xlu0 %v2638, 16
        %v2649 = vpop.permute.xlu0 %2648
        %2650 = vrot.lane.b32.xlu0 %v2639, 16
        %v2651 = vpop.permute.xlu0 %2650
        %v2656 = vadd.f32 %v2625, %v2645
        %v2657 = vadd.f32 %v2626, %v2647
        %v2658 = vadd.f32 %v2627, %v2649
        %v2659 = vadd.f32 %v2628, %v2651
        %s2660 = sshra.s32 %s2591, 7
        %s2661 = sand.u32 %s2591, 127
        %s2662 = sadd.s32 %s2660, 1
        %s2663 = smul.u32 %s2662, 128
        %s2664 = sshra.s32 %s2591, 7
        %s2665 = sand.u32 %s2591, 127
        %s2666 = sadd.s32 %s2663, %s2665
        %s2667 = sld [smem:[#allocation7 + %s2666]]
        %s2668 = sld [smem:[#allocation8 + %s2666]]
        %s2669 = sadd.s32 %s2667, 1
        %p2670 = scmp.lt.s32.totalorder %s2669, 3
        %s2671 = scalar_select %p2670, %s2669, 3
        %s2672 = ssub.f32 1.0, %s2668
        %s2673 = smul.u32 %s2667, 32
        %s2674 = scalar_lea.vmem [#allocation3], %s2673
        %v2675 = vld [vmem:[%s2674] sm:$0xff]
        %v2676 = vld [vmem:[%s2674 + $0x8] sm:$0xff]
        %v2677 = vld [vmem:[%s2674 + $0x10] sm:$0xff]
        %v2678 = vld [vmem:[%s2674 + $0x18] sm:$0xff]
        %v2679 = vstv %s2672
        %v2680 = vmul.f32 %v2679, %v2675
        %v2681 = vmul.f32 %v2679, %v2676
        %v2682 = vmul.f32 %v2679, %v2677
        %v2683 = vmul.f32 %v2679, %v2678
        %2688 = vrot.lane.b32.xlu0 %v2680, 16
        %v2689 = vpop.permute.xlu0 %2688
        %2690 = vrot.lane.b32.xlu0 %v2681, 16
        %v2691 = vpop.permute.xlu0 %2690
        %2692 = vrot.lane.b32.xlu0 %v2682, 16
        %v2693 = vpop.permute.xlu0 %2692
        %2694 = vrot.lane.b32.xlu0 %v2683, 16
        %v2695 = vpop.permute.xlu0 %2694
        %v2700 = vadd.f32 %v2656, %v2689
        %v2701 = vadd.f32 %v2657, %v2691
        %v2702 = vadd.f32 %v2658, %v2693
        %v2703 = vadd.f32 %v2659, %v2695
        %s2704 = smul.u32 %s2671, 32
        %s2705 = scalar_lea.vmem [#allocation3], %s2704
        %v2706 = vld [vmem:[%s2705] sm:$0xff]
        %v2707 = vld [vmem:[%s2705 + $0x8] sm:$0xff]
        %v2708 = vld [vmem:[%s2705 + $0x10] sm:$0xff]
        %v2709 = vld [vmem:[%s2705 + $0x18] sm:$0xff]
        %v2710 = vstv %s2668
        %v2711 = vmul.f32 %v2710, %v2706
        %v2712 = vmul.f32 %v2710, %v2707
        %v2713 = vmul.f32 %v2710, %v2708
        %v2714 = vmul.f32 %v2710, %v2709
        %2719 = vrot.lane.b32.xlu0 %v2711, 16
        %v2720 = vpop.permute.xlu0 %2719
        %2721 = vrot.lane.b32.xlu0 %v2712, 16
        %v2722 = vpop.permute.xlu0 %2721
        %2723 = vrot.lane.b32.xlu0 %v2713, 16
        %v2724 = vpop.permute.xlu0 %2723
        %2725 = vrot.lane.b32.xlu0 %v2714, 16
        %v2726 = vpop.permute.xlu0 %2725
        %v2731 = vadd.f32 %v2700, %v2720
        %v2732 = vadd.f32 %v2701, %v2722
        %v2733 = vadd.f32 %v2702, %v2724
        %v2734 = vadd.f32 %v2703, %v2726
        %s2735 = sadd.s32 %s2660, 2
        %s2736 = smul.u32 %s2735, 128
        %s2737 = sadd.s32 %s2736, %s2665
        %s2738 = sld [smem:[#allocation7 + %s2737]]
        %s2739 = sld [smem:[#allocation8 + %s2737]]
        %s2740 = sadd.s32 %s2738, 1
        %p2741 = scmp.lt.s32.totalorder %s2740, 7
        %s2742 = scalar_select %p2741, %s2740, 7
        %s2743 = ssub.f32 1.0, %s2739
        %s2744 = smul.u32 %s2738, 32
        %s2745 = scalar_lea.vmem [#allocation4], %s2744
        %v2746 = vld [vmem:[%s2745] sm:$0xff]
        %v2747 = vld [vmem:[%s2745 + $0x8] sm:$0xff]
        %v2748 = vld [vmem:[%s2745 + $0x10] sm:$0xff]
        %v2749 = vld [vmem:[%s2745 + $0x18] sm:$0xff]
        %v2750 = vstv %s2743
        %v2751 = vmul.f32 %v2750, %v2746
        %v2752 = vmul.f32 %v2750, %v2747
        %v2753 = vmul.f32 %v2750, %v2748
        %v2754 = vmul.f32 %v2750, %v2749
        %2759 = vrot.lane.b32.xlu0 %v2751, 16
        %v2760 = vpop.permute.xlu0 %2759
        %2761 = vrot.lane.b32.xlu0 %v2752, 16
        %v2762 = vpop.permute.xlu0 %2761
        %2763 = vrot.lane.b32.xlu0 %v2753, 16
        %v2764 = vpop.permute.xlu0 %2763
        %2765 = vrot.lane.b32.xlu0 %v2754, 16
        %v2766 = vpop.permute.xlu0 %2765
        %v2771 = vadd.f32 %v2731, %v2760
        %v2772 = vadd.f32 %v2732, %v2762
        %v2773 = vadd.f32 %v2733, %v2764
        %v2774 = vadd.f32 %v2734, %v2766
        %s2775 = smul.u32 %s2742, 32
        %s2776 = scalar_lea.vmem [#allocation4], %s2775
        %v2777 = vld [vmem:[%s2776] sm:$0xff]
        %v2778 = vld [vmem:[%s2776 + $0x8] sm:$0xff]
        %v2779 = vld [vmem:[%s2776 + $0x10] sm:$0xff]
        %v2780 = vld [vmem:[%s2776 + $0x18] sm:$0xff]
        %v2781 = vstv %s2739
        %v2782 = vmul.f32 %v2781, %v2777
        %v2783 = vmul.f32 %v2781, %v2778
        %v2784 = vmul.f32 %v2781, %v2779
        %v2785 = vmul.f32 %v2781, %v2780
        %2790 = vrot.lane.b32.xlu0 %v2782, 16
        %v2791 = vpop.permute.xlu0 %2790
        %2792 = vrot.lane.b32.xlu0 %v2783, 16
        %v2793 = vpop.permute.xlu0 %2792
        %2794 = vrot.lane.b32.xlu0 %v2784, 16
        %v2795 = vpop.permute.xlu0 %2794
        %2796 = vrot.lane.b32.xlu0 %v2785, 16
        %v2797 = vpop.permute.xlu0 %2796
        %v2802 = vadd.f32 %v2771, %v2791
        %v2803 = vadd.f32 %v2772, %v2793
        %v2804 = vadd.f32 %v2773, %v2795
        %v2805 = vadd.f32 %v2774, %v2797
        %vm2806 = vcmask 261248
        %2807 = vst.msk [vmem:[#allocation5] sm:$0xff] %vm2806, %v2802
        %2808 = vst.msk [vmem:[#allocation5 + $0x8] sm:$0xff] %vm2806, %v2803
        %2809 = vst.msk [vmem:[#allocation5 + $0x10] sm:$0xff] %vm2806, %v2804
        %2810 = vst.msk [vmem:[#allocation5 + $0x18] sm:$0xff] %vm2806, %v2805
        %s2811 = sadd.s32 %s2467, 2
        %s2812 = sld [smem:[#allocation7 + %s2811]]
        %s2813 = sld [smem:[#allocation8 + %s2811]]
        %s2814 = sadd.s32 %s2812, 1
        %p2815 = scmp.lt.s32.totalorder %s2814, 1
        %s2816 = scalar_select %p2815, %s2814, 1
        %s2817 = ssub.f32 1.0, %s2813
        %s2818 = smul.u32 %s2812, 32
        %s2819 = scalar_lea.vmem [#allocation2], %s2818
        %v2820 = vld [vmem:[%s2819] sm:$0xff]
        %v2821 = vld [vmem:[%s2819 + $0x8] sm:$0xff]
        %v2822 = vld [vmem:[%s2819 + $0x10] sm:$0xff]
        %v2823 = vld [vmem:[%s2819 + $0x18] sm:$0xff]
        %v2824 = vstv %s2817
        %v2825 = vmul.f32 %v2824, %v2820
        %v2826 = vmul.f32 %v2824, %v2821
        %v2827 = vmul.f32 %v2824, %v2822
        %v2828 = vmul.f32 %v2824, %v2823
        %2833 = vrot.lane.b32.xlu0 %v2825, 32
        %v2834 = vpop.permute.xlu0 %2833
        %2835 = vrot.lane.b32.xlu0 %v2826, 32
        %v2836 = vpop.permute.xlu0 %2835
        %2837 = vrot.lane.b32.xlu0 %v2827, 32
        %v2838 = vpop.permute.xlu0 %2837
        %2839 = vrot.lane.b32.xlu0 %v2828, 32
        %v2840 = vpop.permute.xlu0 %2839
        %v2845 = vadd.f32 %v2449, %v2834
        %v2846 = vadd.f32 %v2454, %v2836
        %v2847 = vadd.f32 %v2459, %v2838
        %v2848 = vadd.f32 %v2464, %v2840
        %s2849 = smul.u32 %s2816, 32
        %s2850 = scalar_lea.vmem [#allocation2], %s2849
        %v2851 = vld [vmem:[%s2850] sm:$0xff]
        %v2852 = vld [vmem:[%s2850 + $0x8] sm:$0xff]
        %v2853 = vld [vmem:[%s2850 + $0x10] sm:$0xff]
        %v2854 = vld [vmem:[%s2850 + $0x18] sm:$0xff]
        %v2855 = vstv %s2813
        %v2856 = vmul.f32 %v2855, %v2851
        %v2857 = vmul.f32 %v2855, %v2852
        %v2858 = vmul.f32 %v2855, %v2853
        %v2859 = vmul.f32 %v2855, %v2854
        %2864 = vrot.lane.b32.xlu0 %v2856, 32
        %v2865 = vpop.permute.xlu0 %2864
        %2866 = vrot.lane.b32.xlu0 %v2857, 32
        %v2867 = vpop.permute.xlu0 %2866
        %2868 = vrot.lane.b32.xlu0 %v2858, 32
        %v2869 = vpop.permute.xlu0 %2868
        %2870 = vrot.lane.b32.xlu0 %v2859, 32
        %v2871 = vpop.permute.xlu0 %2870
        %v2876 = vadd.f32 %v2845, %v2865
        %v2877 = vadd.f32 %v2846, %v2867
        %v2878 = vadd.f32 %v2847, %v2869
        %v2879 = vadd.f32 %v2848, %v2871
        %s2880 = sshra.s32 %s2811, 7
        %s2881 = sand.u32 %s2811, 127
        %s2882 = sadd.s32 %s2880, 1
        %s2883 = smul.u32 %s2882, 128
        %s2884 = sshra.s32 %s2811, 7
        %s2885 = sand.u32 %s2811, 127
        %s2886 = sadd.s32 %s2883, %s2885
        %s2887 = sld [smem:[#allocation7 + %s2886]]
        %s2888 = sld [smem:[#allocation8 + %s2886]]
        %s2889 = sadd.s32 %s2887, 1
        %p2890 = scmp.lt.s32.totalorder %s2889, 3
        %s2891 = scalar_select %p2890, %s2889, 3
        %s2892 = ssub.f32 1.0, %s2888
        %s2893 = smul.u32 %s2887, 32
        %s2894 = scalar_lea.vmem [#allocation3], %s2893
        %v2895 = vld [vmem:[%s2894] sm:$0xff]
        %v2896 = vld [vmem:[%s2894 + $0x8] sm:$0xff]
        %v2897 = vld [vmem:[%s2894 + $0x10] sm:$0xff]
        %v2898 = vld [vmem:[%s2894 + $0x18] sm:$0xff]
        %v2899 = vstv %s2892
        %v2900 = vmul.f32 %v2899, %v2895
        %v2901 = vmul.f32 %v2899, %v2896
        %v2902 = vmul.f32 %v2899, %v2897
        %v2903 = vmul.f32 %v2899, %v2898
        %2908 = vrot.lane.b32.xlu0 %v2900, 32
        %v2909 = vpop.permute.xlu0 %2908
        %2910 = vrot.lane.b32.xlu0 %v2901, 32
        %v2911 = vpop.permute.xlu0 %2910
        %2912 = vrot.lane.b32.xlu0 %v2902, 32
        %v2913 = vpop.permute.xlu0 %2912
        %2914 = vrot.lane.b32.xlu0 %v2903, 32
        %v2915 = vpop.permute.xlu0 %2914
        %v2920 = vadd.f32 %v2876, %v2909
        %v2921 = vadd.f32 %v2877, %v2911
        %v2922 = vadd.f32 %v2878, %v2913
        %v2923 = vadd.f32 %v2879, %v2915
        %s2924 = smul.u32 %s2891, 32
        %s2925 = scalar_lea.vmem [#allocation3], %s2924
        %v2926 = vld [vmem:[%s2925] sm:$0xff]
        %v2927 = vld [vmem:[%s2925 + $0x8] sm:$0xff]
        %v2928 = vld [vmem:[%s2925 + $0x10] sm:$0xff]
        %v2929 = vld [vmem:[%s2925 + $0x18] sm:$0xff]
        %v2930 = vstv %s2888
        %v2931 = vmul.f32 %v2930, %v2926
        %v2932 = vmul.f32 %v2930, %v2927
        %v2933 = vmul.f32 %v2930, %v2928
        %v2934 = vmul.f32 %v2930, %v2929
        %2939 = vrot.lane.b32.xlu0 %v2931, 32
        %v2940 = vpop.permute.xlu0 %2939
        %2941 = vrot.lane.b32.xlu0 %v2932, 32
        %v2942 = vpop.permute.xlu0 %2941
        %2943 = vrot.lane.b32.xlu0 %v2933, 32
        %v2944 = vpop.permute.xlu0 %2943
        %2945 = vrot.lane.b32.xlu0 %v2934, 32
        %v2946 = vpop.permute.xlu0 %2945
        %v2951 = vadd.f32 %v2920, %v2940
        %v2952 = vadd.f32 %v2921, %v2942
        %v2953 = vadd.f32 %v2922, %v2944
        %v2954 = vadd.f32 %v2923, %v2946
        %s2955 = sadd.s32 %s2880, 2
        %s2956 = smul.u32 %s2955, 128
        %s2957 = sadd.s32 %s2956, %s2885
        %s2958 = sld [smem:[#allocation7 + %s2957]]
        %s2959 = sld [smem:[#allocation8 + %s2957]]
        %s2960 = sadd.s32 %s2958, 1
        %p2961 = scmp.lt.s32.totalorder %s2960, 7
        %s2962 = scalar_select %p2961, %s2960, 7
        %s2963 = ssub.f32 1.0, %s2959
        %s2964 = smul.u32 %s2958, 32
        %s2965 = scalar_lea.vmem [#allocation4], %s2964
        %v2966 = vld [vmem:[%s2965] sm:$0xff]
        %v2967 = vld [vmem:[%s2965 + $0x8] sm:$0xff]
        %v2968 = vld [vmem:[%s2965 + $0x10] sm:$0xff]
        %v2969 = vld [vmem:[%s2965 + $0x18] sm:$0xff]
        %v2970 = vstv %s2963
        %v2971 = vmul.f32 %v2970, %v2966
        %v2972 = vmul.f32 %v2970, %v2967
        %v2973 = vmul.f32 %v2970, %v2968
        %v2974 = vmul.f32 %v2970, %v2969
        %2979 = vrot.lane.b32.xlu0 %v2971, 32
        %v2980 = vpop.permute.xlu0 %2979
        %2981 = vrot.lane.b32.xlu0 %v2972, 32
        %v2982 = vpop.permute.xlu0 %2981
        %2983 = vrot.lane.b32.xlu0 %v2973, 32
        %v2984 = vpop.permute.xlu0 %2983
        %2985 = vrot.lane.b32.xlu0 %v2974, 32
        %v2986 = vpop.permute.xlu0 %2985
        %v2991 = vadd.f32 %v2951, %v2980
        %v2992 = vadd.f32 %v2952, %v2982
        %v2993 = vadd.f32 %v2953, %v2984
        %v2994 = vadd.f32 %v2954, %v2986
        %s2995 = smul.u32 %s2962, 32
        %s2996 = scalar_lea.vmem [#allocation4], %s2995
        %v2997 = vld [vmem:[%s2996] sm:$0xff]
        %v2998 = vld [vmem:[%s2996 + $0x8] sm:$0xff]
        %v2999 = vld [vmem:[%s2996 + $0x10] sm:$0xff]
        %v3000 = vld [vmem:[%s2996 + $0x18] sm:$0xff]
        %v3001 = vstv %s2959
        %v3002 = vmul.f32 %v3001, %v2997
        %v3003 = vmul.f32 %v3001, %v2998
        %v3004 = vmul.f32 %v3001, %v2999
        %v3005 = vmul.f32 %v3001, %v3000
        %3010 = vrot.lane.b32.xlu0 %v3002, 32
        %v3011 = vpop.permute.xlu0 %3010
        %3012 = vrot.lane.b32.xlu0 %v3003, 32
        %v3013 = vpop.permute.xlu0 %3012
        %3014 = vrot.lane.b32.xlu0 %v3004, 32
        %v3015 = vpop.permute.xlu0 %3014
        %3016 = vrot.lane.b32.xlu0 %v3005, 32
        %v3017 = vpop.permute.xlu0 %3016
        %v3022 = vadd.f32 %v2991, %v3011
        %v3023 = vadd.f32 %v2992, %v3013
        %v3024 = vadd.f32 %v2993, %v3015
        %v3025 = vadd.f32 %v2994, %v3017
        %vm3026 = vcmask 392448
        %3027 = vst.msk [vmem:[#allocation5] sm:$0xff] %vm3026, %v3022
        %3028 = vst.msk [vmem:[#allocation5 + $0x8] sm:$0xff] %vm3026, %v3023
        %3029 = vst.msk [vmem:[#allocation5 + $0x10] sm:$0xff] %vm3026, %v3024
        %3030 = vst.msk [vmem:[#allocation5 + $0x18] sm:$0xff] %vm3026, %v3025
        %s3031 = sadd.s32 %s2467, 3
        %s3032 = sld [smem:[#allocation7 + %s3031]]
        %s3033 = sld [smem:[#allocation8 + %s3031]]
        %s3034 = sadd.s32 %s3032, 1
        %p3035 = scmp.lt.s32.totalorder %s3034, 1
        %s3036 = scalar_select %p3035, %s3034, 1
        %s3037 = ssub.f32 1.0, %s3033
        %s3038 = smul.u32 %s3032, 32
        %s3039 = scalar_lea.vmem [#allocation2], %s3038
        %v3040 = vld [vmem:[%s3039] sm:$0xff]
        %v3041 = vld [vmem:[%s3039 + $0x8] sm:$0xff]
        %v3042 = vld [vmem:[%s3039 + $0x10] sm:$0xff]
        %v3043 = vld [vmem:[%s3039 + $0x18] sm:$0xff]
        %v3044 = vstv %s3037
        %v3045 = vmul.f32 %v3044, %v3040
        %v3046 = vmul.f32 %v3044, %v3041
        %v3047 = vmul.f32 %v3044, %v3042
        %v3048 = vmul.f32 %v3044, %v3043
        %3053 = vrot.lane.b32.xlu0 %v3045, 48
        %v3054 = vpop.permute.xlu0 %3053
        %3055 = vrot.lane.b32.xlu0 %v3046, 48
        %v3056 = vpop.permute.xlu0 %3055
        %3057 = vrot.lane.b32.xlu0 %v3047, 48
        %v3058 = vpop.permute.xlu0 %3057
        %3059 = vrot.lane.b32.xlu0 %v3048, 48
        %v3060 = vpop.permute.xlu0 %3059
        %v3065 = vadd.f32 %v2449, %v3054
        %v3066 = vadd.f32 %v2454, %v3056
        %v3067 = vadd.f32 %v2459, %v3058
        %v3068 = vadd.f32 %v2464, %v3060
        %s3069 = smul.u32 %s3036, 32
        %s3070 = scalar_lea.vmem [#allocation2], %s3069
        %v3071 = vld [vmem:[%s3070] sm:$0xff]
        %v3072 = vld [vmem:[%s3070 + $0x8] sm:$0xff]
        %v3073 = vld [vmem:[%s3070 + $0x10] sm:$0xff]
        %v3074 = vld [vmem:[%s3070 + $0x18] sm:$0xff]
        %v3075 = vstv %s3033
        %v3076 = vmul.f32 %v3075, %v3071
        %v3077 = vmul.f32 %v3075, %v3072
        %v3078 = vmul.f32 %v3075, %v3073
        %v3079 = vmul.f32 %v3075, %v3074
        %3084 = vrot.lane.b32.xlu0 %v3076, 48
        %v3085 = vpop.permute.xlu0 %3084
        %3086 = vrot.lane.b32.xlu0 %v3077, 48
        %v3087 = vpop.permute.xlu0 %3086
        %3088 = vrot.lane.b32.xlu0 %v3078, 48
        %v3089 = vpop.permute.xlu0 %3088
        %3090 = vrot.lane.b32.xlu0 %v3079, 48
        %v3091 = vpop.permute.xlu0 %3090
        %v3096 = vadd.f32 %v3065, %v3085
        %v3097 = vadd.f32 %v3066, %v3087
        %v3098 = vadd.f32 %v3067, %v3089
        %v3099 = vadd.f32 %v3068, %v3091
        %s3100 = sshra.s32 %s3031, 7
        %s3101 = sand.u32 %s3031, 127
        %s3102 = sadd.s32 %s3100, 1
        %s3103 = smul.u32 %s3102, 128
        %s3104 = sshra.s32 %s3031, 7
        %s3105 = sand.u32 %s3031, 127
        %s3106 = sadd.s32 %s3103, %s3105
        %s3107 = sld [smem:[#allocation7 + %s3106]]
        %s3108 = sld [smem:[#allocation8 + %s3106]]
        %s3109 = sadd.s32 %s3107, 1
        %p3110 = scmp.lt.s32.totalorder %s3109, 3
        %s3111 = scalar_select %p3110, %s3109, 3
        %s3112 = ssub.f32 1.0, %s3108
        %s3113 = smul.u32 %s3107, 32
        %s3114 = scalar_lea.vmem [#allocation3], %s3113
        %v3115 = vld [vmem:[%s3114] sm:$0xff]
        %v3116 = vld [vmem:[%s3114 + $0x8] sm:$0xff]
        %v3117 = vld [vmem:[%s3114 + $0x10] sm:$0xff]
        %v3118 = vld [vmem:[%s3114 + $0x18] sm:$0xff]
        %v3119 = vstv %s3112
        %v3120 = vmul.f32 %v3119, %v3115
        %v3121 = vmul.f32 %v3119, %v3116
        %v3122 = vmul.f32 %v3119, %v3117
        %v3123 = vmul.f32 %v3119, %v3118
        %3128 = vrot.lane.b32.xlu0 %v3120, 48
        %v3129 = vpop.permute.xlu0 %3128
        %3130 = vrot.lane.b32.xlu0 %v3121, 48
        %v3131 = vpop.permute.xlu0 %3130
        %3132 = vrot.lane.b32.xlu0 %v3122, 48
        %v3133 = vpop.permute.xlu0 %3132
        %3134 = vrot.lane.b32.xlu0 %v3123, 48
        %v3135 = vpop.permute.xlu0 %3134
        %v3140 = vadd.f32 %v3096, %v3129
        %v3141 = vadd.f32 %v3097, %v3131
        %v3142 = vadd.f32 %v3098, %v3133
        %v3143 = vadd.f32 %v3099, %v3135
        %s3144 = smul.u32 %s3111, 32
        %s3145 = scalar_lea.vmem [#allocation3], %s3144
        %v3146 = vld [vmem:[%s3145] sm:$0xff]
        %v3147 = vld [vmem:[%s3145 + $0x8] sm:$0xff]
        %v3148 = vld [vmem:[%s3145 + $0x10] sm:$0xff]
        %v3149 = vld [vmem:[%s3145 + $0x18] sm:$0xff]
        %v3150 = vstv %s3108
        %v3151 = vmul.f32 %v3150, %v3146
        %v3152 = vmul.f32 %v3150, %v3147
        %v3153 = vmul.f32 %v3150, %v3148
        %v3154 = vmul.f32 %v3150, %v3149
        %3159 = vrot.lane.b32.xlu0 %v3151, 48
        %v3160 = vpop.permute.xlu0 %3159
        %3161 = vrot.lane.b32.xlu0 %v3152, 48
        %v3162 = vpop.permute.xlu0 %3161
        %3163 = vrot.lane.b32.xlu0 %v3153, 48
        %v3164 = vpop.permute.xlu0 %3163
        %3165 = vrot.lane.b32.xlu0 %v3154, 48
        %v3166 = vpop.permute.xlu0 %3165
        %v3171 = vadd.f32 %v3140, %v3160
        %v3172 = vadd.f32 %v3141, %v3162
        %v3173 = vadd.f32 %v3142, %v3164
        %v3174 = vadd.f32 %v3143, %v3166
        %s3175 = sadd.s32 %s3100, 2
        %s3176 = smul.u32 %s3175, 128
        %s3177 = sadd.s32 %s3176, %s3105
        %s3178 = sld [smem:[#allocation7 + %s3177]]
        %s3179 = sld [smem:[#allocation8 + %s3177]]
        %s3180 = sadd.s32 %s3178, 1
        %p3181 = scmp.lt.s32.totalorder %s3180, 7
        %s3182 = scalar_select %p3181, %s3180, 7
        %s3183 = ssub.f32 1.0, %s3179
        %s3184 = smul.u32 %s3178, 32
        %s3185 = scalar_lea.vmem [#allocation4], %s3184
        %v3186 = vld [vmem:[%s3185] sm:$0xff]
        %v3187 = vld [vmem:[%s3185 + $0x8] sm:$0xff]
        %v3188 = vld [vmem:[%s3185 + $0x10] sm:$0xff]
        %v3189 = vld [vmem:[%s3185 + $0x18] sm:$0xff]
        %v3190 = vstv %s3183
        %v3191 = vmul.f32 %v3190, %v3186
        %v3192 = vmul.f32 %v3190, %v3187
        %v3193 = vmul.f32 %v3190, %v3188
        %v3194 = vmul.f32 %v3190, %v3189
        %3199 = vrot.lane.b32.xlu0 %v3191, 48
        %v3200 = vpop.permute.xlu0 %3199
        %3201 = vrot.lane.b32.xlu0 %v3192, 48
        %v3202 = vpop.permute.xlu0 %3201
        %3203 = vrot.lane.b32.xlu0 %v3193, 48
        %v3204 = vpop.permute.xlu0 %3203
        %3205 = vrot.lane.b32.xlu0 %v3194, 48
        %v3206 = vpop.permute.xlu0 %3205
        %v3211 = vadd.f32 %v3171, %v3200
        %v3212 = vadd.f32 %v3172, %v3202
        %v3213 = vadd.f32 %v3173, %v3204
        %v3214 = vadd.f32 %v3174, %v3206
        %s3215 = smul.u32 %s3182, 32
        %s3216 = scalar_lea.vmem [#allocation4], %s3215
        %v3217 = vld [vmem:[%s3216] sm:$0xff]
        %v3218 = vld [vmem:[%s3216 + $0x8] sm:$0xff]
        %v3219 = vld [vmem:[%s3216 + $0x10] sm:$0xff]
        %v3220 = vld [vmem:[%s3216 + $0x18] sm:$0xff]
        %v3221 = vstv %s3179
        %v3222 = vmul.f32 %v3221, %v3217
        %v3223 = vmul.f32 %v3221, %v3218
        %v3224 = vmul.f32 %v3221, %v3219
        %v3225 = vmul.f32 %v3221, %v3220
        %3230 = vrot.lane.b32.xlu0 %v3222, 48
        %v3231 = vpop.permute.xlu0 %3230
        %3232 = vrot.lane.b32.xlu0 %v3223, 48
        %v3233 = vpop.permute.xlu0 %3232
        %3234 = vrot.lane.b32.xlu0 %v3224, 48
        %v3235 = vpop.permute.xlu0 %3234
        %3236 = vrot.lane.b32.xlu0 %v3225, 48
        %v3237 = vpop.permute.xlu0 %3236
        %v3242 = vadd.f32 %v3211, %v3231
        %v3243 = vadd.f32 %v3212, %v3233
        %v3244 = vadd.f32 %v3213, %v3235
        %v3245 = vadd.f32 %v3214, %v3237
        %vm3246 = vcmask 523648
        %3247 = vst.msk [vmem:[#allocation5] sm:$0xff] %vm3246, %v3242
        %3248 = vst.msk [vmem:[#allocation5 + $0x8] sm:$0xff] %vm3246, %v3243
        %3249 = vst.msk [vmem:[#allocation5 + $0x10] sm:$0xff] %vm3246, %v3244
        %3250 = vst.msk [vmem:[#allocation5 + $0x18] sm:$0xff] %vm3246, %v3245
        %s3251 = sadd.s32 %s2467, 4
        %s3252 = sld [smem:[#allocation7 + %s3251]]
        %s3253 = sld [smem:[#allocation8 + %s3251]]
        %s3254 = sadd.s32 %s3252, 1
        %p3255 = scmp.lt.s32.totalorder %s3254, 1
        %s3256 = scalar_select %p3255, %s3254, 1
        %s3257 = ssub.f32 1.0, %s3253
        %s3258 = smul.u32 %s3252, 32
        %s3259 = scalar_lea.vmem [#allocation2], %s3258
        %v3260 = vld [vmem:[%s3259] sm:$0xff]
        %v3261 = vld [vmem:[%s3259 + $0x8] sm:$0xff]
        %v3262 = vld [vmem:[%s3259 + $0x10] sm:$0xff]
        %v3263 = vld [vmem:[%s3259 + $0x18] sm:$0xff]
        %v3264 = vstv %s3257
        %v3265 = vmul.f32 %v3264, %v3260
        %v3266 = vmul.f32 %v3264, %v3261
        %v3267 = vmul.f32 %v3264, %v3262
        %v3268 = vmul.f32 %v3264, %v3263
        %3273 = vrot.lane.b32.xlu0 %v3265, 64
        %v3274 = vpop.permute.xlu0 %3273
        %3275 = vrot.lane.b32.xlu0 %v3266, 64
        %v3276 = vpop.permute.xlu0 %3275
        %3277 = vrot.lane.b32.xlu0 %v3267, 64
        %v3278 = vpop.permute.xlu0 %3277
        %3279 = vrot.lane.b32.xlu0 %v3268, 64
        %v3280 = vpop.permute.xlu0 %3279
        %v3285 = vadd.f32 %v2449, %v3274
        %v3286 = vadd.f32 %v2454, %v3276
        %v3287 = vadd.f32 %v2459, %v3278
        %v3288 = vadd.f32 %v2464, %v3280
        %s3289 = smul.u32 %s3256, 32
        %s3290 = scalar_lea.vmem [#allocation2], %s3289
        %v3291 = vld [vmem:[%s3290] sm:$0xff]
        %v3292 = vld [vmem:[%s3290 + $0x8] sm:$0xff]
        %v3293 = vld [vmem:[%s3290 + $0x10] sm:$0xff]
        %v3294 = vld [vmem:[%s3290 + $0x18] sm:$0xff]
        %v3295 = vstv %s3253
        %v3296 = vmul.f32 %v3295, %v3291
        %v3297 = vmul.f32 %v3295, %v3292
        %v3298 = vmul.f32 %v3295, %v3293
        %v3299 = vmul.f32 %v3295, %v3294
        %3304 = vrot.lane.b32.xlu0 %v3296, 64
        %v3305 = vpop.permute.xlu0 %3304
        %3306 = vrot.lane.b32.xlu0 %v3297, 64
        %v3307 = vpop.permute.xlu0 %3306
        %3308 = vrot.lane.b32.xlu0 %v3298, 64
        %v3309 = vpop.permute.xlu0 %3308
        %3310 = vrot.lane.b32.xlu0 %v3299, 64
        %v3311 = vpop.permute.xlu0 %3310
        %v3316 = vadd.f32 %v3285, %v3305
        %v3317 = vadd.f32 %v3286, %v3307
        %v3318 = vadd.f32 %v3287, %v3309
        %v3319 = vadd.f32 %v3288, %v3311
        %s3320 = sshra.s32 %s3251, 7
        %s3321 = sand.u32 %s3251, 127
        %s3322 = sadd.s32 %s3320, 1
        %s3323 = smul.u32 %s3322, 128
        %s3324 = sshra.s32 %s3251, 7
        %s3325 = sand.u32 %s3251, 127
        %s3326 = sadd.s32 %s3323, %s3325
        %s3327 = sld [smem:[#allocation7 + %s3326]]
        %s3328 = sld [smem:[#allocation8 + %s3326]]
        %s3329 = sadd.s32 %s3327, 1
        %p3330 = scmp.lt.s32.totalorder %s3329, 3
        %s3331 = scalar_select %p3330, %s3329, 3
        %s3332 = ssub.f32 1.0, %s3328
        %s3333 = smul.u32 %s3327, 32
        %s3334 = scalar_lea.vmem [#allocation3], %s3333
        %v3335 = vld [vmem:[%s3334] sm:$0xff]
        %v3336 = vld [vmem:[%s3334 + $0x8] sm:$0xff]
        %v3337 = vld [vmem:[%s3334 + $0x10] sm:$0xff]
        %v3338 = vld [vmem:[%s3334 + $0x18] sm:$0xff]
        %v3339 = vstv %s3332
        %v3340 = vmul.f32 %v3339, %v3335
        %v3341 = vmul.f32 %v3339, %v3336
        %v3342 = vmul.f32 %v3339, %v3337
        %v3343 = vmul.f32 %v3339, %v3338
        %3348 = vrot.lane.b32.xlu0 %v3340, 64
        %v3349 = vpop.permute.xlu0 %3348
        %3350 = vrot.lane.b32.xlu0 %v3341, 64
        %v3351 = vpop.permute.xlu0 %3350
        %3352 = vrot.lane.b32.xlu0 %v3342, 64
        %v3353 = vpop.permute.xlu0 %3352
        %3354 = vrot.lane.b32.xlu0 %v3343, 64
        %v3355 = vpop.permute.xlu0 %3354
        %v3360 = vadd.f32 %v3316, %v3349
        %v3361 = vadd.f32 %v3317, %v3351
        %v3362 = vadd.f32 %v3318, %v3353
        %v3363 = vadd.f32 %v3319, %v3355
        %s3364 = smul.u32 %s3331, 32
        %s3365 = scalar_lea.vmem [#allocation3], %s3364
        %v3366 = vld [vmem:[%s3365] sm:$0xff]
        %v3367 = vld [vmem:[%s3365 + $0x8] sm:$0xff]
        %v3368 = vld [vmem:[%s3365 + $0x10] sm:$0xff]
        %v3369 = vld [vmem:[%s3365 + $0x18] sm:$0xff]
        %v3370 = vstv %s3328
        %v3371 = vmul.f32 %v3370, %v3366
        %v3372 = vmul.f32 %v3370, %v3367
        %v3373 = vmul.f32 %v3370, %v3368
        %v3374 = vmul.f32 %v3370, %v3369
        %3379 = vrot.lane.b32.xlu0 %v3371, 64
        %v3380 = vpop.permute.xlu0 %3379
        %3381 = vrot.lane.b32.xlu0 %v3372, 64
        %v3382 = vpop.permute.xlu0 %3381
        %3383 = vrot.lane.b32.xlu0 %v3373, 64
        %v3384 = vpop.permute.xlu0 %3383
        %3385 = vrot.lane.b32.xlu0 %v3374, 64
        %v3386 = vpop.permute.xlu0 %3385
        %v3391 = vadd.f32 %v3360, %v3380
        %v3392 = vadd.f32 %v3361, %v3382
        %v3393 = vadd.f32 %v3362, %v3384
        %v3394 = vadd.f32 %v3363, %v3386
        %s3395 = sadd.s32 %s3320, 2
        %s3396 = smul.u32 %s3395, 128
        %s3397 = sadd.s32 %s3396, %s3325
        %s3398 = sld [smem:[#allocation7 + %s3397]]
        %s3399 = sld [smem:[#allocation8 + %s3397]]
        %s3400 = sadd.s32 %s3398, 1
        %p3401 = scmp.lt.s32.totalorder %s3400, 7
        %s3402 = scalar_select %p3401, %s3400, 7
        %s3403 = ssub.f32 1.0, %s3399
        %s3404 = smul.u32 %s3398, 32
        %s3405 = scalar_lea.vmem [#allocation4], %s3404
        %v3406 = vld [vmem:[%s3405] sm:$0xff]
        %v3407 = vld [vmem:[%s3405 + $0x8] sm:$0xff]
        %v3408 = vld [vmem:[%s3405 + $0x10] sm:$0xff]
        %v3409 = vld [vmem:[%s3405 + $0x18] sm:$0xff]
        %v3410 = vstv %s3403
        %v3411 = vmul.f32 %v3410, %v3406
        %v3412 = vmul.f32 %v3410, %v3407
        %v3413 = vmul.f32 %v3410, %v3408
        %v3414 = vmul.f32 %v3410, %v3409
        %3419 = vrot.lane.b32.xlu0 %v3411, 64
        %v3420 = vpop.permute.xlu0 %3419
        %3421 = vrot.lane.b32.xlu0 %v3412, 64
        %v3422 = vpop.permute.xlu0 %3421
        %3423 = vrot.lane.b32.xlu0 %v3413, 64
        %v3424 = vpop.permute.xlu0 %3423
        %3425 = vrot.lane.b32.xlu0 %v3414, 64
        %v3426 = vpop.permute.xlu0 %3425
        %v3431 = vadd.f32 %v3391, %v3420
        %v3432 = vadd.f32 %v3392, %v3422
        %v3433 = vadd.f32 %v3393, %v3424
        %v3434 = vadd.f32 %v3394, %v3426
        %s3435 = smul.u32 %s3402, 32
        %s3436 = scalar_lea.vmem [#allocation4], %s3435
        %v3437 = vld [vmem:[%s3436] sm:$0xff]
        %v3438 = vld [vmem:[%s3436 + $0x8] sm:$0xff]
        %v3439 = vld [vmem:[%s3436 + $0x10] sm:$0xff]
        %v3440 = vld [vmem:[%s3436 + $0x18] sm:$0xff]
        %v3441 = vstv %s3399
        %v3442 = vmul.f32 %v3441, %v3437
        %v3443 = vmul.f32 %v3441, %v3438
        %v3444 = vmul.f32 %v3441, %v3439
        %v3445 = vmul.f32 %v3441, %v3440
        %3450 = vrot.lane.b32.xlu0 %v3442, 64
        %v3451 = vpop.permute.xlu0 %3450
        %3452 = vrot.lane.b32.xlu0 %v3443, 64
        %v3453 = vpop.permute.xlu0 %3452
        %3454 = vrot.lane.b32.xlu0 %v3444, 64
        %v3455 = vpop.permute.xlu0 %3454
        %3456 = vrot.lane.b32.xlu0 %v3445, 64
        %v3457 = vpop.permute.xlu0 %3456
        %v3462 = vadd.f32 %v3431, %v3451
        %v3463 = vadd.f32 %v3432, %v3453
        %v3464 = vadd.f32 %v3433, %v3455
        %v3465 = vadd.f32 %v3434, %v3457
        %vm3466 = vcmask 654848
        %3467 = vst.msk [vmem:[#allocation5] sm:$0xff] %vm3466, %v3462
        %3468 = vst.msk [vmem:[#allocation5 + $0x8] sm:$0xff] %vm3466, %v3463
        %3469 = vst.msk [vmem:[#allocation5 + $0x10] sm:$0xff] %vm3466, %v3464
        %3470 = vst.msk [vmem:[#allocation5 + $0x18] sm:$0xff] %vm3466, %v3465
        %s3471 = sadd.s32 %s2467, 5
        %s3472 = sld [smem:[#allocation7 + %s3471]]
        %s3473 = sld [smem:[#allocation8 + %s3471]]
        %s3474 = sadd.s32 %s3472, 1
        %p3475 = scmp.lt.s32.totalorder %s3474, 1
        %s3476 = scalar_select %p3475, %s3474, 1
        %s3477 = ssub.f32 1.0, %s3473
        %s3478 = smul.u32 %s3472, 32
        %s3479 = scalar_lea.vmem [#allocation2], %s3478
        %v3480 = vld [vmem:[%s3479] sm:$0xff]
        %v3481 = vld [vmem:[%s3479 + $0x8] sm:$0xff]
        %v3482 = vld [vmem:[%s3479 + $0x10] sm:$0xff]
        %v3483 = vld [vmem:[%s3479 + $0x18] sm:$0xff]
        %v3484 = vstv %s3477
        %v3485 = vmul.f32 %v3484, %v3480
        %v3486 = vmul.f32 %v3484, %v3481
        %v3487 = vmul.f32 %v3484, %v3482
        %v3488 = vmul.f32 %v3484, %v3483
        %3493 = vrot.lane.b32.xlu0 %v3485, 80
        %v3494 = vpop.permute.xlu0 %3493
        %3495 = vrot.lane.b32.xlu0 %v3486, 80
        %v3496 = vpop.permute.xlu0 %3495
        %3497 = vrot.lane.b32.xlu0 %v3487, 80
        %v3498 = vpop.permute.xlu0 %3497
        %3499 = vrot.lane.b32.xlu0 %v3488, 80
        %v3500 = vpop.permute.xlu0 %3499
        %v3505 = vadd.f32 %v2449, %v3494
        %v3506 = vadd.f32 %v2454, %v3496
        %v3507 = vadd.f32 %v2459, %v3498
        %v3508 = vadd.f32 %v2464, %v3500
        %s3509 = smul.u32 %s3476, 32
        %s3510 = scalar_lea.vmem [#allocation2], %s3509
        %v3511 = vld [vmem:[%s3510] sm:$0xff]
        %v3512 = vld [vmem:[%s3510 + $0x8] sm:$0xff]
        %v3513 = vld [vmem:[%s3510 + $0x10] sm:$0xff]
        %v3514 = vld [vmem:[%s3510 + $0x18] sm:$0xff]
        %v3515 = vstv %s3473
        %v3516 = vmul.f32 %v3515, %v3511
        %v3517 = vmul.f32 %v3515, %v3512
        %v3518 = vmul.f32 %v3515, %v3513
        %v3519 = vmul.f32 %v3515, %v3514
        %3524 = vrot.lane.b32.xlu0 %v3516, 80
        %v3525 = vpop.permute.xlu0 %3524
        %3526 = vrot.lane.b32.xlu0 %v3517, 80
        %v3527 = vpop.permute.xlu0 %3526
        %3528 = vrot.lane.b32.xlu0 %v3518, 80
        %v3529 = vpop.permute.xlu0 %3528
        %3530 = vrot.lane.b32.xlu0 %v3519, 80
        %v3531 = vpop.permute.xlu0 %3530
        %v3536 = vadd.f32 %v3505, %v3525
        %v3537 = vadd.f32 %v3506, %v3527
        %v3538 = vadd.f32 %v3507, %v3529
        %v3539 = vadd.f32 %v3508, %v3531
        %s3540 = sshra.s32 %s3471, 7
        %s3541 = sand.u32 %s3471, 127
        %s3542 = sadd.s32 %s3540, 1
        %s3543 = smul.u32 %s3542, 128
        %s3544 = sshra.s32 %s3471, 7
        %s3545 = sand.u32 %s3471, 127
        %s3546 = sadd.s32 %s3543, %s3545
        %s3547 = sld [smem:[#allocation7 + %s3546]]
        %s3548 = sld [smem:[#allocation8 + %s3546]]
        %s3549 = sadd.s32 %s3547, 1
        %p3550 = scmp.lt.s32.totalorder %s3549, 3
        %s3551 = scalar_select %p3550, %s3549, 3
        %s3552 = ssub.f32 1.0, %s3548
        %s3553 = smul.u32 %s3547, 32
        %s3554 = scalar_lea.vmem [#allocation3], %s3553
        %v3555 = vld [vmem:[%s3554] sm:$0xff]
        %v3556 = vld [vmem:[%s3554 + $0x8] sm:$0xff]
        %v3557 = vld [vmem:[%s3554 + $0x10] sm:$0xff]
        %v3558 = vld [vmem:[%s3554 + $0x18] sm:$0xff]
        %v3559 = vstv %s3552
        %v3560 = vmul.f32 %v3559, %v3555
        %v3561 = vmul.f32 %v3559, %v3556
        %v3562 = vmul.f32 %v3559, %v3557
        %v3563 = vmul.f32 %v3559, %v3558
        %3568 = vrot.lane.b32.xlu0 %v3560, 80
        %v3569 = vpop.permute.xlu0 %3568
        %3570 = vrot.lane.b32.xlu0 %v3561, 80
        %v3571 = vpop.permute.xlu0 %3570
        %3572 = vrot.lane.b32.xlu0 %v3562, 80
        %v3573 = vpop.permute.xlu0 %3572
        %3574 = vrot.lane.b32.xlu0 %v3563, 80
        %v3575 = vpop.permute.xlu0 %3574
        %v3580 = vadd.f32 %v3536, %v3569
        %v3581 = vadd.f32 %v3537, %v3571
        %v3582 = vadd.f32 %v3538, %v3573
        %v3583 = vadd.f32 %v3539, %v3575
        %s3584 = smul.u32 %s3551, 32
        %s3585 = scalar_lea.vmem [#allocation3], %s3584
        %v3586 = vld [vmem:[%s3585] sm:$0xff]
        %v3587 = vld [vmem:[%s3585 + $0x8] sm:$0xff]
        %v3588 = vld [vmem:[%s3585 + $0x10] sm:$0xff]
        %v3589 = vld [vmem:[%s3585 + $0x18] sm:$0xff]
        %v3590 = vstv %s3548
        %v3591 = vmul.f32 %v3590, %v3586
        %v3592 = vmul.f32 %v3590, %v3587
        %v3593 = vmul.f32 %v3590, %v3588
        %v3594 = vmul.f32 %v3590, %v3589
        %3599 = vrot.lane.b32.xlu0 %v3591, 80
        %v3600 = vpop.permute.xlu0 %3599
        %3601 = vrot.lane.b32.xlu0 %v3592, 80
        %v3602 = vpop.permute.xlu0 %3601
        %3603 = vrot.lane.b32.xlu0 %v3593, 80
        %v3604 = vpop.permute.xlu0 %3603
        %3605 = vrot.lane.b32.xlu0 %v3594, 80
        %v3606 = vpop.permute.xlu0 %3605
        %v3611 = vadd.f32 %v3580, %v3600
        %v3612 = vadd.f32 %v3581, %v3602
        %v3613 = vadd.f32 %v3582, %v3604
        %v3614 = vadd.f32 %v3583, %v3606
        %s3615 = sadd.s32 %s3540, 2
        %s3616 = smul.u32 %s3615, 128
        %s3617 = sadd.s32 %s3616, %s3545
        %s3618 = sld [smem:[#allocation7 + %s3617]]
        %s3619 = sld [smem:[#allocation8 + %s3617]]
        %s3620 = sadd.s32 %s3618, 1
        %p3621 = scmp.lt.s32.totalorder %s3620, 7
        %s3622 = scalar_select %p3621, %s3620, 7
        %s3623 = ssub.f32 1.0, %s3619
        %s3624 = smul.u32 %s3618, 32
        %s3625 = scalar_lea.vmem [#allocation4], %s3624
        %v3626 = vld [vmem:[%s3625] sm:$0xff]
        %v3627 = vld [vmem:[%s3625 + $0x8] sm:$0xff]
        %v3628 = vld [vmem:[%s3625 + $0x10] sm:$0xff]
        %v3629 = vld [vmem:[%s3625 + $0x18] sm:$0xff]
        %v3630 = vstv %s3623
        %v3631 = vmul.f32 %v3630, %v3626
        %v3632 = vmul.f32 %v3630, %v3627
        %v3633 = vmul.f32 %v3630, %v3628
        %v3634 = vmul.f32 %v3630, %v3629
        %3639 = vrot.lane.b32.xlu0 %v3631, 80
        %v3640 = vpop.permute.xlu0 %3639
        %3641 = vrot.lane.b32.xlu0 %v3632, 80
        %v3642 = vpop.permute.xlu0 %3641
        %3643 = vrot.lane.b32.xlu0 %v3633, 80
        %v3644 = vpop.permute.xlu0 %3643
        %3645 = vrot.lane.b32.xlu0 %v3634, 80
        %v3646 = vpop.permute.xlu0 %3645
        %v3651 = vadd.f32 %v3611, %v3640
        %v3652 = vadd.f32 %v3612, %v3642
        %v3653 = vadd.f32 %v3613, %v3644
        %v3654 = vadd.f32 %v3614, %v3646
        %s3655 = smul.u32 %s3622, 32
        %s3656 = scalar_lea.vmem [#allocation4], %s3655
        %v3657 = vld [vmem:[%s3656] sm:$0xff]
        %v3658 = vld [vmem:[%s3656 + $0x8] sm:$0xff]
        %v3659 = vld [vmem:[%s3656 + $0x10] sm:$0xff]
        %v3660 = vld [vmem:[%s3656 + $0x18] sm:$0xff]
        %v3661 = vstv %s3619
        %v3662 = vmul.f32 %v3661, %v3657
        %v3663 = vmul.f32 %v3661, %v3658
        %v3664 = vmul.f32 %v3661, %v3659
        %v3665 = vmul.f32 %v3661, %v3660
        %3670 = vrot.lane.b32.xlu0 %v3662, 80
        %v3671 = vpop.permute.xlu0 %3670
        %3672 = vrot.lane.b32.xlu0 %v3663, 80
        %v3673 = vpop.permute.xlu0 %3672
        %3674 = vrot.lane.b32.xlu0 %v3664, 80
        %v3675 = vpop.permute.xlu0 %3674
        %3676 = vrot.lane.b32.xlu0 %v3665, 80
        %v3677 = vpop.permute.xlu0 %3676
        %v3682 = vadd.f32 %v3651, %v3671
        %v3683 = vadd.f32 %v3652, %v3673
        %v3684 = vadd.f32 %v3653, %v3675
        %v3685 = vadd.f32 %v3654, %v3677
        %vm3686 = vcmask 786048
        %3687 = vst.msk [vmem:[#allocation5] sm:$0xff] %vm3686, %v3682
        %3688 = vst.msk [vmem:[#allocation5 + $0x8] sm:$0xff] %vm3686, %v3683
        %3689 = vst.msk [vmem:[#allocation5 + $0x10] sm:$0xff] %vm3686, %v3684
        %3690 = vst.msk [vmem:[#allocation5 + $0x18] sm:$0xff] %vm3686, %v3685
        %s3691 = sadd.s32 %s2467, 6
        %s3692 = sld [smem:[#allocation7 + %s3691]]
        %s3693 = sld [smem:[#allocation8 + %s3691]]
        %s3694 = sadd.s32 %s3692, 1
        %p3695 = scmp.lt.s32.totalorder %s3694, 1
        %s3696 = scalar_select %p3695, %s3694, 1
        %s3697 = ssub.f32 1.0, %s3693
        %s3698 = smul.u32 %s3692, 32
        %s3699 = scalar_lea.vmem [#allocation2], %s3698
        %v3700 = vld [vmem:[%s3699] sm:$0xff]
        %v3701 = vld [vmem:[%s3699 + $0x8] sm:$0xff]
        %v3702 = vld [vmem:[%s3699 + $0x10] sm:$0xff]
        %v3703 = vld [vmem:[%s3699 + $0x18] sm:$0xff]
        %v3704 = vstv %s3697
        %v3705 = vmul.f32 %v3704, %v3700
        %v3706 = vmul.f32 %v3704, %v3701
        %v3707 = vmul.f32 %v3704, %v3702
        %v3708 = vmul.f32 %v3704, %v3703
        %3713 = vrot.lane.b32.xlu0 %v3705, 96
        %v3714 = vpop.permute.xlu0 %3713
        %3715 = vrot.lane.b32.xlu0 %v3706, 96
        %v3716 = vpop.permute.xlu0 %3715
        %3717 = vrot.lane.b32.xlu0 %v3707, 96
        %v3718 = vpop.permute.xlu0 %3717
        %3719 = vrot.lane.b32.xlu0 %v3708, 96
        %v3720 = vpop.permute.xlu0 %3719
        %v3725 = vadd.f32 %v2449, %v3714
        %v3726 = vadd.f32 %v2454, %v3716
        %v3727 = vadd.f32 %v2459, %v3718
        %v3728 = vadd.f32 %v2464, %v3720
        %s3729 = smul.u32 %s3696, 32
        %s3730 = scalar_lea.vmem [#allocation2], %s3729
        %v3731 = vld [vmem:[%s3730] sm:$0xff]
        %v3732 = vld [vmem:[%s3730 + $0x8] sm:$0xff]
        %v3733 = vld [vmem:[%s3730 + $0x10] sm:$0xff]
        %v3734 = vld [vmem:[%s3730 + $0x18] sm:$0xff]
        %v3735 = vstv %s3693
        %v3736 = vmul.f32 %v3735, %v3731
        %v3737 = vmul.f32 %v3735, %v3732
        %v3738 = vmul.f32 %v3735, %v3733
        %v3739 = vmul.f32 %v3735, %v3734
        %3744 = vrot.lane.b32.xlu0 %v3736, 96
        %v3745 = vpop.permute.xlu0 %3744
        %3746 = vrot.lane.b32.xlu0 %v3737, 96
        %v3747 = vpop.permute.xlu0 %3746
        %3748 = vrot.lane.b32.xlu0 %v3738, 96
        %v3749 = vpop.permute.xlu0 %3748
        %3750 = vrot.lane.b32.xlu0 %v3739, 96
        %v3751 = vpop.permute.xlu0 %3750
        %v3756 = vadd.f32 %v3725, %v3745
        %v3757 = vadd.f32 %v3726, %v3747
        %v3758 = vadd.f32 %v3727, %v3749
        %v3759 = vadd.f32 %v3728, %v3751
        %s3760 = sshra.s32 %s3691, 7
        %s3761 = sand.u32 %s3691, 127
        %s3762 = sadd.s32 %s3760, 1
        %s3763 = smul.u32 %s3762, 128
        %s3764 = sshra.s32 %s3691, 7
        %s3765 = sand.u32 %s3691, 127
        %s3766 = sadd.s32 %s3763, %s3765
        %s3767 = sld [smem:[#allocation7 + %s3766]]
        %s3768 = sld [smem:[#allocation8 + %s3766]]
        %s3769 = sadd.s32 %s3767, 1
        %p3770 = scmp.lt.s32.totalorder %s3769, 3
        %s3771 = scalar_select %p3770, %s3769, 3
        %s3772 = ssub.f32 1.0, %s3768
        %s3773 = smul.u32 %s3767, 32
        %s3774 = scalar_lea.vmem [#allocation3], %s3773
        %v3775 = vld [vmem:[%s3774] sm:$0xff]
        %v3776 = vld [vmem:[%s3774 + $0x8] sm:$0xff]
        %v3777 = vld [vmem:[%s3774 + $0x10] sm:$0xff]
        %v3778 = vld [vmem:[%s3774 + $0x18] sm:$0xff]
        %v3779 = vstv %s3772
        %v3780 = vmul.f32 %v3779, %v3775
        %v3781 = vmul.f32 %v3779, %v3776
        %v3782 = vmul.f32 %v3779, %v3777
        %v3783 = vmul.f32 %v3779, %v3778
        %3788 = vrot.lane.b32.xlu0 %v3780, 96
        %v3789 = vpop.permute.xlu0 %3788
        %3790 = vrot.lane.b32.xlu0 %v3781, 96
        %v3791 = vpop.permute.xlu0 %3790
        %3792 = vrot.lane.b32.xlu0 %v3782, 96
        %v3793 = vpop.permute.xlu0 %3792
        %3794 = vrot.lane.b32.xlu0 %v3783, 96
        %v3795 = vpop.permute.xlu0 %3794
        %v3800 = vadd.f32 %v3756, %v3789
        %v3801 = vadd.f32 %v3757, %v3791
        %v3802 = vadd.f32 %v3758, %v3793
        %v3803 = vadd.f32 %v3759, %v3795
        %s3804 = smul.u32 %s3771, 32
        %s3805 = scalar_lea.vmem [#allocation3], %s3804
        %v3806 = vld [vmem:[%s3805] sm:$0xff]
        %v3807 = vld [vmem:[%s3805 + $0x8] sm:$0xff]
        %v3808 = vld [vmem:[%s3805 + $0x10] sm:$0xff]
        %v3809 = vld [vmem:[%s3805 + $0x18] sm:$0xff]
        %v3810 = vstv %s3768
        %v3811 = vmul.f32 %v3810, %v3806
        %v3812 = vmul.f32 %v3810, %v3807
        %v3813 = vmul.f32 %v3810, %v3808
        %v3814 = vmul.f32 %v3810, %v3809
        %3819 = vrot.lane.b32.xlu0 %v3811, 96
        %v3820 = vpop.permute.xlu0 %3819
        %3821 = vrot.lane.b32.xlu0 %v3812, 96
        %v3822 = vpop.permute.xlu0 %3821
        %3823 = vrot.lane.b32.xlu0 %v3813, 96
        %v3824 = vpop.permute.xlu0 %3823
        %3825 = vrot.lane.b32.xlu0 %v3814, 96
        %v3826 = vpop.permute.xlu0 %3825
        %v3831 = vadd.f32 %v3800, %v3820
        %v3832 = vadd.f32 %v3801, %v3822
        %v3833 = vadd.f32 %v3802, %v3824
        %v3834 = vadd.f32 %v3803, %v3826
        %s3835 = sadd.s32 %s3760, 2
        %s3836 = smul.u32 %s3835, 128
        %s3837 = sadd.s32 %s3836, %s3765
        %s3838 = sld [smem:[#allocation7 + %s3837]]
        %s3839 = sld [smem:[#allocation8 + %s3837]]
        %s3840 = sadd.s32 %s3838, 1
        %p3841 = scmp.lt.s32.totalorder %s3840, 7
        %s3842 = scalar_select %p3841, %s3840, 7
        %s3843 = ssub.f32 1.0, %s3839
        %s3844 = smul.u32 %s3838, 32
        %s3845 = scalar_lea.vmem [#allocation4], %s3844
        %v3846 = vld [vmem:[%s3845] sm:$0xff]
        %v3847 = vld [vmem:[%s3845 + $0x8] sm:$0xff]
        %v3848 = vld [vmem:[%s3845 + $0x10] sm:$0xff]
        %v3849 = vld [vmem:[%s3845 + $0x18] sm:$0xff]
        %v3850 = vstv %s3843
        %v3851 = vmul.f32 %v3850, %v3846
        %v3852 = vmul.f32 %v3850, %v3847
        %v3853 = vmul.f32 %v3850, %v3848
        %v3854 = vmul.f32 %v3850, %v3849
        %3859 = vrot.lane.b32.xlu0 %v3851, 96
        %v3860 = vpop.permute.xlu0 %3859
        %3861 = vrot.lane.b32.xlu0 %v3852, 96
        %v3862 = vpop.permute.xlu0 %3861
        %3863 = vrot.lane.b32.xlu0 %v3853, 96
        %v3864 = vpop.permute.xlu0 %3863
        %3865 = vrot.lane.b32.xlu0 %v3854, 96
        %v3866 = vpop.permute.xlu0 %3865
        %v3871 = vadd.f32 %v3831, %v3860
        %v3872 = vadd.f32 %v3832, %v3862
        %v3873 = vadd.f32 %v3833, %v3864
        %v3874 = vadd.f32 %v3834, %v3866
        %s3875 = smul.u32 %s3842, 32
        %s3876 = scalar_lea.vmem [#allocation4], %s3875
        %v3877 = vld [vmem:[%s3876] sm:$0xff]
        %v3878 = vld [vmem:[%s3876 + $0x8] sm:$0xff]
        %v3879 = vld [vmem:[%s3876 + $0x10] sm:$0xff]
        %v3880 = vld [vmem:[%s3876 + $0x18] sm:$0xff]
        %v3881 = vstv %s3839
        %v3882 = vmul.f32 %v3881, %v3877
        %v3883 = vmul.f32 %v3881, %v3878
        %v3884 = vmul.f32 %v3881, %v3879
        %v3885 = vmul.f32 %v3881, %v3880
        %3890 = vrot.lane.b32.xlu0 %v3882, 96
        %v3891 = vpop.permute.xlu0 %3890
        %3892 = vrot.lane.b32.xlu0 %v3883, 96
        %v3893 = vpop.permute.xlu0 %3892
        %3894 = vrot.lane.b32.xlu0 %v3884, 96
        %v3895 = vpop.permute.xlu0 %3894
        %3896 = vrot.lane.b32.xlu0 %v3885, 96
        %v3897 = vpop.permute.xlu0 %3896
        %v3902 = vadd.f32 %v3871, %v3891
        %v3903 = vadd.f32 %v3872, %v3893
        %v3904 = vadd.f32 %v3873, %v3895
        %v3905 = vadd.f32 %v3874, %v3897
        %vm3906 = vcmask 917248
        %3907 = vst.msk [vmem:[#allocation5] sm:$0xff] %vm3906, %v3902
        %3908 = vst.msk [vmem:[#allocation5 + $0x8] sm:$0xff] %vm3906, %v3903
        %3909 = vst.msk [vmem:[#allocation5 + $0x10] sm:$0xff] %vm3906, %v3904
        %3910 = vst.msk [vmem:[#allocation5 + $0x18] sm:$0xff] %vm3906, %v3905
        %s3911 = sadd.s32 %s2467, 7
        %s3912 = sld [smem:[#allocation7 + %s3911]]
        %s3913 = sld [smem:[#allocation8 + %s3911]]
        %s3914 = sadd.s32 %s3912, 1
        %p3915 = scmp.lt.s32.totalorder %s3914, 1
        %s3916 = scalar_select %p3915, %s3914, 1
        %s3917 = ssub.f32 1.0, %s3913
        %s3918 = smul.u32 %s3912, 32
        %s3919 = scalar_lea.vmem [#allocation2], %s3918
        %v3920 = vld [vmem:[%s3919] sm:$0xff]
        %v3921 = vld [vmem:[%s3919 + $0x8] sm:$0xff]
        %v3922 = vld [vmem:[%s3919 + $0x10] sm:$0xff]
        %v3923 = vld [vmem:[%s3919 + $0x18] sm:$0xff]
        %v3924 = vstv %s3917
        %v3925 = vmul.f32 %v3924, %v3920
        %v3926 = vmul.f32 %v3924, %v3921
        %v3927 = vmul.f32 %v3924, %v3922
        %v3928 = vmul.f32 %v3924, %v3923
        %3933 = vrot.lane.b32.xlu0 %v3925, 112
        %v3934 = vpop.permute.xlu0 %3933
        %3935 = vrot.lane.b32.xlu0 %v3926, 112
        %v3936 = vpop.permute.xlu0 %3935
        %3937 = vrot.lane.b32.xlu0 %v3927, 112
        %v3938 = vpop.permute.xlu0 %3937
        %3939 = vrot.lane.b32.xlu0 %v3928, 112
        %v3940 = vpop.permute.xlu0 %3939
        %v3945 = vadd.f32 %v2449, %v3934
        %v3946 = vadd.f32 %v2454, %v3936
        %v3947 = vadd.f32 %v2459, %v3938
        %v3948 = vadd.f32 %v2464, %v3940
        %s3949 = smul.u32 %s3916, 32
        %s3950 = scalar_lea.vmem [#allocation2], %s3949
        %v3951 = vld [vmem:[%s3950] sm:$0xff]
        %v3952 = vld [vmem:[%s3950 + $0x8] sm:$0xff]
        %v3953 = vld [vmem:[%s3950 + $0x10] sm:$0xff]
        %v3954 = vld [vmem:[%s3950 + $0x18] sm:$0xff]
        %v3955 = vstv %s3913
        %v3956 = vmul.f32 %v3955, %v3951
        %v3957 = vmul.f32 %v3955, %v3952
        %v3958 = vmul.f32 %v3955, %v3953
        %v3959 = vmul.f32 %v3955, %v3954
        %3964 = vrot.lane.b32.xlu0 %v3956, 112
        %v3965 = vpop.permute.xlu0 %3964
        %3966 = vrot.lane.b32.xlu0 %v3957, 112
        %v3967 = vpop.permute.xlu0 %3966
        %3968 = vrot.lane.b32.xlu0 %v3958, 112
        %v3969 = vpop.permute.xlu0 %3968
        %3970 = vrot.lane.b32.xlu0 %v3959, 112
        %v3971 = vpop.permute.xlu0 %3970
        %v3976 = vadd.f32 %v3945, %v3965
        %v3977 = vadd.f32 %v3946, %v3967
        %v3978 = vadd.f32 %v3947, %v3969
        %v3979 = vadd.f32 %v3948, %v3971
        %s3980 = sshra.s32 %s3911, 7
        %s3981 = sand.u32 %s3911, 127
        %s3982 = sadd.s32 %s3980, 1
        %s3983 = smul.u32 %s3982, 128
        %s3984 = sshra.s32 %s3911, 7
        %s3985 = sand.u32 %s3911, 127
        %s3986 = sadd.s32 %s3983, %s3985
        %s3987 = sld [smem:[#allocation7 + %s3986]]
        %s3988 = sld [smem:[#allocation8 + %s3986]]
        %s3989 = sadd.s32 %s3987, 1
        %p3990 = scmp.lt.s32.totalorder %s3989, 3
        %s3991 = scalar_select %p3990, %s3989, 3
        %s3992 = ssub.f32 1.0, %s3988
        %s3993 = smul.u32 %s3987, 32
        %s3994 = scalar_lea.vmem [#allocation3], %s3993
        %v3995 = vld [vmem:[%s3994] sm:$0xff]
        %v3996 = vld [vmem:[%s3994 + $0x8] sm:$0xff]
        %v3997 = vld [vmem:[%s3994 + $0x10] sm:$0xff]
        %v3998 = vld [vmem:[%s3994 + $0x18] sm:$0xff]
        %v3999 = vstv %s3992
        %v4000 = vmul.f32 %v3999, %v3995
        %v4001 = vmul.f32 %v3999, %v3996
        %v4002 = vmul.f32 %v3999, %v3997
        %v4003 = vmul.f32 %v3999, %v3998
        %4008 = vrot.lane.b32.xlu0 %v4000, 112
        %v4009 = vpop.permute.xlu0 %4008
        %4010 = vrot.lane.b32.xlu0 %v4001, 112
        %v4011 = vpop.permute.xlu0 %4010
        %4012 = vrot.lane.b32.xlu0 %v4002, 112
        %v4013 = vpop.permute.xlu0 %4012
        %4014 = vrot.lane.b32.xlu0 %v4003, 112
        %v4015 = vpop.permute.xlu0 %4014
        %v4020 = vadd.f32 %v3976, %v4009
        %v4021 = vadd.f32 %v3977, %v4011
        %v4022 = vadd.f32 %v3978, %v4013
        %v4023 = vadd.f32 %v3979, %v4015
        %s4024 = smul.u32 %s3991, 32
        %s4025 = scalar_lea.vmem [#allocation3], %s4024
        %v4026 = vld [vmem:[%s4025] sm:$0xff]
        %v4027 = vld [vmem:[%s4025 + $0x8] sm:$0xff]
        %v4028 = vld [vmem:[%s4025 + $0x10] sm:$0xff]
        %v4029 = vld [vmem:[%s4025 + $0x18] sm:$0xff]
        %v4030 = vstv %s3988
        %v4031 = vmul.f32 %v4030, %v4026
        %v4032 = vmul.f32 %v4030, %v4027
        %v4033 = vmul.f32 %v4030, %v4028
        %v4034 = vmul.f32 %v4030, %v4029
        %4039 = vrot.lane.b32.xlu0 %v4031, 112
        %v4040 = vpop.permute.xlu0 %4039
        %4041 = vrot.lane.b32.xlu0 %v4032, 112
        %v4042 = vpop.permute.xlu0 %4041
        %4043 = vrot.lane.b32.xlu0 %v4033, 112
        %v4044 = vpop.permute.xlu0 %4043
        %4045 = vrot.lane.b32.xlu0 %v4034, 112
        %v4046 = vpop.permute.xlu0 %4045
        %v4051 = vadd.f32 %v4020, %v4040
        %v4052 = vadd.f32 %v4021, %v4042
        %v4053 = vadd.f32 %v4022, %v4044
        %v4054 = vadd.f32 %v4023, %v4046
        %s4055 = sadd.s32 %s3980, 2
        %s4056 = smul.u32 %s4055, 128
        %s4057 = sadd.s32 %s4056, %s3985
        %s4058 = sld [smem:[#allocation7 + %s4057]]
        %s4059 = sld [smem:[#allocation8 + %s4057]]
        %s4060 = sadd.s32 %s4058, 1
        %p4061 = scmp.lt.s32.totalorder %s4060, 7
        %s4062 = scalar_select %p4061, %s4060, 7
        %s4063 = ssub.f32 1.0, %s4059
        %s4064 = smul.u32 %s4058, 32
        %s4065 = scalar_lea.vmem [#allocation4], %s4064
        %v4066 = vld [vmem:[%s4065] sm:$0xff]
        %v4067 = vld [vmem:[%s4065 + $0x8] sm:$0xff]
        %v4068 = vld [vmem:[%s4065 + $0x10] sm:$0xff]
        %v4069 = vld [vmem:[%s4065 + $0x18] sm:$0xff]
        %v4070 = vstv %s4063
        %v4071 = vmul.f32 %v4070, %v4066
        %v4072 = vmul.f32 %v4070, %v4067
        %v4073 = vmul.f32 %v4070, %v4068
        %v4074 = vmul.f32 %v4070, %v4069
        %4079 = vrot.lane.b32.xlu0 %v4071, 112
        %v4080 = vpop.permute.xlu0 %4079
        %4081 = vrot.lane.b32.xlu0 %v4072, 112
        %v4082 = vpop.permute.xlu0 %4081
        %4083 = vrot.lane.b32.xlu0 %v4073, 112
        %v4084 = vpop.permute.xlu0 %4083
        %4085 = vrot.lane.b32.xlu0 %v4074, 112
        %v4086 = vpop.permute.xlu0 %4085
        %v4091 = vadd.f32 %v4051, %v4080
        %v4092 = vadd.f32 %v4052, %v4082
        %v4093 = vadd.f32 %v4053, %v4084
        %v4094 = vadd.f32 %v4054, %v4086
        %s4095 = smul.u32 %s4062, 32
        %s4096 = scalar_lea.vmem [#allocation4], %s4095
        %v4097 = vld [vmem:[%s4096] sm:$0xff]
        %v4098 = vld [vmem:[%s4096 + $0x8] sm:$0xff]
        %v4099 = vld [vmem:[%s4096 + $0x10] sm:$0xff]
        %v4100 = vld [vmem:[%s4096 + $0x18] sm:$0xff]
        %v4101 = vstv %s4059
        %v4102 = vmul.f32 %v4101, %v4097
        %v4103 = vmul.f32 %v4101, %v4098
        %v4104 = vmul.f32 %v4101, %v4099
        %v4105 = vmul.f32 %v4101, %v4100
        %4110 = vrot.lane.b32.xlu0 %v4102, 112
        %v4111 = vpop.permute.xlu0 %4110
        %4112 = vrot.lane.b32.xlu0 %v4103, 112
        %v4113 = vpop.permute.xlu0 %4112
        %4114 = vrot.lane.b32.xlu0 %v4104, 112
        %v4115 = vpop.permute.xlu0 %4114
        %4116 = vrot.lane.b32.xlu0 %v4105, 112
        %v4117 = vpop.permute.xlu0 %4116
        %v4122 = vadd.f32 %v4091, %v4111
        %v4123 = vadd.f32 %v4092, %v4113
        %v4124 = vadd.f32 %v4093, %v4115
        %v4125 = vadd.f32 %v4094, %v4117
        %vm4126 = vcmask 1048448
        %4127 = vst.msk [vmem:[#allocation5] sm:$0xff] %vm4126, %v4122
        %4128 = vst.msk [vmem:[#allocation5 + $0x8] sm:$0xff] %vm4126, %v4123
        %4129 = vst.msk [vmem:[#allocation5 + $0x10] sm:$0xff] %vm4126, %v4124
        %4130 = vst.msk [vmem:[#allocation5 + $0x18] sm:$0xff] %vm4126, %v4125
        %v4131 = vld [vmem:[#allocation5] sm:$0xff]
        %v4132 = vld [vmem:[#allocation5 + $0x8] sm:$0xff]
        %v4133 = vld [vmem:[#allocation5 + $0x10] sm:$0xff]
        %v4134 = vld [vmem:[#allocation5 + $0x18] sm:$0xff]
        %v4135 = vld [vmem:[%s13] sm:$0xff]
        %v4136 = vld [vmem:[%s13 + $0x8] sm:$0xff]
        %v4137 = vld [vmem:[%s13 + $0x10] sm:$0xff]
        %v4138 = vld [vmem:[%s13 + $0x18] sm:$0xff]
        %4140 = vset.pattern.permute.xlu0 0
        %4141 = vperm.xlu0 %4140, %v4135
        %v4142 = vpop.permute.xlu0 %4141
        %4145 = vset.pattern.permute.xlu0 0
        %4146 = vperm.xlu0 %4145, %v4136
        %v4147 = vpop.permute.xlu0 %4146
        %4150 = vset.pattern.permute.xlu0 0
        %4151 = vperm.xlu0 %4150, %v4137
        %v4152 = vpop.permute.xlu0 %4151
        %4155 = vset.pattern.permute.xlu0 0
        %4156 = vperm.xlu0 %4155, %v4138
        %v4157 = vpop.permute.xlu0 %4156
        %v4159 = vadd.f32 %v4131, %v4142
        %v4160 = vadd.f32 %v4132, %v4147
        %v4161 = vadd.f32 %v4133, %v4152
        %v4162 = vadd.f32 %v4134, %v4157
        %v4163 = vmax.f32 %v4159, 0.0
        %v4164 = vmax.f32 %v4160, 0.0
        %v4165 = vmax.f32 %v4161, 0.0
        %v4166 = vmax.f32 %v4162, 0.0
        %v4167 = vld [vmem:[%s14] sm:$0x1]
        %v4168 = vld [vmem:[#allocation9] sm:$0x1]
        %4170 = vset.pattern.permute.xlu0 0
        %4171 = vperm.xlu0 %4170, %v4168
        %v4172 = vpop.permute.xlu0 %4171
        %v4174 = vlaneseq
        %v4175 = vshrl.u32 %v4174, 7
        %v4176 = vsub.s32 0, %v4175
        %v4177 = vrot.slane %v4172, %v4176
        %vm4178 = vcmask 261120
        %v4180 = vsel %vm4178, %v4167, 0
        %4182 = vmatprep.subr.mxu0 0.0
        %4183 = vmatpush1.msra.mxu0 0.0
        %4184 = vmatprep.subr.mxu0 0.0
        %4185 = vmatpush1.msra.mxu0 0.0
        %4186 = vmatprep.subr.mxu0 0.0
        %4187 = vmatpush1.msra.mxu0 0.0
        %4188 = vmatprep.subr.mxu0 0.0
        %4189 = vmatpush1.msra.mxu0 0.0
        %4190 = vmatprep.subr.mxu0 0.0
        %4191 = vmatpush1.msra.mxu0 0.0
        %4192 = vmatprep.subr.mxu0 0.0
        %4193 = vmatpush1.msra.mxu0 0.0
        %4194 = vmatprep.subr.mxu0 0.0
        %4195 = vmatpush1.msra.mxu0 0.0
        %4196 = vmatprep.subr.mxu0 0.0
        %4197 = vmatpush1.msra.mxu0 0.0
        %4198 = vmatprep.subr.mxu0 0.0
        %4199 = vmatpush1.msra.mxu0 0.0
        %4200 = vmatprep.subr.mxu0 0.0
        %4201 = vmatpush1.msra.mxu0 0.0
        %4202 = vmatprep.subr.mxu0 0.0
        %4203 = vmatpush1.msra.mxu0 0.0
        %4204 = vmatprep.subr.mxu0 0.0
        %4205 = vmatpush1.msra.mxu0 0.0
        %4206 = vmatprep.subr.mxu0 0.0
        %4207 = vmatpush1.msra.mxu0 %v4166
        %4208 = vmatprep.subr.mxu0 0.0
        %4209 = vmatpush1.msra.mxu0 %v4165
        %4210 = vmatprep.subr.mxu0 0.0
        %4211 = vmatpush1.msra.mxu0 %v4164
        %4212 = vmatprep.subr.mxu0 0.0
        %4213 = vmatpush1.msra.mxu0 %v4163
        %4214 = vmatprep.subr.mxu0 0.0
        %4215 = vmatpush2.msra.mxu0 0.0
        %4216 = vmatprep.subr.mxu0 0.0
        %4217 = vmatpush2.msra.mxu0 0.0
        %4218 = vmatprep.subr.mxu0 0.0
        %4219 = vmatpush2.msra.mxu0 0.0
        %4220 = vmatprep.subr.mxu0 0.0
        %4221 = vmatpush2.msra.mxu0 0.0
        %4222 = vmatprep.subr.mxu0 0.0
        %4223 = vmatpush2.msra.mxu0 0.0
        %4224 = vmatprep.subr.mxu0 0.0
        %4225 = vmatpush2.msra.mxu0 0.0
        %4226 = vmatprep.subr.mxu0 0.0
        %4227 = vmatpush2.msra.mxu0 0.0
        %4228 = vmatprep.subr.mxu0 0.0
        %4229 = vmatpush2.msra.mxu0 0.0
        %4230 = vmatprep.subr.mxu0 0.0
        %4231 = vmatpush2.msra.mxu0 0.0
        %4232 = vmatprep.subr.mxu0 0.0
        %4233 = vmatpush2.msra.mxu0 0.0
        %4234 = vmatprep.subr.mxu0 0.0
        %4235 = vmatpush2.msra.mxu0 0.0
        %4236 = vmatprep.subr.mxu0 0.0
        %4237 = vmatpush2.msra.mxu0 0.0
        %4238 = vmatprep.subr.mxu0 0.0
        %4239 = vmatpush2.msra.mxu0 0.0
        %4240 = vmatprep.subr.mxu0 0.0
        %4241 = vmatpush2.msra.mxu0 0.0
        %4242 = vmatprep.subr.mxu0 0.0
        %4243 = vmatpush2.msra.mxu0 0.0
        %4244 = vmatprep.subr.mxu0 0.0
        %4245 = vmatpush2.msra.mxu0 0.0
        %4246 = vmatprep.mubr.f32.mxu0 0.0
        %4247 = vmatmul.mubr.f32.gmra.mxu0 %v4180
        %v4248 = vpop.f32.mrf.mxu0
        %v4249 = vadd.f32 %v4177, %v4248
        %v4250 = vpop.f32.mrf.mxu0
        %4251 = vdwg.mxu0
        %4252 = vst [vmem:[%s538] sm:$0x1] %v4249
        %s4253 = sand.u32 %s380, 1
        %s4254 = scalar_lea.sflag [#allocation11], %s4253
        %s4255 = sand.u32 %s380, 1
        %s4256 = scalar_lea.vmem [#allocation10], %s4255
        // Predicated region
        $region81: #{tpu_custom_call.1} parent=75 // pred_check
          %p4257 = pneg %p390
        $region82: #{tpu_custom_call.1} parent=75 // pred_check_branch
          %4259 = sbr.rel (%p4257) target = $region84
        $region83: #{tpu_custom_call.1} parent=75 // pred_region
          %s4261 = ssub.s32 16, 16
          %4262 = vsyncadd %s4254, %s4261
          %s4263 = smul.addr %s46, 2
          %s4264 = sadd.s32 %s47, %s4263
          %s4265 = smul.addr %s4264, 16
          %s4266 = scalar_lea.hbm %s16, %s4265
          %s4268 = sshll.u32 %s4256, 4
          %s4269 = int_to_ptr.vmem [resolvable:$true] %s4268
          %4271 = dma.vmem_to_hbm [thread:$0]  %s4269, 16, %s4266, %s4254
        $region84: #{tpu_custom_call.1} parent=75 // pred_fallthru
          _
      $region76: #{tpu_custom_call.1} parent=5 // pred_fallthru
        _
      %p4272 = scmp.le.s32.totalorder 2, %s37
      // Predicated region
      $region85: #{tpu_custom_call.1} parent=5 // pred_check
        %p4273 = pneg %p4272
      $region86: #{tpu_custom_call.1} parent=5 // pred_check_branch
        %4275 = sbr.rel (%p4273) target = $region88
      $region87: #{tpu_custom_call.1} parent=5 // pred_region
        %s4276 = ssub.s32 %s37, 2
        // Predicated region
        $region89: #{tpu_custom_call.1} parent=87 // pred_check
          %p4277 = pneg %p396
        $region90: #{tpu_custom_call.1} parent=87 // pred_check_branch
          %4279 = sbr.rel (%p4277) target = $region92
        $region91: #{tpu_custom_call.1} parent=87 // pred_region
          %s4280 = sand.u32 %s381, 1
          %s4281 = scalar_lea.sflag [#allocation11], %s4280
          %s4282 = sand.u32 %s381, 1
          %s4283 = scalar_lea.vmem [#allocation10], %s4282
          %4284 = dma.done %s4281, 16
        $region92: #{tpu_custom_call.1} parent=87 // pred_fallthru
          _
      $region88: #{tpu_custom_call.1} parent=5 // pred_fallthru
        _
    $region6: #{tpu_custom_call.1} parent=1 // loop_footer
      %s41 = sadd.s32 1, %s37
    $region7: #{tpu_custom_call.1} parent=1 // loop_footer_branch
      %36 = sbr.rel target = $region3
    $region8: #{tpu_custom_call.1} parent=1 // loop_exit
      _
    %4285 = vsyncpa [#allocation11], 1
    %s4286 = scalar_lea.sflag [#allocation11], 1
    %4287 = vsyncpa %s4286, 1

</llo_original>
